<compile_context>
chip_gen: v7x
topology: tpu7x:2x2x1
jax: 0.10.0
libtpu: 0.0.40
codegen_flags: <defaults>
</compile_context>

<pallas_src>
import functools

import numpy as np
import jax
import jax.numpy as jnp
from jax.experimental import pallas as pl
from jax.experimental.pallas import tpu as pltpu  # noqa: F401  (TPU backend)


# ----------------------------------------------------------------------------
# Pallas kernels (single whole-array VMEM block each; no grid)
# ----------------------------------------------------------------------------
def _gemm_bias_relu_kernel(w_ref, p_ref, b_ref, o_ref):
    """o = relu(w @ p + b);  w:(OCp,K) bf16, p:(K,M) bf16, b:(OCp,1) f32."""
    acc = jnp.dot(w_ref[...], p_ref[...], preferred_element_type=jnp.float32)
    o_ref[...] = jnp.maximum(acc + b_ref[...], 0.0)


def _gemm_kernel(a_ref, b_ref, o_ref):
    """o = a @ b with f32 accumulation (used for the bilinear resizes)."""
    o_ref[...] = jnp.dot(a_ref[...], b_ref[...],
                         preferred_element_type=jnp.float32)


def _maxpool4_kernel(a_ref, b_ref, c_ref, d_ref, o_ref):
    """Elementwise max of the four 2x2-window corners (lane-dense 2-D views)."""
    o_ref[...] = jnp.maximum(jnp.maximum(a_ref[...], b_ref[...]),
                             jnp.maximum(c_ref[...], d_ref[...]))


# ----------------------------------------------------------------------------
# Pallas wrappers (grid-less single-block calls: every operand fits VMEM)
# ----------------------------------------------------------------------------
def _pallas_conv_gemm(wmat, patchesT, bias):
    ocp, _ = wmat.shape
    _, m = patchesT.shape
    return pl.pallas_call(
        _gemm_bias_relu_kernel,
        out_shape=jax.ShapeDtypeStruct((ocp, m), jnp.float32),
    )(wmat, patchesT, bias)


def _pallas_gemm(a, b):
    m, _ = a.shape
    _, n = b.shape
    return pl.pallas_call(
        _gemm_kernel,
        out_shape=jax.ShapeDtypeStruct((m, n), jnp.float32),
    )(a, b)


# ----------------------------------------------------------------------------
# Glue (channel-major im2col^T, maxpool corner views, bilinear Kronecker GEMM)
# ----------------------------------------------------------------------------
def _im2colT(a, kh, kw):
    """(C, N, H, W) -> transposed im2col patches (C*KH*KW, N*OH*OW) in bf16.

    Row ordering c*KH*KW + ki*KW + kj matches torch weight.reshape(OC, C*KH*KW).
    """
    C, N, H, W = a.shape
    oh, ow = H - kh + 1, W - kw + 1
    cols = [a[:, :, i:i + oh, j:j + ow] for i in range(kh) for j in range(kw)]
    p = jnp.stack(cols, axis=1)                       # (C, KH*KW, N, OH, OW)
    p = p.reshape(C * kh * kw, N * oh * ow)
    return p.astype(jnp.bfloat16), oh, ow


def conv2d_relu(a, layer):
    """Conv2d (valid, stride 1) + ReLU on channel-major input a:(C, N, H, W)."""
    C, N, H, W = a.shape
    p, oh, ow = _im2colT(a, layer["kh"], layer["kw"])
    y = _pallas_conv_gemm(layer["w"], p, layer["b"])  # (OCp, N*OH*OW) f32
    oc = layer["oc"]
    return y[:oc].reshape(oc, N, oh, ow)


def maxpool2x2(a):
    """nn.MaxPool2d(2, stride=2) on channel-major (C, N, H, W)."""
    C, N, H, W = a.shape
    h2, w2 = H // 2, W // 2
    a = a[:, :, :2 * h2, :2 * w2]

    def flat(v):
        return v.reshape(C, N * h2 * w2)

    out = pl.pallas_call(
        _maxpool4_kernel,
        out_shape=jax.ShapeDtypeStruct((C, N * h2 * w2), a.dtype),
    )(flat(a[:, :, 0::2, 0::2]), flat(a[:, :, 0::2, 1::2]),
      flat(a[:, :, 1::2, 0::2]), flat(a[:, :, 1::2, 1::2]))
    return out.reshape(C, N, h2, w2)


def _bilinear_matrix_np(in_size, out_size):
    """Mixing matrix matching F.interpolate(mode='bilinear', align_corners=False)."""
    scale = in_size / out_size
    m = np.zeros((out_size, in_size), dtype=np.float32)
    for o in range(out_size):
        src = max(scale * (o + 0.5) - 0.5, 0.0)
        i0 = min(int(np.floor(src)), in_size - 1)
        i1 = min(i0 + 1, in_size - 1)
        t = src - i0
        m[o, i0] += 1.0 - t
        m[o, i1] += t
    return m


@functools.lru_cache(maxsize=None)
def _kron_bilinear_np(h, w, oh, ow):
    """(H*W, OH*OW) matrix K with x.reshape(C*N, H*W) @ K == bilinear resize."""
    ky = _bilinear_matrix_np(h, oh)                   # (OH, H)
    kx = _bilinear_matrix_np(w, ow)                   # (OW, W)
    return np.kron(ky, kx).T.astype(np.float32)       # (H*W, OH*OW)


def interpolate_bilinear(a, out_h, out_w):
    """Bilinear resize of channel-major (C, N, H, W) via a single Pallas GEMM."""
    C, N, H, W = a.shape
    kron = jnp.asarray(_kron_bilinear_np(H, W, out_h, out_w), jnp.bfloat16)
    a2 = a.reshape(C * N, H * W).astype(jnp.bfloat16)
    z = _pallas_gemm(a2, kron)                        # (C*N, OH*OW) f32
    return z.reshape(C, N, out_h, out_w)


# ----------------------------------------------------------------------------
# Model: parameters + forward
# ----------------------------------------------------------------------------
def _torch_conv_init(key, oc, ic, k):
    """Deterministic PyTorch-style uniform(-1/sqrt(fan_in), 1/sqrt(fan_in))."""
    k1, k2 = jax.random.split(key)
    bound = 1.0 / np.sqrt(ic * k * k)
    w = jax.random.uniform(k1, (oc, ic, k, k), jnp.float32, -bound, bound)
    b = jax.random.uniform(k2, (oc,), jnp.float32, -bound, bound)
    return w, b


def _pack_conv(w, b):
    """GEMM-ready bf16 weight matrix (OC padded to a multiple of 8 sublanes)
    and the (OCp, 1) f32 bias column — precomputed once at init."""
    oc, ic, kh, kw = w.shape
    ocp = ((oc + 7) // 8) * 8
    wmat = jnp.zeros((ocp, ic * kh * kw), jnp.float32).at[:oc].set(
        w.reshape(oc, ic * kh * kw))
    bias = jnp.zeros((ocp, 1), jnp.float32).at[:oc, 0].set(b)
    return {"w": wmat.astype(jnp.bfloat16), "b": bias,
            "oc": oc, "kh": kh, "kw": kw}


def init_params(seed=42):
    keys = jax.random.split(jax.random.PRNGKey(seed), 6)
    cfg = [(32, 1, 5),    # conv1
           (64, 32, 3),   # conv2
           (32, 64, 3),   # conv3
           (16, 32, 3),   # conv4
           (8, 16, 3),    # conv5
           (1, 8, 3)]     # conv6
    return [_pack_conv(*_torch_conv_init(k, oc, ic, ks))
            for k, (oc, ic, ks) in zip(keys, cfg)]


def cnn_aut_v3_forward(x, params):
    """x: (N, 1, H, W) NCHW float32 -> (N, 1, H, W) float32."""
    c1, c2, c3, c4, c5, c6 = params
    a = jnp.transpose(x, (1, 0, 2, 3))          # channel-major (C, N, H, W)
    a = conv2d_relu(a, c1)                      # (32, N, 24, 24)
    a = maxpool2x2(a)                           # (32, N, 12, 12)
    a = conv2d_relu(a, c2)                      # (64, N, 10, 10)
    a = conv2d_relu(a, c3)                      # (32, N, 8, 8)
    a = interpolate_bilinear(a, 16, 16)         # (32, N, 16, 16)
    a = conv2d_relu(a, c4)                      # (16, N, 14, 14)
    a = interpolate_bilinear(a, 26, 26)         # (16, N, 26, 26)
    a = conv2d_relu(a, c5)                      # (8, N, 24, 24)
    a = interpolate_bilinear(a, 30, 30)         # (8, N, 30, 30)
    a = conv2d_relu(a, c6)                      # (1, N, 28, 28)
    return jnp.transpose(a, (1, 0, 2, 3))       # back to NCHW


if __name__ == "__main__":
    # Small MNIST-like input consistent with the module: N=2, C=1, 28x28.
    x = jax.random.normal(jax.random.PRNGKey(0), (2, 1, 28, 28), jnp.float32)
    params = init_params(seed=42)

    forward = jax.jit(lambda inp: cnn_aut_v3_forward(inp, params))
    out = jax.block_until_ready(forward(x))

    assert out.shape == (2, 1, 28, 28), out.shape
    assert out.dtype == jnp.float32
    assert bool(jnp.all(jnp.isfinite(out)))
    assert bool(jnp.all(out >= 0.0))   # final ReLU
    print("KERNEL_OK")
</pallas_src>

<mosaic_0001>
module attributes {stable_mosaic.version = 11 : i64} {
  func.func @_gemm_bias_relu_kernel(%arg0: memref<32x25xbf16, #tpu.memory_space<vmem>>, %arg1: memref<25x1152xbf16, #tpu.memory_space<vmem>>, %arg2: memref<32x1xf32, #tpu.memory_space<vmem>>, %arg3: memref<32x1152xf32, #tpu.memory_space<vmem>>) attributes {dimension_semantics = [], scalar_prefetch = 0 : i64, scratch_operands = 0 : i64, tpu.core_type = #tpu.core_type<tc>} {
    %c0 = arith.constant 0 : index
    %c0_0 = arith.constant 0 : index
    %0 = vector.load %arg0[%c0, %c0_0] : memref<32x25xbf16, #tpu.memory_space<vmem>>, vector<32x25xbf16>
    %c0_1 = arith.constant 0 : index
    %c0_2 = arith.constant 0 : index
    %1 = vector.load %arg1[%c0_1, %c0_2] : memref<25x1152xbf16, #tpu.memory_space<vmem>>, vector<25x1152xbf16>
    %cst = arith.constant dense<0.000000e+00> : vector<32x1152xf32>
    %2 = tpu.matmul %0, %1, %cst {dimension_numbers = #tpu.dot_dimension_numbers<[1], [0], [0], [1], [0, 0, 1, 1], [], []>} : vector<32x25xbf16>, vector<25x1152xbf16>, vector<32x1152xf32> -> vector<32x1152xf32>
    %c0_3 = arith.constant 0 : index
    %c0_4 = arith.constant 0 : index
    %3 = vector.load %arg2[%c0_3, %c0_4] : memref<32x1xf32, #tpu.memory_space<vmem>>, vector<32x1xf32>
    %4 = vector.broadcast %3 : vector<32x1xf32> to vector<32x1152xf32>
    %5 = arith.addf %2, %4 : vector<32x1152xf32>
    %cst_5 = arith.constant 0.000000e+00 : f32
    %6 = vector.broadcast %cst_5 : f32 to vector<32x1152xf32>
    %7 = arith.maximumf %5, %6 : vector<32x1152xf32>
    %c0_6 = arith.constant 0 : index
    %c0_7 = arith.constant 0 : index
    %8 = vector.load %arg3[%c0_6, %c0_7] : memref<32x1152xf32, #tpu.memory_space<vmem>>, vector<32x1152xf32>
    tpu.vector_store %arg3[%c0_6, %c0_7], %7 {strides = array<i32>} : memref<32x1152xf32, #tpu.memory_space<vmem>>, vector<32x1152xf32>,
    return
  }
}

module attributes {stable_mosaic.version = 11 : i64} {
  func.func @_maxpool4_kernel(%arg0: memref<32x288xf32, #tpu.memory_space<vmem>>, %arg1: memref<32x288xf32, #tpu.memory_space<vmem>>, %arg2: memref<32x288xf32, #tpu.memory_space<vmem>>, %arg3: memref<32x288xf32, #tpu.memory_space<vmem>>, %arg4: memref<32x288xf32, #tpu.memory_space<vmem>>) attributes {dimension_semantics = [], scalar_prefetch = 0 : i64, scratch_operands = 0 : i64, tpu.core_type = #tpu.core_type<tc>} {
    %c0 = arith.constant 0 : index
    %c0_0 = arith.constant 0 : index
    %0 = vector.load %arg0[%c0, %c0_0] : memref<32x288xf32, #tpu.memory_space<vmem>>, vector<32x288xf32>
    %c0_1 = arith.constant 0 : index
    %c0_2 = arith.constant 0 : index
    %1 = vector.load %arg1[%c0_1, %c0_2] : memref<32x288xf32, #tpu.memory_space<vmem>>, vector<32x288xf32>
    %2 = arith.maximumf %0, %1 : vector<32x288xf32>
    %c0_3 = arith.constant 0 : index
    %c0_4 = arith.constant 0 : index
    %3 = vector.load %arg2[%c0_3, %c0_4] : memref<32x288xf32, #tpu.memory_space<vmem>>, vector<32x288xf32>
    %c0_5 = arith.constant 0 : index
    %c0_6 = arith.constant 0 : index
    %4 = vector.load %arg3[%c0_5, %c0_6] : memref<32x288xf32, #tpu.memory_space<vmem>>, vector<32x288xf32>
    %5 = arith.maximumf %3, %4 : vector<32x288xf32>
    %6 = arith.maximumf %2, %5 : vector<32x288xf32>
    %c0_7 = arith.constant 0 : index
    %c0_8 = arith.constant 0 : index
    %7 = vector.load %arg4[%c0_7, %c0_8] : memref<32x288xf32, #tpu.memory_space<vmem>>, vector<32x288xf32>
    tpu.vector_store %arg4[%c0_7, %c0_8], %6 {strides = array<i32>} : memref<32x288xf32, #tpu.memory_space<vmem>>, vector<32x288xf32>,
    return
  }
}

module attributes {stable_mosaic.version = 11 : i64} {
  func.func @_gemm_bias_relu_kernel(%arg0: memref<64x288xbf16, #tpu.memory_space<vmem>>, %arg1: memref<288x200xbf16, #tpu.memory_space<vmem>>, %arg2: memref<64x1xf32, #tpu.memory_space<vmem>>, %arg3: memref<64x200xf32, #tpu.memory_space<vmem>>) attributes {dimension_semantics = [], scalar_prefetch = 0 : i64, scratch_operands = 0 : i64, tpu.core_type = #tpu.core_type<tc>} {
    %c0 = arith.constant 0 : index
    %c0_0 = arith.constant 0 : index
    %0 = vector.load %arg0[%c0, %c0_0] : memref<64x288xbf16, #tpu.memory_space<vmem>>, vector<64x288xbf16>
    %c0_1 = arith.constant 0 : index
    %c0_2 = arith.constant 0 : index
    %1 = vector.load %arg1[%c0_1, %c0_2] : memref<288x200xbf16, #tpu.memory_space<vmem>>, vector<288x200xbf16>
    %cst = arith.constant dense<0.000000e+00> : vector<64x200xf32>
    %2 = tpu.matmul %0, %1, %cst {dimension_numbers = #tpu.dot_dimension_numbers<[1], [0], [0], [1], [0, 0, 1, 1], [], []>} : vector<64x288xbf16>, vector<288x200xbf16>, vector<64x200xf32> -> vector<64x200xf32>
    %c0_3 = arith.constant 0 : index
    %c0_4 = arith.constant 0 : index
    %3 = vector.load %arg2[%c0_3, %c0_4] : memref<64x1xf32, #tpu.memory_space<vmem>>, vector<64x1xf32>
    %4 = vector.broadcast %3 : vector<64x1xf32> to vector<64x200xf32>
    %5 = arith.addf %2, %4 : vector<64x200xf32>
    %cst_5 = arith.constant 0.000000e+00 : f32
    %6 = vector.broadcast %cst_5 : f32 to vector<64x200xf32>
    %7 = arith.maximumf %5, %6 : vector<64x200xf32>
    %c0_6 = arith.constant 0 : index
    %c0_7 = arith.constant 0 : index
    %8 = vector.load %arg3[%c0_6, %c0_7] : memref<64x200xf32, #tpu.memory_space<vmem>>, vector<64x200xf32>
    tpu.vector_store %arg3[%c0_6, %c0_7], %7 {strides = array<i32>} : memref<64x200xf32, #tpu.memory_space<vmem>>, vector<64x200xf32>,
    return
  }
}

module attributes {stable_mosaic.version = 11 : i64} {
  func.func @_gemm_bias_relu_kernel(%arg0: memref<32x576xbf16, #tpu.memory_space<vmem>>, %arg1: memref<576x128xbf16, #tpu.memory_space<vmem>>, %arg2: memref<32x1xf32, #tpu.memory_space<vmem>>, %arg3: memref<32x128xf32, #tpu.memory_space<vmem>>) attributes {dimension_semantics = [], scalar_prefetch = 0 : i64, scratch_operands = 0 : i64, tpu.core_type = #tpu.core_type<tc>} {
    %c0 = arith.constant 0 : index
    %c0_0 = arith.constant 0 : index
    %0 = vector.load %arg0[%c0, %c0_0] : memref<32x576xbf16, #tpu.memory_space<vmem>>, vector<32x576xbf16>
    %c0_1 = arith.constant 0 : index
    %c0_2 = arith.constant 0 : index
    %1 = vector.load %arg1[%c0_1, %c0_2] : memref<576x128xbf16, #tpu.memory_space<vmem>>, vector<576x128xbf16>
    %cst = arith.constant dense<0.000000e+00> : vector<32x128xf32>
    %2 = tpu.matmul %0, %1, %cst {dimension_numbers = #tpu.dot_dimension_numbers<[1], [0], [0], [1], [0, 0, 1, 1], [], []>} : vector<32x576xbf16>, vector<576x128xbf16>, vector<32x128xf32> -> vector<32x128xf32>
    %c0_3 = arith.constant 0 : index
    %c0_4 = arith.constant 0 : index
    %3 = vector.load %arg2[%c0_3, %c0_4] : memref<32x1xf32, #tpu.memory_space<vmem>>, vector<32x1xf32>
    %4 = vector.broadcast %3 : vector<32x1xf32> to vector<32x128xf32>
    %5 = arith.addf %2, %4 : vector<32x128xf32>
    %cst_5 = arith.constant 0.000000e+00 : f32
    %6 = vector.broadcast %cst_5 : f32 to vector<32x128xf32>
    %7 = arith.maximumf %5, %6 : vector<32x128xf32>
    %c0_6 = arith.constant 0 : index
    %c0_7 = arith.constant 0 : index
    %8 = vector.load %arg3[%c0_6, %c0_7] : memref<32x128xf32, #tpu.memory_space<vmem>>, vector<32x128xf32>
    tpu.vector_store %arg3[%c0_6, %c0_7], %7 {strides = array<i32>} : memref<32x128xf32, #tpu.memory_space<vmem>>, vector<32x128xf32>,
    return
  }
}

module attributes {stable_mosaic.version = 11 : i64} {
  func.func @_gemm_kernel(%arg0: memref<64x64xbf16, #tpu.memory_space<vmem>>, %arg1: memref<64x256xbf16, #tpu.memory_space<vmem>>, %arg2: memref<64x256xf32, #tpu.memory_space<vmem>>) attributes {dimension_semantics = [], scalar_prefetch = 0 : i64, scratch_operands = 0 : i64, tpu.core_type = #tpu.core_type<tc>} {
    %c0 = arith.constant 0 : index
    %c0_0 = arith.constant 0 : index
    %0 = vector.load %arg0[%c0, %c0_0] : memref<64x64xbf16, #tpu.memory_space<vmem>>, vector<64x64xbf16>
    %c0_1 = arith.constant 0 : index
    %c0_2 = arith.constant 0 : index
    %1 = vector.load %arg1[%c0_1, %c0_2] : memref<64x256xbf16, #tpu.memory_space<vmem>>, vector<64x256xbf16>
    %cst = arith.constant dense<0.000000e+00> : vector<64x256xf32>
    %2 = tpu.matmul %0, %1, %cst {dimension_numbers = #tpu.dot_dimension_numbers<[1], [0], [0], [1], [0, 0, 1, 1], [], []>} : vector<64x64xbf16>, vector<64x256xbf16>, vector<64x256xf32> -> vector<64x256xf32>
    %c0_3 = arith.constant 0 : index
    %c0_4 = arith.constant 0 : index
    %3 = vector.load %arg2[%c0_3, %c0_4] : memref<64x256xf32, #tpu.memory_space<vmem>>, vector<64x256xf32>
    tpu.vector_store %arg2[%c0_3, %c0_4], %2 {strides = array<i32>} : memref<64x256xf32, #tpu.memory_space<vmem>>, vector<64x256xf32>,
    return
  }
}

module attributes {stable_mosaic.version = 11 : i64} {
  func.func @_gemm_bias_relu_kernel(%arg0: memref<16x288xbf16, #tpu.memory_space<vmem>>, %arg1: memref<288x392xbf16, #tpu.memory_space<vmem>>, %arg2: memref<16x1xf32, #tpu.memory_space<vmem>>, %arg3: memref<16x392xf32, #tpu.memory_space<vmem>>) attributes {dimension_semantics = [], scalar_prefetch = 0 : i64, scratch_operands = 0 : i64, tpu.core_type = #tpu.core_type<tc>} {
    %c0 = arith.constant 0 : index
    %c0_0 = arith.constant 0 : index
    %0 = vector.load %arg0[%c0, %c0_0] : memref<16x288xbf16, #tpu.memory_space<vmem>>, vector<16x288xbf16>
    %c0_1 = arith.constant 0 : index
    %c0_2 = arith.constant 0 : index
    %1 = vector.load %arg1[%c0_1, %c0_2] : memref<288x392xbf16, #tpu.memory_space<vmem>>, vector<288x392xbf16>
    %cst = arith.constant dense<0.000000e+00> : vector<16x392xf32>
    %2 = tpu.matmul %0, %1, %cst {dimension_numbers = #tpu.dot_dimension_numbers<[1], [0], [0], [1], [0, 0, 1, 1], [], []>} : vector<16x288xbf16>, vector<288x392xbf16>, vector<16x392xf32> -> vector<16x392xf32>
    %c0_3 = arith.constant 0 : index
    %c0_4 = arith.constant 0 : index
    %3 = vector.load %arg2[%c0_3, %c0_4] : memref<16x1xf32, #tpu.memory_space<vmem>>, vector<16x1xf32>
    %4 = vector.broadcast %3 : vector<16x1xf32> to vector<16x392xf32>
    %5 = arith.addf %2, %4 : vector<16x392xf32>
    %cst_5 = arith.constant 0.000000e+00 : f32
    %6 = vector.broadcast %cst_5 : f32 to vector<16x392xf32>
    %7 = arith.maximumf %5, %6 : vector<16x392xf32>
    %c0_6 = arith.constant 0 : index
    %c0_7 = arith.constant 0 : index
    %8 = vector.load %arg3[%c0_6, %c0_7] : memref<16x392xf32, #tpu.memory_space<vmem>>, vector<16x392xf32>
    tpu.vector_store %arg3[%c0_6, %c0_7], %7 {strides = array<i32>} : memref<16x392xf32, #tpu.memory_space<vmem>>, vector<16x392xf32>,
    return
  }
}

module attributes {stable_mosaic.version = 11 : i64} {
  func.func @_gemm_kernel(%arg0: memref<32x196xbf16, #tpu.memory_space<vmem>>, %arg1: memref<196x676xbf16, #tpu.memory_space<vmem>>, %arg2: memref<32x676xf32, #tpu.memory_space<vmem>>) attributes {dimension_semantics = [], scalar_prefetch = 0 : i64, scratch_operands = 0 : i64, tpu.core_type = #tpu.core_type<tc>} {
    %c0 = arith.constant 0 : index
    %c0_0 = arith.constant 0 : index
    %0 = vector.load %arg0[%c0, %c0_0] : memref<32x196xbf16, #tpu.memory_space<vmem>>, vector<32x196xbf16>
    %c0_1 = arith.constant 0 : index
    %c0_2 = arith.constant 0 : index
    %1 = vector.load %arg1[%c0_1, %c0_2] : memref<196x676xbf16, #tpu.memory_space<vmem>>, vector<196x676xbf16>
    %cst = arith.constant dense<0.000000e+00> : vector<32x676xf32>
    %2 = tpu.matmul %0, %1, %cst {dimension_numbers = #tpu.dot_dimension_numbers<[1], [0], [0], [1], [0, 0, 1, 1], [], []>} : vector<32x196xbf16>, vector<196x676xbf16>, vector<32x676xf32> -> vector<32x676xf32>
    %c0_3 = arith.constant 0 : index
    %c0_4 = arith.constant 0 : index
    %3 = vector.load %arg2[%c0_3, %c0_4] : memref<32x676xf32, #tpu.memory_space<vmem>>, vector<32x676xf32>
    tpu.vector_store %arg2[%c0_3, %c0_4], %2 {strides = array<i32>} : memref<32x676xf32, #tpu.memory_space<vmem>>, vector<32x676xf32>,
    return
  }
}

module attributes {stable_mosaic.version = 11 : i64} {
  func.func @_gemm_bias_relu_kernel(%arg0: memref<8x144xbf16, #tpu.memory_space<vmem>>, %arg1: memref<144x1152xbf16, #tpu.memory_space<vmem>>, %arg2: memref<8x1xf32, #tpu.memory_space<vmem>>, %arg3: memref<8x1152xf32, #tpu.memory_space<vmem>>) attributes {dimension_semantics = [], scalar_prefetch = 0 : i64, scratch_operands = 0 : i64, tpu.core_type = #tpu.core_type<tc>} {
    %c0 = arith.constant 0 : index
    %c0_0 = arith.constant 0 : index
    %0 = vector.load %arg0[%c0, %c0_0] : memref<8x144xbf16, #tpu.memory_space<vmem>>, vector<8x144xbf16>
    %c0_1 = arith.constant 0 : index
    %c0_2 = arith.constant 0 : index
    %1 = vector.load %arg1[%c0_1, %c0_2] : memref<144x1152xbf16, #tpu.memory_space<vmem>>, vector<144x1152xbf16>
    %cst = arith.constant dense<0.000000e+00> : vector<8x1152xf32>
    %2 = tpu.matmul %0, %1, %cst {dimension_numbers = #tpu.dot_dimension_numbers<[1], [0], [0], [1], [0, 0, 1, 1], [], []>} : vector<8x144xbf16>, vector<144x1152xbf16>, vector<8x1152xf32> -> vector<8x1152xf32>
    %c0_3 = arith.constant 0 : index
    %c0_4 = arith.constant 0 : index
    %3 = vector.load %arg2[%c0_3, %c0_4] : memref<8x1xf32, #tpu.memory_space<vmem>>, vector<8x1xf32>
    %4 = vector.broadcast %3 : vector<8x1xf32> to vector<8x1152xf32>
    %5 = arith.addf %2, %4 : vector<8x1152xf32>
    %cst_5 = arith.constant 0.000000e+00 : f32
    %6 = vector.broadcast %cst_5 : f32 to vector<8x1152xf32>
    %7 = arith.maximumf %5, %6 : vector<8x1152xf32>
    %c0_6 = arith.constant 0 : index
    %c0_7 = arith.constant 0 : index
    %8 = vector.load %arg3[%c0_6, %c0_7] : memref<8x1152xf32, #tpu.memory_space<vmem>>, vector<8x1152xf32>
    tpu.vector_store %arg3[%c0_6, %c0_7], %7 {strides = array<i32>} : memref<8x1152xf32, #tpu.memory_space<vmem>>, vector<8x1152xf32>,
    return
  }
}

module attributes {stable_mosaic.version = 11 : i64} {
  func.func @_gemm_kernel(%arg0: memref<16x576xbf16, #tpu.memory_space<vmem>>, %arg1: memref<576x900xbf16, #tpu.memory_space<vmem>>, %arg2: memref<16x900xf32, #tpu.memory_space<vmem>>) attributes {dimension_semantics = [], scalar_prefetch = 0 : i64, scratch_operands = 0 : i64, tpu.core_type = #tpu.core_type<tc>} {
    %c0 = arith.constant 0 : index
    %c0_0 = arith.constant 0 : index
    %0 = vector.load %arg0[%c0, %c0_0] : memref<16x576xbf16, #tpu.memory_space<vmem>>, vector<16x576xbf16>
    %c0_1 = arith.constant 0 : index
    %c0_2 = arith.constant 0 : index
    %1 = vector.load %arg1[%c0_1, %c0_2] : memref<576x900xbf16, #tpu.memory_space<vmem>>, vector<576x900xbf16>
    %cst = arith.constant dense<0.000000e+00> : vector<16x900xf32>
    %2 = tpu.matmul %0, %1, %cst {dimension_numbers = #tpu.dot_dimension_numbers<[1], [0], [0], [1], [0, 0, 1, 1], [], []>} : vector<16x576xbf16>, vector<576x900xbf16>, vector<16x900xf32> -> vector<16x900xf32>
    %c0_3 = arith.constant 0 : index
    %c0_4 = arith.constant 0 : index
    %3 = vector.load %arg2[%c0_3, %c0_4] : memref<16x900xf32, #tpu.memory_space<vmem>>, vector<16x900xf32>
    tpu.vector_store %arg2[%c0_3, %c0_4], %2 {strides = array<i32>} : memref<16x900xf32, #tpu.memory_space<vmem>>, vector<16x900xf32>,
    return
  }
}

module attributes {stable_mosaic.version = 11 : i64} {
  func.func @_gemm_bias_relu_kernel(%arg0: memref<8x72xbf16, #tpu.memory_space<vmem>>, %arg1: memref<72x1568xbf16, #tpu.memory_space<vmem>>, %arg2: memref<8x1xf32, #tpu.memory_space<vmem>>, %arg3: memref<8x1568xf32, #tpu.memory_space<vmem>>) attributes {dimension_semantics = [], scalar_prefetch = 0 : i64, scratch_operands = 0 : i64, tpu.core_type = #tpu.core_type<tc>} {
    %c0 = arith.constant 0 : index
    %c0_0 = arith.constant 0 : index
    %0 = vector.load %arg0[%c0, %c0_0] : memref<8x72xbf16, #tpu.memory_space<vmem>>, vector<8x72xbf16>
    %c0_1 = arith.constant 0 : index
    %c0_2 = arith.constant 0 : index
    %1 = vector.load %arg1[%c0_1, %c0_2] : memref<72x1568xbf16, #tpu.memory_space<vmem>>, vector<72x1568xbf16>
    %cst = arith.constant dense<0.000000e+00> : vector<8x1568xf32>
    %2 = tpu.matmul %0, %1, %cst {dimension_numbers = #tpu.dot_dimension_numbers<[1], [0], [0], [1], [0, 0, 1, 1], [], []>} : vector<8x72xbf16>, vector<72x1568xbf16>, vector<8x1568xf32> -> vector<8x1568xf32>
    %c0_3 = arith.constant 0 : index
    %c0_4 = arith.constant 0 : index
    %3 = vector.load %arg2[%c0_3, %c0_4] : memref<8x1xf32, #tpu.memory_space<vmem>>, vector<8x1xf32>
    %4 = vector.broadcast %3 : vector<8x1xf32> to vector<8x1568xf32>
    %5 = arith.addf %2, %4 : vector<8x1568xf32>
    %cst_5 = arith.constant 0.000000e+00 : f32
    %6 = vector.broadcast %cst_5 : f32 to vector<8x1568xf32>
    %7 = arith.maximumf %5, %6 : vector<8x1568xf32>
    %c0_6 = arith.constant 0 : index
    %c0_7 = arith.constant 0 : index
    %8 = vector.load %arg3[%c0_6, %c0_7] : memref<8x1568xf32, #tpu.memory_space<vmem>>, vector<8x1568xf32>
    tpu.vector_store %arg3[%c0_6, %c0_7], %7 {strides = array<i32>} : memref<8x1568xf32, #tpu.memory_space<vmem>>, vector<8x1568xf32>,
    return
  }
}

</mosaic_0001>

<llo_original>
// kernel: _lambda_.10
$region0: #{_lambda_.10}
  #allocation0 [shape = 'u32[]', space=smem, size = 0x4, offset = 0x4, fixed_abs, tag = 'smem constant byte address 0x4 - core index']
  #allocation1 [shape = 'u32[144,128]{1,0:T(1,128)}', space=vmem, size = 0x12000, scoped, tag = 'internal scratch']
  %s0 = inlined_call_operand.vmem [shape: bf16[32,25], index: 0, kind: input, shape index: {}]
  %s1 = inlined_call_operand.vmem [shape: bf16[25,1152], index: 1, kind: input, shape index: {}]
  %s2 = inlined_call_operand.vmem [shape: f32[32,1], index: 2, kind: input, shape index: {}]
  %s3 = inlined_call_operand.vmem [shape: f32[32,1152], index: 3, kind: output, shape index: {}]
  %s4 = sld [smem:[#allocation0]]
  $region22: #{_lambda_.10} parent=0
    _
  %s6 = ssub.s32 1, %s4
  %s7 = scalar_select 0, %s6, %s4
  // Predicated region
  $region2: #{_lambda_.10} parent=0 // pred_check
    _
  $region3: #{_lambda_.10} parent=0 // pred_check_branch
    %9 = sbr.rel (0) target = $region5
  $region4: #{_lambda_.10} parent=0 // pred_region
    _
  $region5: #{_lambda_.10} parent=0 // pred_fallthru
    _
  // Predicated region
  $region6: #{_lambda_.10} parent=0 // pred_check
    _
  $region7: #{_lambda_.10} parent=0 // pred_check_branch
    %11 = sbr.rel (0) target = $region9
  $region8: #{_lambda_.10} parent=0 // pred_region
    _
  $region9: #{_lambda_.10} parent=0 // pred_fallthru
    _
  // Predicated region
  $region10: #{_lambda_.10} parent=0 // pred_check
    _
  $region11: #{_lambda_.10} parent=0 // pred_check_branch
    %13 = sbr.rel (0) target = $region13
  $region12: #{_lambda_.10} parent=0 // pred_region
    _
  $region13: #{_lambda_.10} parent=0 // pred_fallthru
    _
  %v15 = vld [vmem:[%s0] sm:$0xf]
  %v16 = vld [vmem:[%s0 + $0x4] sm:$0xf]
  %v17 = vld [vmem:[%s0 + $0x8] sm:$0xf]
  %v18 = vld [vmem:[%s0 + $0xc] sm:$0xf]
  %v19 = vld [vmem:[%s1] sm:$0xff]
  %v20 = vld [vmem:[%s1 + $0x8] sm:$0xff]
  %v21 = vld [vmem:[%s1 + $0x10] sm:$0xff]
  %v22 = vld [vmem:[%s1 + $0x18] sm:$0xff]
  %v23 = vld [vmem:[%s1 + $0x20] sm:$0xf]
  %v24 = vld [vmem:[%s1 + $0x24] sm:$0xff]
  %v25 = vld [vmem:[%s1 + $0x2c] sm:$0xff]
  %v26 = vld [vmem:[%s1 + $0x34] sm:$0xff]
  %v27 = vld [vmem:[%s1 + $0x3c] sm:$0xff]
  %v28 = vld [vmem:[%s1 + $0x44] sm:$0xf]
  %v29 = vld [vmem:[%s1 + $0x48] sm:$0xff]
  %v30 = vld [vmem:[%s1 + $0x50] sm:$0xff]
  %v31 = vld [vmem:[%s1 + $0x58] sm:$0xff]
  %v32 = vld [vmem:[%s1 + $0x60] sm:$0xff]
  %v33 = vld [vmem:[%s1 + $0x68] sm:$0xf]
  %v34 = vld [vmem:[%s1 + $0x6c] sm:$0x11]
  %v35 = vld [vmem:[%s1 + $0x74] sm:$0x11]
  %v36 = vld [vmem:[%s1 + $0x7c] sm:$0x11]
  %v37 = vld [vmem:[%s1 + $0x84] sm:$0x11]
  %v38 = vld [vmem:[%s1 + $0x8c] sm:$0x1]
  %v39 = vld [vmem:[%s2] sm:$0xff]
  %v40 = vld [vmem:[%s2 + $0x8] sm:$0xff]
  %v41 = vld [vmem:[%s2 + $0x10] sm:$0xff]
  %v42 = vld [vmem:[%s2 + $0x18] sm:$0xff]
  %44 = vset.pattern.permute.xlu0 0
  %45 = vperm.xlu0 %44, %v39
  %v46 = vpop.permute.xlu0 %45
  %49 = vset.pattern.permute.xlu0 0
  %50 = vperm.xlu0 %49, %v40
  %v51 = vpop.permute.xlu0 %50
  %54 = vset.pattern.permute.xlu0 0
  %55 = vperm.xlu0 %54, %v41
  %v56 = vpop.permute.xlu0 %55
  %59 = vset.pattern.permute.xlu0 0
  %60 = vperm.xlu0 %59, %v42
  %v61 = vpop.permute.xlu0 %60
  %v67 = vunpack.c.l.b16 %v15
  %v68 = vunpack.c.l.b16 %v16
  %v69 = vunpack.c.l.b16 %v17
  %v70 = vunpack.c.l.b16 %v18
  %v71 = vpack.c.b16 %v68, %v67
  %v72 = vpack.c.b16 %v70, %v69
  %v93 = vunpack.c.l.b16 %v19
  %v94 = vunpack.c.h.b16 %v19
  %v95 = vunpack.c.l.b16 %v20
  %v96 = vunpack.c.h.b16 %v20
  %v97 = vunpack.c.l.b16 %v21
  %v98 = vunpack.c.h.b16 %v21
  %v99 = vunpack.c.l.b16 %v22
  %v100 = vunpack.c.h.b16 %v22
  %v101 = vunpack.c.l.b16 %v23
  %v102 = vunpack.c.l.b16 %v24
  %v103 = vunpack.c.h.b16 %v24
  %v104 = vunpack.c.l.b16 %v25
  %v105 = vunpack.c.h.b16 %v25
  %v106 = vunpack.c.l.b16 %v26
  %v107 = vunpack.c.h.b16 %v26
  %v108 = vunpack.c.l.b16 %v27
  %v109 = vunpack.c.h.b16 %v27
  %v110 = vunpack.c.l.b16 %v28
  %v111 = vunpack.c.l.b16 %v29
  %v112 = vunpack.c.h.b16 %v29
  %v113 = vunpack.c.l.b16 %v30
  %v114 = vunpack.c.h.b16 %v30
  %v115 = vunpack.c.l.b16 %v31
  %v116 = vunpack.c.h.b16 %v31
  %v117 = vunpack.c.l.b16 %v32
  %v118 = vunpack.c.h.b16 %v32
  %v119 = vunpack.c.l.b16 %v33
  %v120 = vunpack.c.l.b16 %v34
  %v121 = vunpack.c.h.b16 %v34
  %v122 = vunpack.c.l.b16 %v35
  %v123 = vunpack.c.h.b16 %v35
  %v124 = vunpack.c.l.b16 %v36
  %v125 = vunpack.c.h.b16 %v36
  %v126 = vunpack.c.l.b16 %v37
  %v127 = vunpack.c.h.b16 %v37
  %v128 = vunpack.c.l.b16 %v38
  %v129 = vpack.c.b16 %v102, %v93
  %v130 = vpack.c.b16 %v103, %v94
  %v131 = vpack.c.b16 %v104, %v95
  %v132 = vpack.c.b16 %v105, %v96
  %v133 = vpack.c.b16 %v106, %v97
  %v134 = vpack.c.b16 %v107, %v98
  %v135 = vpack.c.b16 %v108, %v99
  %v136 = vpack.c.b16 %v109, %v100
  %v137 = vpack.c.b16 %v110, %v101
  %v138 = vpack.c.b16 %v120, %v111
  %v139 = vpack.c.b16 %v121, %v112
  %v140 = vpack.c.b16 %v122, %v113
  %v141 = vpack.c.b16 %v123, %v114
  %v142 = vpack.c.b16 %v124, %v115
  %v143 = vpack.c.b16 %v125, %v116
  %v144 = vpack.c.b16 %v126, %v117
  %v145 = vpack.c.b16 %v127, %v118
  %v146 = vpack.c.b16 %v128, %v119
  %vm156 = vcmask 203776
  %v158 = vsel %vm156, %v71, 0
  %v161 = vsel %vm156, %v72, 0
  %vm163 = vcmask 1043456
  %vm164 = vcmask 1044480
  %v165 = vsel %vm163, 4294967295, 65535
  %v166 = vsel %vm164, %v165, 0
  %v168 = vand.u32 %v138, %v166
  %v171 = vand.u32 %v139, %v166
  %v174 = vand.u32 %v140, %v166
  %v177 = vand.u32 %v141, %v166
  %v180 = vand.u32 %v142, %v166
  %v183 = vand.u32 %v143, %v166
  %v186 = vand.u32 %v144, %v166
  %v189 = vand.u32 %v145, %v166
  %v192 = vand.u32 %v146, %v166
  %194 = vmatprep.subr.bf16.mxu0 %v130
  %195 = vmatpush1.bf16.msra.mxu0 %v129
  %196 = vmatprep.subr.bf16.mxu0 %v171
  %197 = vmatpush1.bf16.msra.mxu0 %v168
  %198 = vmatprep.subr.bf16.mxu0 0
  %199 = vmatpush1.bf16.msra.mxu0 0
  %200 = vmatprep.subr.bf16.mxu0 0
  %201 = vmatpush1.bf16.msra.mxu0 0
  %202 = vmatprep.subr.bf16.mxu0 0
  %203 = vmatpush1.bf16.msra.mxu0 0
  %204 = vmatprep.subr.bf16.mxu0 0
  %205 = vmatpush1.bf16.msra.mxu0 0
  %206 = vmatprep.subr.bf16.mxu0 0
  %207 = vmatpush1.bf16.msra.mxu0 0
  %208 = vmatprep.subr.bf16.mxu0 0
  %209 = vmatpush1.bf16.msra.mxu0 0
  %210 = vmatprep.subr.bf16.mxu0 0
  %211 = vmatpush1.bf16.msra.mxu0 0
  %212 = vmatprep.subr.bf16.mxu0 0
  %213 = vmatpush1.bf16.msra.mxu0 0
  %214 = vmatprep.subr.bf16.mxu0 0
  %215 = vmatpush1.bf16.msra.mxu0 0
  %216 = vmatprep.subr.bf16.mxu0 0
  %217 = vmatpush1.bf16.msra.mxu0 0
  %218 = vmatprep.subr.bf16.mxu0 0
  %219 = vmatpush1.bf16.msra.mxu0 0
  %220 = vmatprep.subr.bf16.mxu0 0
  %221 = vmatpush1.bf16.msra.mxu0 0
  %222 = vmatprep.subr.bf16.mxu0 0
  %223 = vmatpush1.bf16.msra.mxu0 0
  %224 = vmatprep.subr.bf16.mxu0 0
  %225 = vmatpush1.bf16.msra.mxu0 0
  %226 = vmatprep.mubr.bf16.mxu0 0
  %227 = vmatmul.mubr.bf16.gmra.mrb[0].mxu0 %v158
  %v228 = vpop.f32.mrb[0].mxu0
  %v229 = vadd.f32 %v46, %v228
  %v230 = vpop.f32.mrb[0].mxu0
  %v231 = vadd.f32 %v46, %v230
  %v232 = vpop.f32.mrb[0].mxu0
  %v233 = vadd.f32 %v51, %v232
  %v234 = vpop.f32.mrb[0].mxu0
  %v235 = vadd.f32 %v51, %v234
  %236 = vmatprep.mubr.bf16.mxu0 0
  %237 = vmatmul.mubr.bf16.gmra.mrb[0].mxu0 %v161
  %v238 = vpop.f32.mrb[0].mxu0
  %v239 = vadd.f32 %v56, %v238
  %v240 = vpop.f32.mrb[0].mxu0
  %v241 = vadd.f32 %v56, %v240
  %v242 = vpop.f32.mrb[0].mxu0
  %v243 = vadd.f32 %v61, %v242
  %v244 = vpop.f32.mrb[0].mxu0
  %v245 = vadd.f32 %v61, %v244
  %246 = vdwg.mxu0
  %247 = vmatprep.subr.bf16.mxu0 %v132
  %248 = vmatpush1.bf16.msra.mxu0 %v131
  %249 = vmatprep.subr.bf16.mxu0 %v177
  %250 = vmatpush1.bf16.msra.mxu0 %v174
  %251 = vmatprep.subr.bf16.mxu0 0
  %252 = vmatpush1.bf16.msra.mxu0 0
  %253 = vmatprep.subr.bf16.mxu0 0
  %254 = vmatpush1.bf16.msra.mxu0 0
  %255 = vmatprep.subr.bf16.mxu0 0
  %256 = vmatpush1.bf16.msra.mxu0 0
  %257 = vmatprep.subr.bf16.mxu0 0
  %258 = vmatpush1.bf16.msra.mxu0 0
  %259 = vmatprep.subr.bf16.mxu0 0
  %260 = vmatpush1.bf16.msra.mxu0 0
  %261 = vmatprep.subr.bf16.mxu0 0
  %262 = vmatpush1.bf16.msra.mxu0 0
  %263 = vmatprep.subr.bf16.mxu0 0
  %264 = vmatpush1.bf16.msra.mxu0 0
  %265 = vmatprep.subr.bf16.mxu0 0
  %266 = vmatpush1.bf16.msra.mxu0 0
  %267 = vmatprep.subr.bf16.mxu0 0
  %268 = vmatpush1.bf16.msra.mxu0 0
  %269 = vmatprep.subr.bf16.mxu0 0
  %270 = vmatpush1.bf16.msra.mxu0 0
  %271 = vmatprep.subr.bf16.mxu0 0
  %272 = vmatpush1.bf16.msra.mxu0 0
  %273 = vmatprep.subr.bf16.mxu0 0
  %274 = vmatpush1.bf16.msra.mxu0 0
  %275 = vmatprep.subr.bf16.mxu0 0
  %276 = vmatpush1.bf16.msra.mxu0 0
  %277 = vmatprep.subr.bf16.mxu0 0
  %278 = vmatpush1.bf16.msra.mxu0 0
  %279 = vmatprep.mubr.bf16.mxu0 0
  %280 = vmatmul.mubr.bf16.gmra.mrb[0].mxu0 %v158
  %v281 = vpop.f32.mrb[0].mxu0
  %v282 = vadd.f32 %v46, %v281
  %v283 = vpop.f32.mrb[0].mxu0
  %v284 = vadd.f32 %v46, %v283
  %v285 = vpop.f32.mrb[0].mxu0
  %v286 = vadd.f32 %v51, %v285
  %v287 = vpop.f32.mrb[0].mxu0
  %v288 = vadd.f32 %v51, %v287
  %289 = vmatprep.mubr.bf16.mxu0 0
  %290 = vmatmul.mubr.bf16.gmra.mrb[0].mxu0 %v161
  %v291 = vpop.f32.mrb[0].mxu0
  %v292 = vadd.f32 %v56, %v291
  %v293 = vpop.f32.mrb[0].mxu0
  %v294 = vadd.f32 %v56, %v293
  %v295 = vpop.f32.mrb[0].mxu0
  %v296 = vadd.f32 %v61, %v295
  %v297 = vpop.f32.mrb[0].mxu0
  %v298 = vadd.f32 %v61, %v297
  %299 = vdwg.mxu0
  %300 = vmatprep.subr.bf16.mxu0 %v134
  %301 = vmatpush1.bf16.msra.mxu0 %v133
  %302 = vmatprep.subr.bf16.mxu0 %v183
  %303 = vmatpush1.bf16.msra.mxu0 %v180
  %304 = vmatprep.subr.bf16.mxu0 0
  %305 = vmatpush1.bf16.msra.mxu0 0
  %306 = vmatprep.subr.bf16.mxu0 0
  %307 = vmatpush1.bf16.msra.mxu0 0
  %308 = vmatprep.subr.bf16.mxu0 0
  %309 = vmatpush1.bf16.msra.mxu0 0
  %310 = vmatprep.subr.bf16.mxu0 0
  %311 = vmatpush1.bf16.msra.mxu0 0
  %312 = vmatprep.subr.bf16.mxu0 0
  %313 = vmatpush1.bf16.msra.mxu0 0
  %314 = vmatprep.subr.bf16.mxu0 0
  %315 = vmatpush1.bf16.msra.mxu0 0
  %316 = vmatprep.subr.bf16.mxu0 0
  %317 = vmatpush1.bf16.msra.mxu0 0
  %318 = vmatprep.subr.bf16.mxu0 0
  %319 = vmatpush1.bf16.msra.mxu0 0
  %320 = vmatprep.subr.bf16.mxu0 0
  %321 = vmatpush1.bf16.msra.mxu0 0
  %322 = vmatprep.subr.bf16.mxu0 0
  %323 = vmatpush1.bf16.msra.mxu0 0
  %324 = vmatprep.subr.bf16.mxu0 0
  %325 = vmatpush1.bf16.msra.mxu0 0
  %326 = vmatprep.subr.bf16.mxu0 0
  %327 = vmatpush1.bf16.msra.mxu0 0
  %328 = vmatprep.subr.bf16.mxu0 0
  %329 = vmatpush1.bf16.msra.mxu0 0
  %330 = vmatprep.subr.bf16.mxu0 0
  %331 = vmatpush1.bf16.msra.mxu0 0
  %332 = vmatprep.mubr.bf16.mxu0 0
  %333 = vmatmul.mubr.bf16.gmra.mrb[0].mxu0 %v158
  %v334 = vpop.f32.mrb[0].mxu0
  %v335 = vadd.f32 %v46, %v334
  %v336 = vpop.f32.mrb[0].mxu0
  %v337 = vadd.f32 %v46, %v336
  %v338 = vpop.f32.mrb[0].mxu0
  %v339 = vadd.f32 %v51, %v338
  %v340 = vpop.f32.mrb[0].mxu0
  %v341 = vadd.f32 %v51, %v340
  %342 = vmatprep.mubr.bf16.mxu0 0
  %343 = vmatmul.mubr.bf16.gmra.mrb[0].mxu0 %v161
  %v344 = vpop.f32.mrb[0].mxu0
  %v345 = vadd.f32 %v56, %v344
  %v346 = vpop.f32.mrb[0].mxu0
  %v347 = vadd.f32 %v56, %v346
  %v348 = vpop.f32.mrb[0].mxu0
  %v349 = vadd.f32 %v61, %v348
  %v350 = vpop.f32.mrb[0].mxu0
  %v351 = vadd.f32 %v61, %v350
  %352 = vdwg.mxu0
  %353 = vmatprep.subr.bf16.mxu0 %v136
  %354 = vmatpush1.bf16.msra.mxu0 %v135
  %355 = vmatprep.subr.bf16.mxu0 %v189
  %356 = vmatpush1.bf16.msra.mxu0 %v186
  %357 = vmatprep.subr.bf16.mxu0 0
  %358 = vmatpush1.bf16.msra.mxu0 0
  %359 = vmatprep.subr.bf16.mxu0 0
  %360 = vmatpush1.bf16.msra.mxu0 0
  %361 = vmatprep.subr.bf16.mxu0 0
  %362 = vmatpush1.bf16.msra.mxu0 0
  %363 = vmatprep.subr.bf16.mxu0 0
  %364 = vmatpush1.bf16.msra.mxu0 0
  %365 = vmatprep.subr.bf16.mxu0 0
  %366 = vmatpush1.bf16.msra.mxu0 0
  %367 = vmatprep.subr.bf16.mxu0 0
  %368 = vmatpush1.bf16.msra.mxu0 0
  %369 = vmatprep.subr.bf16.mxu0 0
  %370 = vmatpush1.bf16.msra.mxu0 0
  %371 = vmatprep.subr.bf16.mxu0 0
  %372 = vmatpush1.bf16.msra.mxu0 0
  %373 = vmatprep.subr.bf16.mxu0 0
  %374 = vmatpush1.bf16.msra.mxu0 0
  %375 = vmatprep.subr.bf16.mxu0 0
  %376 = vmatpush1.bf16.msra.mxu0 0
  %377 = vmatprep.subr.bf16.mxu0 0
  %378 = vmatpush1.bf16.msra.mxu0 0
  %379 = vmatprep.subr.bf16.mxu0 0
  %380 = vmatpush1.bf16.msra.mxu0 0
  %381 = vmatprep.subr.bf16.mxu0 0
  %382 = vmatpush1.bf16.msra.mxu0 0
  %383 = vmatprep.subr.bf16.mxu0 0
  %384 = vmatpush1.bf16.msra.mxu0 0
  %385 = vmatprep.mubr.bf16.mxu0 0
  %386 = vmatmul.mubr.bf16.gmra.mrb[0].mxu0 %v158
  %v387 = vpop.f32.mrb[0].mxu0
  %v388 = vadd.f32 %v46, %v387
  %v389 = vpop.f32.mrb[0].mxu0
  %v390 = vadd.f32 %v46, %v389
  %v391 = vpop.f32.mrb[0].mxu0
  %v392 = vadd.f32 %v51, %v391
  %v393 = vpop.f32.mrb[0].mxu0
  %v394 = vadd.f32 %v51, %v393
  %395 = vmatprep.mubr.bf16.mxu0 0
  %396 = vmatmul.mubr.bf16.gmra.mrb[0].mxu0 %v161
  %v397 = vpop.f32.mrb[0].mxu0
  %v398 = vadd.f32 %v56, %v397
  %v399 = vpop.f32.mrb[0].mxu0
  %v400 = vadd.f32 %v56, %v399
  %v401 = vpop.f32.mrb[0].mxu0
  %v402 = vadd.f32 %v61, %v401
  %v403 = vpop.f32.mrb[0].mxu0
  %v404 = vadd.f32 %v61, %v403
  %405 = vdwg.mxu0
  %406 = vmatprep.subr.bf16.mxu0 0
  %407 = vmatpush1.bf16.msra.mxu0 %v137
  %408 = vmatprep.subr.bf16.mxu0 0
  %409 = vmatpush1.bf16.msra.mxu0 %v192
  %410 = vmatprep.subr.bf16.mxu0 0
  %411 = vmatpush1.bf16.msra.mxu0 0
  %412 = vmatprep.subr.bf16.mxu0 0
  %413 = vmatpush1.bf16.msra.mxu0 0
  %414 = vmatprep.subr.bf16.mxu0 0
  %415 = vmatpush1.bf16.msra.mxu0 0
  %416 = vmatprep.subr.bf16.mxu0 0
  %417 = vmatpush1.bf16.msra.mxu0 0
  %418 = vmatprep.subr.bf16.mxu0 0
  %419 = vmatpush1.bf16.msra.mxu0 0
  %420 = vmatprep.subr.bf16.mxu0 0
  %421 = vmatpush1.bf16.msra.mxu0 0
  %422 = vmatprep.subr.bf16.mxu0 0
  %423 = vmatpush1.bf16.msra.mxu0 0
  %424 = vmatprep.subr.bf16.mxu0 0
  %425 = vmatpush1.bf16.msra.mxu0 0
  %426 = vmatprep.subr.bf16.mxu0 0
  %427 = vmatpush1.bf16.msra.mxu0 0
  %428 = vmatprep.subr.bf16.mxu0 0
  %429 = vmatpush1.bf16.msra.mxu0 0
  %430 = vmatprep.subr.bf16.mxu0 0
  %431 = vmatpush1.bf16.msra.mxu0 0
  %432 = vmatprep.subr.bf16.mxu0 0
  %433 = vmatpush1.bf16.msra.mxu0 0
  %434 = vmatprep.subr.bf16.mxu0 0
  %435 = vmatpush1.bf16.msra.mxu0 0
  %436 = vmatprep.subr.bf16.mxu0 0
  %437 = vmatpush1.bf16.msra.mxu0 0
  %438 = vmatprep.mubr.bf16.mxu0 0
  %439 = vmatmul.mubr.bf16.gmra.mrb[0].mxu0 %v158
  %v440 = vpop.f32.mrb[0].mxu0
  %v441 = vadd.f32 %v46, %v440
  %v442 = vpop.f32.mrb[0].mxu0
  %v443 = vpop.f32.mrb[0].mxu0
  %v444 = vadd.f32 %v51, %v443
  %v445 = vpop.f32.mrb[0].mxu0
  %446 = vmatprep.mubr.bf16.mxu0 0
  %447 = vmatmul.mubr.bf16.gmra.mrb[0].mxu0 %v161
  %v448 = vpop.f32.mrb[0].mxu0
  %v449 = vadd.f32 %v56, %v448
  %v450 = vpop.f32.mrb[0].mxu0
  %v451 = vpop.f32.mrb[0].mxu0
  %v452 = vadd.f32 %v61, %v451
  %v453 = vpop.f32.mrb[0].mxu0
  %454 = vdwg.mxu0
  %v455 = vmax.f32 %v229, 0.0
  %v456 = vmax.f32 %v231, 0.0
  %v457 = vmax.f32 %v282, 0.0
  %v458 = vmax.f32 %v284, 0.0
  %v459 = vmax.f32 %v335, 0.0
  %v460 = vmax.f32 %v337, 0.0
  %v461 = vmax.f32 %v388, 0.0
  %v462 = vmax.f32 %v390, 0.0
  %v463 = vmax.f32 %v441, 0.0
  %v464 = vmax.f32 %v233, 0.0
  %v465 = vmax.f32 %v235, 0.0
  %v466 = vmax.f32 %v286, 0.0
  %v467 = vmax.f32 %v288, 0.0
  %v468 = vmax.f32 %v339, 0.0
  %v469 = vmax.f32 %v341, 0.0
  %v470 = vmax.f32 %v392, 0.0
  %v471 = vmax.f32 %v394, 0.0
  %v472 = vmax.f32 %v444, 0.0
  %v473 = vmax.f32 %v239, 0.0
  %v474 = vmax.f32 %v241, 0.0
  %v475 = vmax.f32 %v292, 0.0
  %v476 = vmax.f32 %v294, 0.0
  %v477 = vmax.f32 %v345, 0.0
  %v478 = vmax.f32 %v347, 0.0
  %v479 = vmax.f32 %v398, 0.0
  %v480 = vmax.f32 %v400, 0.0
  %v481 = vmax.f32 %v449, 0.0
  %v482 = vmax.f32 %v243, 0.0
  %v483 = vmax.f32 %v245, 0.0
  %v484 = vmax.f32 %v296, 0.0
  %v485 = vmax.f32 %v298, 0.0
  %v486 = vmax.f32 %v349, 0.0
  %v487 = vmax.f32 %v351, 0.0
  %v488 = vmax.f32 %v402, 0.0
  %v489 = vmax.f32 %v404, 0.0
  %v490 = vmax.f32 %v452, 0.0
  %491 = vst [vmem:[%s3] sm:$0xff] %v455
  %492 = vst [vmem:[%s3 + $0x8] sm:$0xff] %v456
  %493 = vst [vmem:[%s3 + $0x10] sm:$0xff] %v457
  %494 = vst [vmem:[%s3 + $0x18] sm:$0xff] %v458
  %495 = vst [vmem:[%s3 + $0x20] sm:$0xff] %v459
  %496 = vst [vmem:[%s3 + $0x28] sm:$0xff] %v460
  %497 = vst [vmem:[%s3 + $0x30] sm:$0xff] %v461
  %498 = vst [vmem:[%s3 + $0x38] sm:$0xff] %v462
  %499 = vst [vmem:[%s3 + $0x40] sm:$0xff] %v463
  %500 = vst [vmem:[%s3 + $0x48] sm:$0xff] %v464
  %501 = vst [vmem:[%s3 + $0x50] sm:$0xff] %v465
  %502 = vst [vmem:[%s3 + $0x58] sm:$0xff] %v466
  %503 = vst [vmem:[%s3 + $0x60] sm:$0xff] %v467
  %504 = vst [vmem:[%s3 + $0x68] sm:$0xff] %v468
  %505 = vst [vmem:[%s3 + $0x70] sm:$0xff] %v469
  %506 = vst [vmem:[%s3 + $0x78] sm:$0xff] %v470
  %507 = vst [vmem:[%s3 + $0x80] sm:$0xff] %v471
  %508 = vst [vmem:[%s3 + $0x88] sm:$0xff] %v472
  %509 = vst [vmem:[%s3 + $0x90] sm:$0xff] %v473
  %510 = vst [vmem:[%s3 + $0x98] sm:$0xff] %v474
  %511 = vst [vmem:[%s3 + $0xa0] sm:$0xff] %v475
  %512 = vst [vmem:[%s3 + $0xa8] sm:$0xff] %v476
  %513 = vst [vmem:[%s3 + $0xb0] sm:$0xff] %v477
  %514 = vst [vmem:[%s3 + $0xb8] sm:$0xff] %v478
  %515 = vst [vmem:[%s3 + $0xc0] sm:$0xff] %v479
  %516 = vst [vmem:[%s3 + $0xc8] sm:$0xff] %v480
  %517 = vst [vmem:[%s3 + $0xd0] sm:$0xff] %v481
  %518 = vst [vmem:[%s3 + $0xd8] sm:$0xff] %v482
  %519 = vst [vmem:[%s3 + $0xe0] sm:$0xff] %v483
  %520 = vst [vmem:[%s3 + $0xe8] sm:$0xff] %v484
  %521 = vst [vmem:[%s3 + $0xf0] sm:$0xff] %v485
  %522 = vst [vmem:[%s3 + $0xf8] sm:$0xff] %v486
  %523 = vst [vmem:[%s3 + $0x100] sm:$0xff] %v487
  %524 = vst [vmem:[%s3 + $0x108] sm:$0xff] %v488
  %525 = vst [vmem:[%s3 + $0x110] sm:$0xff] %v489
  %526 = vst [vmem:[%s3 + $0x118] sm:$0xff] %v490
  // Predicated region
  $region14: #{_lambda_.10} parent=0 // pred_check
    _
  $region15: #{_lambda_.10} parent=0 // pred_check_branch
    %528 = sbr.rel (0) target = $region17
  $region16: #{_lambda_.10} parent=0 // pred_region
    _
  $region17: #{_lambda_.10} parent=0 // pred_fallthru
    _
  // Predicated region
  $region18: #{_lambda_.10} parent=0 // pred_check
    _
  $region19: #{_lambda_.10} parent=0 // pred_check_branch
    %530 = sbr.rel (0) target = $region21
  $region20: #{_lambda_.10} parent=0 // pred_region
    _
  $region21: #{_lambda_.10} parent=0 // pred_fallthru
    _

// kernel: _lambda_.11
$region0: #{_lambda_.11}
  #allocation0 [shape = 'u32[]', space=smem, size = 0x4, offset = 0x4, fixed_abs, tag = 'smem constant byte address 0x4 - core index']
  #allocation1 [shape = 'u32[144,128]{1,0:T(1,128)}', space=vmem, size = 0x12000, scoped, tag = 'internal scratch']
  %s0 = inlined_call_operand.vmem [shape: f32[32,288], index: 0, kind: input, shape index: {}]
  %s1 = inlined_call_operand.vmem [shape: f32[32,288], index: 1, kind: input, shape index: {}]
  %s2 = inlined_call_operand.vmem [shape: f32[32,288], index: 2, kind: input, shape index: {}]
  %s3 = inlined_call_operand.vmem [shape: f32[32,288], index: 3, kind: input, shape index: {}]
  %s4 = inlined_call_operand.vmem [shape: f32[32,288], index: 4, kind: output, shape index: {}]
  %s5 = sld [smem:[#allocation0]]
  $region26: #{_lambda_.11} parent=0
    _
  %s7 = ssub.s32 1, %s5
  %s8 = scalar_select 0, %s7, %s5
  // Predicated region
  $region2: #{_lambda_.11} parent=0 // pred_check
    _
  $region3: #{_lambda_.11} parent=0 // pred_check_branch
    %10 = sbr.rel (0) target = $region5
  $region4: #{_lambda_.11} parent=0 // pred_region
    _
  $region5: #{_lambda_.11} parent=0 // pred_fallthru
    _
  // Predicated region
  $region6: #{_lambda_.11} parent=0 // pred_check
    _
  $region7: #{_lambda_.11} parent=0 // pred_check_branch
    %12 = sbr.rel (0) target = $region9
  $region8: #{_lambda_.11} parent=0 // pred_region
    _
  $region9: #{_lambda_.11} parent=0 // pred_fallthru
    _
  // Predicated region
  $region10: #{_lambda_.11} parent=0 // pred_check
    _
  $region11: #{_lambda_.11} parent=0 // pred_check_branch
    %14 = sbr.rel (0) target = $region13
  $region12: #{_lambda_.11} parent=0 // pred_region
    _
  $region13: #{_lambda_.11} parent=0 // pred_fallthru
    _
  // Predicated region
  $region14: #{_lambda_.11} parent=0 // pred_check
    _
  $region15: #{_lambda_.11} parent=0 // pred_check_branch
    %16 = sbr.rel (0) target = $region17
  $region16: #{_lambda_.11} parent=0 // pred_region
    _
  $region17: #{_lambda_.11} parent=0 // pred_fallthru
    _
  %v17 = vld [vmem:[%s0] sm:$0xff]
  %v18 = vld [vmem:[%s0 + $0x8] sm:$0xff]
  %v19 = vld [vmem:[%s0 + $0x10] sm:$0xff]
  %v20 = vld [vmem:[%s0 + $0x18] sm:$0xff]
  %v21 = vld [vmem:[%s0 + $0x20] sm:$0xff]
  %v22 = vld [vmem:[%s0 + $0x28] sm:$0xff]
  %v23 = vld [vmem:[%s0 + $0x30] sm:$0xff]
  %v24 = vld [vmem:[%s0 + $0x38] sm:$0xff]
  %v25 = vld [vmem:[%s0 + $0x40] sm:$0xff]
  %v26 = vld [vmem:[%s0 + $0x48] sm:$0xff]
  %v27 = vld [vmem:[%s0 + $0x50] sm:$0xff]
  %v28 = vld [vmem:[%s0 + $0x58] sm:$0xff]
  %v29 = vld [vmem:[%s1] sm:$0xff]
  %v30 = vld [vmem:[%s1 + $0x8] sm:$0xff]
  %v31 = vld [vmem:[%s1 + $0x10] sm:$0xff]
  %v32 = vld [vmem:[%s1 + $0x18] sm:$0xff]
  %v33 = vld [vmem:[%s1 + $0x20] sm:$0xff]
  %v34 = vld [vmem:[%s1 + $0x28] sm:$0xff]
  %v35 = vld [vmem:[%s1 + $0x30] sm:$0xff]
  %v36 = vld [vmem:[%s1 + $0x38] sm:$0xff]
  %v37 = vld [vmem:[%s1 + $0x40] sm:$0xff]
  %v38 = vld [vmem:[%s1 + $0x48] sm:$0xff]
  %v39 = vld [vmem:[%s1 + $0x50] sm:$0xff]
  %v40 = vld [vmem:[%s1 + $0x58] sm:$0xff]
  %v41 = vmax.f32 %v17, %v29
  %v42 = vmax.f32 %v18, %v30
  %v43 = vmax.f32 %v19, %v31
  %v44 = vmax.f32 %v20, %v32
  %v45 = vmax.f32 %v21, %v33
  %v46 = vmax.f32 %v22, %v34
  %v47 = vmax.f32 %v23, %v35
  %v48 = vmax.f32 %v24, %v36
  %v49 = vmax.f32 %v25, %v37
  %v50 = vmax.f32 %v26, %v38
  %v51 = vmax.f32 %v27, %v39
  %v52 = vmax.f32 %v28, %v40
  %v53 = vld [vmem:[%s2] sm:$0xff]
  %v54 = vld [vmem:[%s2 + $0x8] sm:$0xff]
  %v55 = vld [vmem:[%s2 + $0x10] sm:$0xff]
  %v56 = vld [vmem:[%s2 + $0x18] sm:$0xff]
  %v57 = vld [vmem:[%s2 + $0x20] sm:$0xff]
  %v58 = vld [vmem:[%s2 + $0x28] sm:$0xff]
  %v59 = vld [vmem:[%s2 + $0x30] sm:$0xff]
  %v60 = vld [vmem:[%s2 + $0x38] sm:$0xff]
  %v61 = vld [vmem:[%s2 + $0x40] sm:$0xff]
  %v62 = vld [vmem:[%s2 + $0x48] sm:$0xff]
  %v63 = vld [vmem:[%s2 + $0x50] sm:$0xff]
  %v64 = vld [vmem:[%s2 + $0x58] sm:$0xff]
  %v65 = vld [vmem:[%s3] sm:$0xff]
  %v66 = vld [vmem:[%s3 + $0x8] sm:$0xff]
  %v67 = vld [vmem:[%s3 + $0x10] sm:$0xff]
  %v68 = vld [vmem:[%s3 + $0x18] sm:$0xff]
  %v69 = vld [vmem:[%s3 + $0x20] sm:$0xff]
  %v70 = vld [vmem:[%s3 + $0x28] sm:$0xff]
  %v71 = vld [vmem:[%s3 + $0x30] sm:$0xff]
  %v72 = vld [vmem:[%s3 + $0x38] sm:$0xff]
  %v73 = vld [vmem:[%s3 + $0x40] sm:$0xff]
  %v74 = vld [vmem:[%s3 + $0x48] sm:$0xff]
  %v75 = vld [vmem:[%s3 + $0x50] sm:$0xff]
  %v76 = vld [vmem:[%s3 + $0x58] sm:$0xff]
  %v77 = vmax.f32 %v53, %v65
  %v78 = vmax.f32 %v54, %v66
  %v79 = vmax.f32 %v55, %v67
  %v80 = vmax.f32 %v56, %v68
  %v81 = vmax.f32 %v57, %v69
  %v82 = vmax.f32 %v58, %v70
  %v83 = vmax.f32 %v59, %v71
  %v84 = vmax.f32 %v60, %v72
  %v85 = vmax.f32 %v61, %v73
  %v86 = vmax.f32 %v62, %v74
  %v87 = vmax.f32 %v63, %v75
  %v88 = vmax.f32 %v64, %v76
  %v89 = vmax.f32 %v41, %v77
  %v90 = vmax.f32 %v42, %v78
  %v91 = vmax.f32 %v43, %v79
  %v92 = vmax.f32 %v44, %v80
  %v93 = vmax.f32 %v45, %v81
  %v94 = vmax.f32 %v46, %v82
  %v95 = vmax.f32 %v47, %v83
  %v96 = vmax.f32 %v48, %v84
  %v97 = vmax.f32 %v49, %v85
  %v98 = vmax.f32 %v50, %v86
  %v99 = vmax.f32 %v51, %v87
  %v100 = vmax.f32 %v52, %v88
  %101 = vst [vmem:[%s4] sm:$0xff] %v89
  %102 = vst [vmem:[%s4 + $0x8] sm:$0xff] %v90
  %vm103 = vcmask 261120
  %104 = vst.msk [vmem:[%s4 + $0x10] sm:$0xff] %vm103, %v91
  %105 = vst [vmem:[%s4 + $0x18] sm:$0xff] %v92
  %106 = vst [vmem:[%s4 + $0x20] sm:$0xff] %v93
  %107 = vst.msk [vmem:[%s4 + $0x28] sm:$0xff] %vm103, %v94
  %108 = vst [vmem:[%s4 + $0x30] sm:$0xff] %v95
  %109 = vst [vmem:[%s4 + $0x38] sm:$0xff] %v96
  %110 = vst.msk [vmem:[%s4 + $0x40] sm:$0xff] %vm103, %v97
  %111 = vst [vmem:[%s4 + $0x48] sm:$0xff] %v98
  %112 = vst [vmem:[%s4 + $0x50] sm:$0xff] %v99
  %113 = vst.msk [vmem:[%s4 + $0x58] sm:$0xff] %vm103, %v100
  // Predicated region
  $region18: #{_lambda_.11} parent=0 // pred_check
    _
  $region19: #{_lambda_.11} parent=0 // pred_check_branch
    %115 = sbr.rel (0) target = $region21
  $region20: #{_lambda_.11} parent=0 // pred_region
    _
  $region21: #{_lambda_.11} parent=0 // pred_fallthru
    _
  // Predicated region
  $region22: #{_lambda_.11} parent=0 // pred_check
    _
  $region23: #{_lambda_.11} parent=0 // pred_check_branch
    %117 = sbr.rel (0) target = $region25
  $region24: #{_lambda_.11} parent=0 // pred_region
    _
  $region25: #{_lambda_.11} parent=0 // pred_fallthru
    _

// kernel: _lambda_.12
$region0: #{_lambda_.12}
  #allocation0 [shape = 'u32[]', space=smem, size = 0x4, offset = 0x4, fixed_abs, tag = 'smem constant byte address 0x4 - core index']
  #allocation1 [shape = 'u32[144,128]{1,0:T(1,128)}', space=vmem, size = 0x12000, scoped, tag = 'internal scratch']
  %s0 = inlined_call_operand.vmem [shape: bf16[64,288], index: 0, kind: input, shape index: {}]
  %s1 = inlined_call_operand.vmem [shape: bf16[288,200], index: 1, kind: input, shape index: {}]
  %s2 = inlined_call_operand.vmem [shape: f32[64,1], index: 2, kind: input, shape index: {}]
  %s3 = inlined_call_operand.vmem [shape: f32[64,200], index: 3, kind: output, shape index: {}]
  %s4 = sld [smem:[#allocation0]]
  $region22: #{_lambda_.12} parent=0
    _
  %s6 = ssub.s32 1, %s4
  %s7 = scalar_select 0, %s6, %s4
  // Predicated region
  $region2: #{_lambda_.12} parent=0 // pred_check
    _
  $region3: #{_lambda_.12} parent=0 // pred_check_branch
    %9 = sbr.rel (0) target = $region5
  $region4: #{_lambda_.12} parent=0 // pred_region
    _
  $region5: #{_lambda_.12} parent=0 // pred_fallthru
    _
  // Predicated region
  $region6: #{_lambda_.12} parent=0 // pred_check
    _
  $region7: #{_lambda_.12} parent=0 // pred_check_branch
    %11 = sbr.rel (0) target = $region9
  $region8: #{_lambda_.12} parent=0 // pred_region
    _
  $region9: #{_lambda_.12} parent=0 // pred_fallthru
    _
  // Predicated region
  $region10: #{_lambda_.12} parent=0 // pred_check
    _
  $region11: #{_lambda_.12} parent=0 // pred_check_branch
    %13 = sbr.rel (0) target = $region13
  $region12: #{_lambda_.12} parent=0 // pred_region
    _
  $region13: #{_lambda_.12} parent=0 // pred_fallthru
    _
  %v15 = vld [vmem:[%s0] sm:$0xff]
  %v16 = vld [vmem:[%s0 + $0x8] sm:$0xf]
  %v17 = vld [vmem:[%s0 + $0xc] sm:$0xff]
  %v18 = vld [vmem:[%s0 + $0x14] sm:$0xf]
  %v19 = vld [vmem:[%s0 + $0x18] sm:$0xff]
  %v20 = vld [vmem:[%s0 + $0x20] sm:$0xf]
  %v21 = vld [vmem:[%s0 + $0x24] sm:$0xff]
  %v22 = vld [vmem:[%s0 + $0x2c] sm:$0xf]
  %v23 = vld [vmem:[%s0 + $0x30] sm:$0xff]
  %v24 = vld [vmem:[%s0 + $0x38] sm:$0xf]
  %v25 = vld [vmem:[%s0 + $0x3c] sm:$0xff]
  %v26 = vld [vmem:[%s0 + $0x44] sm:$0xf]
  %v27 = vld [vmem:[%s0 + $0x48] sm:$0xff]
  %v28 = vld [vmem:[%s0 + $0x50] sm:$0xf]
  %v29 = vld [vmem:[%s0 + $0x54] sm:$0xff]
  %v30 = vld [vmem:[%s0 + $0x5c] sm:$0xf]
  %v31 = vld [vmem:[%s1] sm:$0xff]
  %v32 = vld [vmem:[%s1 + $0x8] sm:$0xff]
  %v33 = vld [vmem:[%s1 + $0x10] sm:$0xff]
  %v34 = vld [vmem:[%s1 + $0x18] sm:$0xff]
  %v35 = vld [vmem:[%s1 + $0x20] sm:$0xff]
  %v36 = vld [vmem:[%s1 + $0x28] sm:$0xff]
  %v37 = vld [vmem:[%s1 + $0x30] sm:$0xff]
  %v38 = vld [vmem:[%s1 + $0x38] sm:$0xff]
  %v39 = vld [vmem:[%s1 + $0x40] sm:$0xff]
  %v40 = vld [vmem:[%s1 + $0x48] sm:$0xff]
  %v41 = vld [vmem:[%s1 + $0x50] sm:$0xff]
  %v42 = vld [vmem:[%s1 + $0x58] sm:$0xff]
  %v43 = vld [vmem:[%s1 + $0x60] sm:$0xff]
  %v44 = vld [vmem:[%s1 + $0x68] sm:$0xff]
  %v45 = vld [vmem:[%s1 + $0x70] sm:$0xff]
  %v46 = vld [vmem:[%s1 + $0x78] sm:$0xff]
  %v47 = vld [vmem:[%s1 + $0x80] sm:$0xff]
  %v48 = vld [vmem:[%s1 + $0x88] sm:$0xff]
  %v49 = vld [vmem:[%s1 + $0x90] sm:$0xff]
  %v50 = vld [vmem:[%s1 + $0x98] sm:$0xff]
  %v51 = vld [vmem:[%s1 + $0xa0] sm:$0xff]
  %v52 = vld [vmem:[%s1 + $0xa8] sm:$0xff]
  %v53 = vld [vmem:[%s1 + $0xb0] sm:$0xff]
  %v54 = vld [vmem:[%s1 + $0xb8] sm:$0xff]
  %v55 = vld [vmem:[%s1 + $0xc0] sm:$0xff]
  %v56 = vld [vmem:[%s1 + $0xc8] sm:$0xff]
  %v57 = vld [vmem:[%s1 + $0xd0] sm:$0xff]
  %v58 = vld [vmem:[%s1 + $0xd8] sm:$0xff]
  %v59 = vld [vmem:[%s1 + $0xe0] sm:$0xff]
  %v60 = vld [vmem:[%s1 + $0xe8] sm:$0xff]
  %v61 = vld [vmem:[%s1 + $0xf0] sm:$0xff]
  %v62 = vld [vmem:[%s1 + $0xf8] sm:$0xff]
  %v63 = vld [vmem:[%s1 + $0x100] sm:$0xff]
  %v64 = vld [vmem:[%s1 + $0x108] sm:$0xff]
  %v65 = vld [vmem:[%s1 + $0x110] sm:$0xff]
  %v66 = vld [vmem:[%s1 + $0x118] sm:$0xff]
  %v67 = vld [vmem:[%s2] sm:$0xff]
  %v68 = vld [vmem:[%s2 + $0x8] sm:$0xff]
  %v69 = vld [vmem:[%s2 + $0x10] sm:$0xff]
  %v70 = vld [vmem:[%s2 + $0x18] sm:$0xff]
  %v71 = vld [vmem:[%s2 + $0x20] sm:$0xff]
  %v72 = vld [vmem:[%s2 + $0x28] sm:$0xff]
  %v73 = vld [vmem:[%s2 + $0x30] sm:$0xff]
  %v74 = vld [vmem:[%s2 + $0x38] sm:$0xff]
  %76 = vset.pattern.permute.xlu0 0
  %77 = vperm.xlu0 %76, %v67
  %v78 = vpop.permute.xlu0 %77
  %81 = vset.pattern.permute.xlu0 0
  %82 = vperm.xlu0 %81, %v68
  %v83 = vpop.permute.xlu0 %82
  %86 = vset.pattern.permute.xlu0 0
  %87 = vperm.xlu0 %86, %v69
  %v88 = vpop.permute.xlu0 %87
  %91 = vset.pattern.permute.xlu0 0
  %92 = vperm.xlu0 %91, %v70
  %v93 = vpop.permute.xlu0 %92
  %96 = vset.pattern.permute.xlu0 0
  %97 = vperm.xlu0 %96, %v71
  %v98 = vpop.permute.xlu0 %97
  %101 = vset.pattern.permute.xlu0 0
  %102 = vperm.xlu0 %101, %v72
  %v103 = vpop.permute.xlu0 %102
  %106 = vset.pattern.permute.xlu0 0
  %107 = vperm.xlu0 %106, %v73
  %v108 = vpop.permute.xlu0 %107
  %111 = vset.pattern.permute.xlu0 0
  %112 = vperm.xlu0 %111, %v74
  %v113 = vpop.permute.xlu0 %112
  %v131 = vunpack.c.l.b16 %v15
  %v132 = vunpack.c.h.b16 %v15
  %v133 = vunpack.c.l.b16 %v16
  %v134 = vunpack.c.l.b16 %v17
  %v135 = vunpack.c.h.b16 %v17
  %v136 = vunpack.c.l.b16 %v18
  %v137 = vunpack.c.l.b16 %v19
  %v138 = vunpack.c.h.b16 %v19
  %v139 = vunpack.c.l.b16 %v20
  %v140 = vunpack.c.l.b16 %v21
  %v141 = vunpack.c.h.b16 %v21
  %v142 = vunpack.c.l.b16 %v22
  %v143 = vunpack.c.l.b16 %v23
  %v144 = vunpack.c.h.b16 %v23
  %v145 = vunpack.c.l.b16 %v24
  %v146 = vunpack.c.l.b16 %v25
  %v147 = vunpack.c.h.b16 %v25
  %v148 = vunpack.c.l.b16 %v26
  %v149 = vunpack.c.l.b16 %v27
  %v150 = vunpack.c.h.b16 %v27
  %v151 = vunpack.c.l.b16 %v28
  %v152 = vunpack.c.l.b16 %v29
  %v153 = vunpack.c.h.b16 %v29
  %v154 = vunpack.c.l.b16 %v30
  %v155 = vpack.c.b16 %v134, %v131
  %v156 = vpack.c.b16 %v135, %v132
  %v157 = vpack.c.b16 %v136, %v133
  %v158 = vpack.c.b16 %v140, %v137
  %v159 = vpack.c.b16 %v141, %v138
  %v160 = vpack.c.b16 %v142, %v139
  %v161 = vpack.c.b16 %v146, %v143
  %v162 = vpack.c.b16 %v147, %v144
  %v163 = vpack.c.b16 %v148, %v145
  %v164 = vpack.c.b16 %v152, %v149
  %v165 = vpack.c.b16 %v153, %v150
  %v166 = vpack.c.b16 %v154, %v151
  %v211 = vunpack.c.l.b16 %v31
  %v212 = vunpack.c.h.b16 %v31
  %v213 = vunpack.c.l.b16 %v32
  %v214 = vunpack.c.h.b16 %v32
  %v215 = vunpack.c.l.b16 %v33
  %v216 = vunpack.c.h.b16 %v33
  %v217 = vunpack.c.l.b16 %v34
  %v218 = vunpack.c.h.b16 %v34
  %v219 = vunpack.c.l.b16 %v35
  %v220 = vunpack.c.h.b16 %v35
  %v221 = vunpack.c.l.b16 %v36
  %v222 = vunpack.c.h.b16 %v36
  %v223 = vunpack.c.l.b16 %v37
  %v224 = vunpack.c.h.b16 %v37
  %v225 = vunpack.c.l.b16 %v38
  %v226 = vunpack.c.h.b16 %v38
  %v227 = vunpack.c.l.b16 %v39
  %v228 = vunpack.c.h.b16 %v39
  %v229 = vunpack.c.l.b16 %v40
  %v230 = vunpack.c.h.b16 %v40
  %v231 = vunpack.c.l.b16 %v41
  %v232 = vunpack.c.h.b16 %v41
  %v233 = vunpack.c.l.b16 %v42
  %v234 = vunpack.c.h.b16 %v42
  %v235 = vunpack.c.l.b16 %v43
  %v236 = vunpack.c.h.b16 %v43
  %v237 = vunpack.c.l.b16 %v44
  %v238 = vunpack.c.h.b16 %v44
  %v239 = vunpack.c.l.b16 %v45
  %v240 = vunpack.c.h.b16 %v45
  %v241 = vunpack.c.l.b16 %v46
  %v242 = vunpack.c.h.b16 %v46
  %v243 = vunpack.c.l.b16 %v47
  %v244 = vunpack.c.h.b16 %v47
  %v245 = vunpack.c.l.b16 %v48
  %v246 = vunpack.c.h.b16 %v48
  %v247 = vunpack.c.l.b16 %v49
  %v248 = vunpack.c.h.b16 %v49
  %v249 = vunpack.c.l.b16 %v50
  %v250 = vunpack.c.h.b16 %v50
  %v251 = vunpack.c.l.b16 %v51
  %v252 = vunpack.c.h.b16 %v51
  %v253 = vunpack.c.l.b16 %v52
  %v254 = vunpack.c.h.b16 %v52
  %v255 = vunpack.c.l.b16 %v53
  %v256 = vunpack.c.h.b16 %v53
  %v257 = vunpack.c.l.b16 %v54
  %v258 = vunpack.c.h.b16 %v54
  %v259 = vunpack.c.l.b16 %v55
  %v260 = vunpack.c.h.b16 %v55
  %v261 = vunpack.c.l.b16 %v56
  %v262 = vunpack.c.h.b16 %v56
  %v263 = vunpack.c.l.b16 %v57
  %v264 = vunpack.c.h.b16 %v57
  %v265 = vunpack.c.l.b16 %v58
  %v266 = vunpack.c.h.b16 %v58
  %v267 = vunpack.c.l.b16 %v59
  %v268 = vunpack.c.h.b16 %v59
  %v269 = vunpack.c.l.b16 %v60
  %v270 = vunpack.c.h.b16 %v60
  %v271 = vunpack.c.l.b16 %v61
  %v272 = vunpack.c.h.b16 %v61
  %v273 = vunpack.c.l.b16 %v62
  %v274 = vunpack.c.h.b16 %v62
  %v275 = vunpack.c.l.b16 %v63
  %v276 = vunpack.c.h.b16 %v63
  %v277 = vunpack.c.l.b16 %v64
  %v278 = vunpack.c.h.b16 %v64
  %v279 = vunpack.c.l.b16 %v65
  %v280 = vunpack.c.h.b16 %v65
  %v281 = vunpack.c.l.b16 %v66
  %v282 = vunpack.c.h.b16 %v66
  %v283 = vpack.c.b16 %v213, %v211
  %v284 = vpack.c.b16 %v214, %v212
  %v285 = vpack.c.b16 %v217, %v215
  %v286 = vpack.c.b16 %v218, %v216
  %v287 = vpack.c.b16 %v221, %v219
  %v288 = vpack.c.b16 %v222, %v220
  %v289 = vpack.c.b16 %v225, %v223
  %v290 = vpack.c.b16 %v226, %v224
  %v291 = vpack.c.b16 %v229, %v227
  %v292 = vpack.c.b16 %v230, %v228
  %v293 = vpack.c.b16 %v233, %v231
  %v294 = vpack.c.b16 %v234, %v232
  %v295 = vpack.c.b16 %v237, %v235
  %v296 = vpack.c.b16 %v238, %v236
  %v297 = vpack.c.b16 %v241, %v239
  %v298 = vpack.c.b16 %v242, %v240
  %v299 = vpack.c.b16 %v245, %v243
  %v300 = vpack.c.b16 %v246, %v244
  %v301 = vpack.c.b16 %v249, %v247
  %v302 = vpack.c.b16 %v250, %v248
  %v303 = vpack.c.b16 %v253, %v251
  %v304 = vpack.c.b16 %v254, %v252
  %v305 = vpack.c.b16 %v257, %v255
  %v306 = vpack.c.b16 %v258, %v256
  %v307 = vpack.c.b16 %v261, %v259
  %v308 = vpack.c.b16 %v262, %v260
  %v309 = vpack.c.b16 %v265, %v263
  %v310 = vpack.c.b16 %v266, %v264
  %v311 = vpack.c.b16 %v269, %v267
  %v312 = vpack.c.b16 %v270, %v268
  %v313 = vpack.c.b16 %v273, %v271
  %v314 = vpack.c.b16 %v274, %v272
  %v315 = vpack.c.b16 %v277, %v275
  %v316 = vpack.c.b16 %v278, %v276
  %v317 = vpack.c.b16 %v281, %v279
  %v318 = vpack.c.b16 %v282, %v280
  %vm355 = vcmask 261120
  %v357 = vsel %vm355, %v157, 0
  %v360 = vsel %vm355, %v160, 0
  %v363 = vsel %vm355, %v163, 0
  %v366 = vsel %vm355, %v166, 0
  %368 = vmatprep.subr.bf16.mxu0 %v284
  %369 = vmatpush1.bf16.msra.mxu0 %v283
  %370 = vmatprep.subr.bf16.mxu0 %v286
  %371 = vmatpush1.bf16.msra.mxu0 %v285
  %372 = vmatprep.subr.bf16.mxu0 %v288
  %373 = vmatpush1.bf16.msra.mxu0 %v287
  %374 = vmatprep.subr.bf16.mxu0 %v290
  %375 = vmatpush1.bf16.msra.mxu0 %v289
  %376 = vmatprep.subr.bf16.mxu0 %v292
  %377 = vmatpush1.bf16.msra.mxu0 %v291
  %378 = vmatprep.subr.bf16.mxu0 %v294
  %379 = vmatpush1.bf16.msra.mxu0 %v293
  %380 = vmatprep.subr.bf16.mxu0 %v296
  %381 = vmatpush1.bf16.msra.mxu0 %v295
  %382 = vmatprep.subr.bf16.mxu0 %v298
  %383 = vmatpush1.bf16.msra.mxu0 %v297
  %384 = vmatprep.subr.bf16.mxu0 %v300
  %385 = vmatpush1.bf16.msra.mxu0 %v299
  %386 = vmatprep.subr.bf16.mxu0 %v302
  %387 = vmatpush1.bf16.msra.mxu0 %v301
  %388 = vmatprep.subr.bf16.mxu0 %v304
  %389 = vmatpush1.bf16.msra.mxu0 %v303
  %390 = vmatprep.subr.bf16.mxu0 %v306
  %391 = vmatpush1.bf16.msra.mxu0 %v305
  %392 = vmatprep.subr.bf16.mxu0 %v308
  %393 = vmatpush1.bf16.msra.mxu0 %v307
  %394 = vmatprep.subr.bf16.mxu0 %v310
  %395 = vmatpush1.bf16.msra.mxu0 %v309
  %396 = vmatprep.subr.bf16.mxu0 %v312
  %397 = vmatpush1.bf16.msra.mxu0 %v311
  %398 = vmatprep.subr.bf16.mxu0 %v314
  %399 = vmatpush1.bf16.msra.mxu0 %v313
  %400 = vmatprep.mubr.bf16.mxu0 %v156
  %401 = vmatmul.mubr.bf16.gmra.mrb[0].mxu0 %v155
  %v402 = vpop.f32.mrb[0].mxu0
  %v403 = vadd.f32 %v78, %v402
  %v404 = vpop.f32.mrb[0].mxu0
  %v405 = vadd.f32 %v78, %v404
  %v406 = vpop.f32.mrb[0].mxu0
  %v407 = vadd.f32 %v83, %v406
  %v408 = vpop.f32.mrb[0].mxu0
  %v409 = vadd.f32 %v83, %v408
  %410 = vmatprep.mubr.bf16.mxu0 %v159
  %411 = vmatmul.mubr.bf16.gmra.mrb[0].mxu0 %v158
  %v412 = vpop.f32.mrb[0].mxu0
  %v413 = vadd.f32 %v88, %v412
  %v414 = vpop.f32.mrb[0].mxu0
  %v415 = vadd.f32 %v88, %v414
  %v416 = vpop.f32.mrb[0].mxu0
  %v417 = vadd.f32 %v93, %v416
  %v418 = vpop.f32.mrb[0].mxu0
  %v419 = vadd.f32 %v93, %v418
  %420 = vmatprep.mubr.bf16.mxu0 %v162
  %421 = vmatmul.mubr.bf16.gmra.mrb[0].mxu0 %v161
  %v422 = vpop.f32.mrb[0].mxu0
  %v423 = vadd.f32 %v98, %v422
  %v424 = vpop.f32.mrb[0].mxu0
  %v425 = vadd.f32 %v98, %v424
  %v426 = vpop.f32.mrb[0].mxu0
  %v427 = vadd.f32 %v103, %v426
  %v428 = vpop.f32.mrb[0].mxu0
  %v429 = vadd.f32 %v103, %v428
  %430 = vmatprep.mubr.bf16.mxu0 %v165
  %431 = vmatmul.mubr.bf16.gmra.mrb[0].mxu0 %v164
  %v432 = vpop.f32.mrb[0].mxu0
  %v433 = vadd.f32 %v108, %v432
  %v434 = vpop.f32.mrb[0].mxu0
  %v435 = vadd.f32 %v108, %v434
  %v436 = vpop.f32.mrb[0].mxu0
  %v437 = vadd.f32 %v113, %v436
  %v438 = vpop.f32.mrb[0].mxu0
  %v439 = vadd.f32 %v113, %v438
  %440 = vdwg.mxu0
  %441 = vmatprep.subr.bf16.mxu0 %v316
  %442 = vmatpush1.bf16.msra.mxu0 %v315
  %443 = vmatprep.subr.bf16.mxu0 %v318
  %444 = vmatpush1.bf16.msra.mxu0 %v317
  %445 = vmatprep.subr.bf16.mxu0 0
  %446 = vmatpush1.bf16.msra.mxu0 0
  %447 = vmatprep.subr.bf16.mxu0 0
  %448 = vmatpush1.bf16.msra.mxu0 0
  %449 = vmatprep.subr.bf16.mxu0 0
  %450 = vmatpush1.bf16.msra.mxu0 0
  %451 = vmatprep.subr.bf16.mxu0 0
  %452 = vmatpush1.bf16.msra.mxu0 0
  %453 = vmatprep.subr.bf16.mxu0 0
  %454 = vmatpush1.bf16.msra.mxu0 0
  %455 = vmatprep.subr.bf16.mxu0 0
  %456 = vmatpush1.bf16.msra.mxu0 0
  %457 = vmatprep.subr.bf16.mxu0 0
  %458 = vmatpush1.bf16.msra.mxu0 0
  %459 = vmatprep.subr.bf16.mxu0 0
  %460 = vmatpush1.bf16.msra.mxu0 0
  %461 = vmatprep.subr.bf16.mxu0 0
  %462 = vmatpush1.bf16.msra.mxu0 0
  %463 = vmatprep.subr.bf16.mxu0 0
  %464 = vmatpush1.bf16.msra.mxu0 0
  %465 = vmatprep.subr.bf16.mxu0 0
  %466 = vmatpush1.bf16.msra.mxu0 0
  %467 = vmatprep.subr.bf16.mxu0 0
  %468 = vmatpush1.bf16.msra.mxu0 0
  %469 = vmatprep.subr.bf16.mxu0 0
  %470 = vmatpush1.bf16.msra.mxu0 0
  %471 = vmatprep.subr.bf16.mxu0 0
  %472 = vmatpush1.bf16.msra.mxu0 0
  %473 = vmatprep.mubr.bf16.mxu0 0
  %474 = vmatmul.mubr.bf16.gmra.mrb[0].mxu0 %v357
  %v475 = vpop.f32.mrb[0].mxu0
  %v476 = vadd.f32 %v403, %v475
  %v477 = vpop.f32.mrb[0].mxu0
  %v478 = vadd.f32 %v405, %v477
  %v479 = vpop.f32.mrb[0].mxu0
  %v480 = vadd.f32 %v407, %v479
  %v481 = vpop.f32.mrb[0].mxu0
  %v482 = vadd.f32 %v409, %v481
  %483 = vmatprep.mubr.bf16.mxu0 0
  %484 = vmatmul.mubr.bf16.gmra.mrb[0].mxu0 %v360
  %v485 = vpop.f32.mrb[0].mxu0
  %v486 = vadd.f32 %v413, %v485
  %v487 = vpop.f32.mrb[0].mxu0
  %v488 = vadd.f32 %v415, %v487
  %v489 = vpop.f32.mrb[0].mxu0
  %v490 = vadd.f32 %v417, %v489
  %v491 = vpop.f32.mrb[0].mxu0
  %v492 = vadd.f32 %v419, %v491
  %493 = vmatprep.mubr.bf16.mxu0 0
  %494 = vmatmul.mubr.bf16.gmra.mrb[0].mxu0 %v363
  %v495 = vpop.f32.mrb[0].mxu0
  %v496 = vadd.f32 %v423, %v495
  %v497 = vpop.f32.mrb[0].mxu0
  %v498 = vadd.f32 %v425, %v497
  %v499 = vpop.f32.mrb[0].mxu0
  %v500 = vadd.f32 %v427, %v499
  %v501 = vpop.f32.mrb[0].mxu0
  %v502 = vadd.f32 %v429, %v501
  %503 = vmatprep.mubr.bf16.mxu0 0
  %504 = vmatmul.mubr.bf16.gmra.mrb[0].mxu0 %v366
  %v505 = vpop.f32.mrb[0].mxu0
  %v506 = vadd.f32 %v433, %v505
  %v507 = vpop.f32.mrb[0].mxu0
  %v508 = vadd.f32 %v435, %v507
  %v509 = vpop.f32.mrb[0].mxu0
  %v510 = vadd.f32 %v437, %v509
  %v511 = vpop.f32.mrb[0].mxu0
  %v512 = vadd.f32 %v439, %v511
  %513 = vdwg.mxu0
  %v514 = vmax.f32 %v476, 0.0
  %v515 = vmax.f32 %v478, 0.0
  %v516 = vmax.f32 %v480, 0.0
  %v517 = vmax.f32 %v482, 0.0
  %v518 = vmax.f32 %v486, 0.0
  %v519 = vmax.f32 %v488, 0.0
  %v520 = vmax.f32 %v490, 0.0
  %v521 = vmax.f32 %v492, 0.0
  %v522 = vmax.f32 %v496, 0.0
  %v523 = vmax.f32 %v498, 0.0
  %v524 = vmax.f32 %v500, 0.0
  %v525 = vmax.f32 %v502, 0.0
  %v526 = vmax.f32 %v506, 0.0
  %v527 = vmax.f32 %v508, 0.0
  %v528 = vmax.f32 %v510, 0.0
  %v529 = vmax.f32 %v512, 0.0
  %530 = vst [vmem:[%s3] sm:$0xff] %v514
  %vm531 = vcmask 588800
  %532 = vst.msk [vmem:[%s3 + $0x8] sm:$0xff] %vm531, %v515
  %533 = vst [vmem:[%s3 + $0x10] sm:$0xff] %v516
  %534 = vst.msk [vmem:[%s3 + $0x18] sm:$0xff] %vm531, %v517
  %535 = vst [vmem:[%s3 + $0x20] sm:$0xff] %v518
  %536 = vst.msk [vmem:[%s3 + $0x28] sm:$0xff] %vm531, %v519
  %537 = vst [vmem:[%s3 + $0x30] sm:$0xff] %v520
  %538 = vst.msk [vmem:[%s3 + $0x38] sm:$0xff] %vm531, %v521
  %539 = vst [vmem:[%s3 + $0x40] sm:$0xff] %v522
  %540 = vst.msk [vmem:[%s3 + $0x48] sm:$0xff] %vm531, %v523
  %541 = vst [vmem:[%s3 + $0x50] sm:$0xff] %v524
  %542 = vst.msk [vmem:[%s3 + $0x58] sm:$0xff] %vm531, %v525
  %543 = vst [vmem:[%s3 + $0x60] sm:$0xff] %v526
  %544 = vst.msk [vmem:[%s3 + $0x68] sm:$0xff] %vm531, %v527
  %545 = vst [vmem:[%s3 + $0x70] sm:$0xff] %v528
  %546 = vst.msk [vmem:[%s3 + $0x78] sm:$0xff] %vm531, %v529
  // Predicated region
  $region14: #{_lambda_.12} parent=0 // pred_check
    _
  $region15: #{_lambda_.12} parent=0 // pred_check_branch
    %548 = sbr.rel (0) target = $region17
  $region16: #{_lambda_.12} parent=0 // pred_region
    _
  $region17: #{_lambda_.12} parent=0 // pred_fallthru
    _
  // Predicated region
  $region18: #{_lambda_.12} parent=0 // pred_check
    _
  $region19: #{_lambda_.12} parent=0 // pred_check_branch
    %550 = sbr.rel (0) target = $region21
  $region20: #{_lambda_.12} parent=0 // pred_region
    _
  $region21: #{_lambda_.12} parent=0 // pred_fallthru
    _

// kernel: _lambda_.13
$region0: #{_lambda_.13}
  #allocation0 [shape = 'u32[]', space=smem, size = 0x4, offset = 0x4, fixed_abs, tag = 'smem constant byte address 0x4 - core index']
  #allocation1 [shape = 'u32[144,128]{1,0:T(1,128)}', space=vmem, size = 0x12000, scoped, tag = 'internal scratch']
  %s0 = inlined_call_operand.vmem [shape: bf16[32,576], index: 0, kind: input, shape index: {}]
  %s1 = inlined_call_operand.vmem [shape: bf16[576,128], index: 1, kind: input, shape index: {}]
  %s2 = inlined_call_operand.vmem [shape: f32[32,1], index: 2, kind: input, shape index: {}]
  %s3 = inlined_call_operand.vmem [shape: f32[32,128], index: 3, kind: output, shape index: {}]
  %s4 = sld [smem:[#allocation0]]
  $region22: #{_lambda_.13} parent=0
    _
  %s6 = ssub.s32 1, %s4
  %s7 = scalar_select 0, %s6, %s4
  // Predicated region
  $region2: #{_lambda_.13} parent=0 // pred_check
    _
  $region3: #{_lambda_.13} parent=0 // pred_check_branch
    %9 = sbr.rel (0) target = $region5
  $region4: #{_lambda_.13} parent=0 // pred_region
    _
  $region5: #{_lambda_.13} parent=0 // pred_fallthru
    _
  // Predicated region
  $region6: #{_lambda_.13} parent=0 // pred_check
    _
  $region7: #{_lambda_.13} parent=0 // pred_check_branch
    %11 = sbr.rel (0) target = $region9
  $region8: #{_lambda_.13} parent=0 // pred_region
    _
  $region9: #{_lambda_.13} parent=0 // pred_fallthru
    _
  // Predicated region
  $region10: #{_lambda_.13} parent=0 // pred_check
    _
  $region11: #{_lambda_.13} parent=0 // pred_check_branch
    %13 = sbr.rel (0) target = $region13
  $region12: #{_lambda_.13} parent=0 // pred_region
    _
  $region13: #{_lambda_.13} parent=0 // pred_fallthru
    _
  %v15 = vld [vmem:[%s0] sm:$0xff]
  %v16 = vld [vmem:[%s0 + $0x8] sm:$0xff]
  %v17 = vld [vmem:[%s0 + $0x10] sm:$0xf]
  %v18 = vld [vmem:[%s0 + $0x14] sm:$0xff]
  %v19 = vld [vmem:[%s0 + $0x1c] sm:$0xff]
  %v20 = vld [vmem:[%s0 + $0x24] sm:$0xf]
  %v21 = vld [vmem:[%s0 + $0x28] sm:$0xff]
  %v22 = vld [vmem:[%s0 + $0x30] sm:$0xff]
  %v23 = vld [vmem:[%s0 + $0x38] sm:$0xf]
  %v24 = vld [vmem:[%s0 + $0x3c] sm:$0xff]
  %v25 = vld [vmem:[%s0 + $0x44] sm:$0xff]
  %v26 = vld [vmem:[%s0 + $0x4c] sm:$0xf]
  %v27 = vld [vmem:[%s1] sm:$0xf]
  %v28 = vld [vmem:[%s1 + $0x4] sm:$0xf]
  %v29 = vld [vmem:[%s1 + $0x8] sm:$0xf]
  %v30 = vld [vmem:[%s1 + $0xc] sm:$0xf]
  %v31 = vld [vmem:[%s1 + $0x10] sm:$0xf]
  %v32 = vld [vmem:[%s1 + $0x14] sm:$0xf]
  %v33 = vld [vmem:[%s1 + $0x18] sm:$0xf]
  %v34 = vld [vmem:[%s1 + $0x1c] sm:$0xf]
  %v35 = vld [vmem:[%s1 + $0x20] sm:$0xf]
  %v36 = vld [vmem:[%s1 + $0x24] sm:$0xf]
  %v37 = vld [vmem:[%s1 + $0x28] sm:$0xf]
  %v38 = vld [vmem:[%s1 + $0x2c] sm:$0xf]
  %v39 = vld [vmem:[%s1 + $0x30] sm:$0xf]
  %v40 = vld [vmem:[%s1 + $0x34] sm:$0xf]
  %v41 = vld [vmem:[%s1 + $0x38] sm:$0xf]
  %v42 = vld [vmem:[%s1 + $0x3c] sm:$0xf]
  %v43 = vld [vmem:[%s1 + $0x40] sm:$0xf]
  %v44 = vld [vmem:[%s1 + $0x44] sm:$0xf]
  %v45 = vld [vmem:[%s1 + $0x48] sm:$0xf]
  %v46 = vld [vmem:[%s1 + $0x4c] sm:$0xf]
  %v47 = vld [vmem:[%s1 + $0x50] sm:$0xf]
  %v48 = vld [vmem:[%s1 + $0x54] sm:$0xf]
  %v49 = vld [vmem:[%s1 + $0x58] sm:$0xf]
  %v50 = vld [vmem:[%s1 + $0x5c] sm:$0xf]
  %v51 = vld [vmem:[%s1 + $0x60] sm:$0xf]
  %v52 = vld [vmem:[%s1 + $0x64] sm:$0xf]
  %v53 = vld [vmem:[%s1 + $0x68] sm:$0xf]
  %v54 = vld [vmem:[%s1 + $0x6c] sm:$0xf]
  %v55 = vld [vmem:[%s1 + $0x70] sm:$0xf]
  %v56 = vld [vmem:[%s1 + $0x74] sm:$0xf]
  %v57 = vld [vmem:[%s1 + $0x78] sm:$0xf]
  %v58 = vld [vmem:[%s1 + $0x7c] sm:$0xf]
  %v59 = vld [vmem:[%s1 + $0x80] sm:$0xf]
  %v60 = vld [vmem:[%s1 + $0x84] sm:$0xf]
  %v61 = vld [vmem:[%s1 + $0x88] sm:$0xf]
  %v62 = vld [vmem:[%s1 + $0x8c] sm:$0xf]
  %v63 = vld [vmem:[%s1 + $0x90] sm:$0xf]
  %v64 = vld [vmem:[%s1 + $0x94] sm:$0xf]
  %v65 = vld [vmem:[%s1 + $0x98] sm:$0xf]
  %v66 = vld [vmem:[%s1 + $0x9c] sm:$0xf]
  %v67 = vld [vmem:[%s1 + $0xa0] sm:$0xf]
  %v68 = vld [vmem:[%s1 + $0xa4] sm:$0xf]
  %v69 = vld [vmem:[%s1 + $0xa8] sm:$0xf]
  %v70 = vld [vmem:[%s1 + $0xac] sm:$0xf]
  %v71 = vld [vmem:[%s1 + $0xb0] sm:$0xf]
  %v72 = vld [vmem:[%s1 + $0xb4] sm:$0xf]
  %v73 = vld [vmem:[%s1 + $0xb8] sm:$0xf]
  %v74 = vld [vmem:[%s1 + $0xbc] sm:$0xf]
  %v75 = vld [vmem:[%s1 + $0xc0] sm:$0xf]
  %v76 = vld [vmem:[%s1 + $0xc4] sm:$0xf]
  %v77 = vld [vmem:[%s1 + $0xc8] sm:$0xf]
  %v78 = vld [vmem:[%s1 + $0xcc] sm:$0xf]
  %v79 = vld [vmem:[%s1 + $0xd0] sm:$0xf]
  %v80 = vld [vmem:[%s1 + $0xd4] sm:$0xf]
  %v81 = vld [vmem:[%s1 + $0xd8] sm:$0xf]
  %v82 = vld [vmem:[%s1 + $0xdc] sm:$0xf]
  %v83 = vld [vmem:[%s1 + $0xe0] sm:$0xf]
  %v84 = vld [vmem:[%s1 + $0xe4] sm:$0xf]
  %v85 = vld [vmem:[%s1 + $0xe8] sm:$0xf]
  %v86 = vld [vmem:[%s1 + $0xec] sm:$0xf]
  %v87 = vld [vmem:[%s1 + $0xf0] sm:$0xf]
  %v88 = vld [vmem:[%s1 + $0xf4] sm:$0xf]
  %v89 = vld [vmem:[%s1 + $0xf8] sm:$0xf]
  %v90 = vld [vmem:[%s1 + $0xfc] sm:$0xf]
  %v91 = vld [vmem:[%s1 + $0x100] sm:$0xf]
  %v92 = vld [vmem:[%s1 + $0x104] sm:$0xf]
  %v93 = vld [vmem:[%s1 + $0x108] sm:$0xf]
  %v94 = vld [vmem:[%s1 + $0x10c] sm:$0xf]
  %v95 = vld [vmem:[%s1 + $0x110] sm:$0xf]
  %v96 = vld [vmem:[%s1 + $0x114] sm:$0xf]
  %v97 = vld [vmem:[%s1 + $0x118] sm:$0xf]
  %v98 = vld [vmem:[%s1 + $0x11c] sm:$0xf]
  %v99 = vld [vmem:[%s2] sm:$0xff]
  %v100 = vld [vmem:[%s2 + $0x8] sm:$0xff]
  %v101 = vld [vmem:[%s2 + $0x10] sm:$0xff]
  %v102 = vld [vmem:[%s2 + $0x18] sm:$0xff]
  %104 = vset.pattern.permute.xlu0 0
  %105 = vperm.xlu0 %104, %v99
  %v106 = vpop.permute.xlu0 %105
  %109 = vset.pattern.permute.xlu0 0
  %110 = vperm.xlu0 %109, %v100
  %v111 = vpop.permute.xlu0 %110
  %114 = vset.pattern.permute.xlu0 0
  %115 = vperm.xlu0 %114, %v101
  %v116 = vpop.permute.xlu0 %115
  %119 = vset.pattern.permute.xlu0 0
  %120 = vperm.xlu0 %119, %v102
  %v121 = vpop.permute.xlu0 %120
  %v135 = vunpack.c.l.b16 %v15
  %v136 = vunpack.c.h.b16 %v15
  %v137 = vunpack.c.l.b16 %v16
  %v138 = vunpack.c.h.b16 %v16
  %v139 = vunpack.c.l.b16 %v17
  %v140 = vunpack.c.l.b16 %v18
  %v141 = vunpack.c.h.b16 %v18
  %v142 = vunpack.c.l.b16 %v19
  %v143 = vunpack.c.h.b16 %v19
  %v144 = vunpack.c.l.b16 %v20
  %v145 = vunpack.c.l.b16 %v21
  %v146 = vunpack.c.h.b16 %v21
  %v147 = vunpack.c.l.b16 %v22
  %v148 = vunpack.c.h.b16 %v22
  %v149 = vunpack.c.l.b16 %v23
  %v150 = vunpack.c.l.b16 %v24
  %v151 = vunpack.c.h.b16 %v24
  %v152 = vunpack.c.l.b16 %v25
  %v153 = vunpack.c.h.b16 %v25
  %v154 = vunpack.c.l.b16 %v26
  %v155 = vpack.c.b16 %v140, %v135
  %v156 = vpack.c.b16 %v141, %v136
  %v157 = vpack.c.b16 %v142, %v137
  %v158 = vpack.c.b16 %v143, %v138
  %v159 = vpack.c.b16 %v144, %v139
  %v160 = vpack.c.b16 %v150, %v145
  %v161 = vpack.c.b16 %v151, %v146
  %v162 = vpack.c.b16 %v152, %v147
  %v163 = vpack.c.b16 %v153, %v148
  %v164 = vpack.c.b16 %v154, %v149
  %v245 = vunpack.c.l.b16 %v27
  %v246 = vunpack.c.l.b16 %v28
  %v247 = vunpack.c.l.b16 %v29
  %v248 = vunpack.c.l.b16 %v30
  %v249 = vunpack.c.l.b16 %v31
  %v250 = vunpack.c.l.b16 %v32
  %v251 = vunpack.c.l.b16 %v33
  %v252 = vunpack.c.l.b16 %v34
  %v253 = vunpack.c.l.b16 %v35
  %v254 = vunpack.c.l.b16 %v36
  %v255 = vunpack.c.l.b16 %v37
  %v256 = vunpack.c.l.b16 %v38
  %v257 = vunpack.c.l.b16 %v39
  %v258 = vunpack.c.l.b16 %v40
  %v259 = vunpack.c.l.b16 %v41
  %v260 = vunpack.c.l.b16 %v42
  %v261 = vunpack.c.l.b16 %v43
  %v262 = vunpack.c.l.b16 %v44
  %v263 = vunpack.c.l.b16 %v45
  %v264 = vunpack.c.l.b16 %v46
  %v265 = vunpack.c.l.b16 %v47
  %v266 = vunpack.c.l.b16 %v48
  %v267 = vunpack.c.l.b16 %v49
  %v268 = vunpack.c.l.b16 %v50
  %v269 = vunpack.c.l.b16 %v51
  %v270 = vunpack.c.l.b16 %v52
  %v271 = vunpack.c.l.b16 %v53
  %v272 = vunpack.c.l.b16 %v54
  %v273 = vunpack.c.l.b16 %v55
  %v274 = vunpack.c.l.b16 %v56
  %v275 = vunpack.c.l.b16 %v57
  %v276 = vunpack.c.l.b16 %v58
  %v277 = vunpack.c.l.b16 %v59
  %v278 = vunpack.c.l.b16 %v60
  %v279 = vunpack.c.l.b16 %v61
  %v280 = vunpack.c.l.b16 %v62
  %v281 = vunpack.c.l.b16 %v63
  %v282 = vunpack.c.l.b16 %v64
  %v283 = vunpack.c.l.b16 %v65
  %v284 = vunpack.c.l.b16 %v66
  %v285 = vunpack.c.l.b16 %v67
  %v286 = vunpack.c.l.b16 %v68
  %v287 = vunpack.c.l.b16 %v69
  %v288 = vunpack.c.l.b16 %v70
  %v289 = vunpack.c.l.b16 %v71
  %v290 = vunpack.c.l.b16 %v72
  %v291 = vunpack.c.l.b16 %v73
  %v292 = vunpack.c.l.b16 %v74
  %v293 = vunpack.c.l.b16 %v75
  %v294 = vunpack.c.l.b16 %v76
  %v295 = vunpack.c.l.b16 %v77
  %v296 = vunpack.c.l.b16 %v78
  %v297 = vunpack.c.l.b16 %v79
  %v298 = vunpack.c.l.b16 %v80
  %v299 = vunpack.c.l.b16 %v81
  %v300 = vunpack.c.l.b16 %v82
  %v301 = vunpack.c.l.b16 %v83
  %v302 = vunpack.c.l.b16 %v84
  %v303 = vunpack.c.l.b16 %v85
  %v304 = vunpack.c.l.b16 %v86
  %v305 = vunpack.c.l.b16 %v87
  %v306 = vunpack.c.l.b16 %v88
  %v307 = vunpack.c.l.b16 %v89
  %v308 = vunpack.c.l.b16 %v90
  %v309 = vunpack.c.l.b16 %v91
  %v310 = vunpack.c.l.b16 %v92
  %v311 = vunpack.c.l.b16 %v93
  %v312 = vunpack.c.l.b16 %v94
  %v313 = vunpack.c.l.b16 %v95
  %v314 = vunpack.c.l.b16 %v96
  %v315 = vunpack.c.l.b16 %v97
  %v316 = vunpack.c.l.b16 %v98
  %v317 = vpack.c.b16 %v246, %v245
  %v318 = vpack.c.b16 %v248, %v247
  %v319 = vpack.c.b16 %v250, %v249
  %v320 = vpack.c.b16 %v252, %v251
  %v321 = vpack.c.b16 %v254, %v253
  %v322 = vpack.c.b16 %v256, %v255
  %v323 = vpack.c.b16 %v258, %v257
  %v324 = vpack.c.b16 %v260, %v259
  %v325 = vpack.c.b16 %v262, %v261
  %v326 = vpack.c.b16 %v264, %v263
  %v327 = vpack.c.b16 %v266, %v265
  %v328 = vpack.c.b16 %v268, %v267
  %v329 = vpack.c.b16 %v270, %v269
  %v330 = vpack.c.b16 %v272, %v271
  %v331 = vpack.c.b16 %v274, %v273
  %v332 = vpack.c.b16 %v276, %v275
  %v333 = vpack.c.b16 %v278, %v277
  %v334 = vpack.c.b16 %v280, %v279
  %v335 = vpack.c.b16 %v282, %v281
  %v336 = vpack.c.b16 %v284, %v283
  %v337 = vpack.c.b16 %v286, %v285
  %v338 = vpack.c.b16 %v288, %v287
  %v339 = vpack.c.b16 %v290, %v289
  %v340 = vpack.c.b16 %v292, %v291
  %v341 = vpack.c.b16 %v294, %v293
  %v342 = vpack.c.b16 %v296, %v295
  %v343 = vpack.c.b16 %v298, %v297
  %v344 = vpack.c.b16 %v300, %v299
  %v345 = vpack.c.b16 %v302, %v301
  %v346 = vpack.c.b16 %v304, %v303
  %v347 = vpack.c.b16 %v306, %v305
  %v348 = vpack.c.b16 %v308, %v307
  %v349 = vpack.c.b16 %v310, %v309
  %v350 = vpack.c.b16 %v312, %v311
  %v351 = vpack.c.b16 %v314, %v313
  %v352 = vpack.c.b16 %v316, %v315
  %vm389 = vcmask 523264
  %v391 = vsel %vm389, %v159, 0
  %v394 = vsel %vm389, %v164, 0
  %396 = vmatprep.subr.bf16.mxu0 0
  %397 = vmatpush1.bf16.msra.mxu0 %v317
  %398 = vmatprep.subr.bf16.mxu0 0
  %399 = vmatpush1.bf16.msra.mxu0 %v318
  %400 = vmatprep.subr.bf16.mxu0 0
  %401 = vmatpush1.bf16.msra.mxu0 %v319
  %402 = vmatprep.subr.bf16.mxu0 0
  %403 = vmatpush1.bf16.msra.mxu0 %v320
  %404 = vmatprep.subr.bf16.mxu0 0
  %405 = vmatpush1.bf16.msra.mxu0 %v321
  %406 = vmatprep.subr.bf16.mxu0 0
  %407 = vmatpush1.bf16.msra.mxu0 %v322
  %408 = vmatprep.subr.bf16.mxu0 0
  %409 = vmatpush1.bf16.msra.mxu0 %v323
  %410 = vmatprep.subr.bf16.mxu0 0
  %411 = vmatpush1.bf16.msra.mxu0 %v324
  %412 = vmatprep.subr.bf16.mxu0 0
  %413 = vmatpush1.bf16.msra.mxu0 %v325
  %414 = vmatprep.subr.bf16.mxu0 0
  %415 = vmatpush1.bf16.msra.mxu0 %v326
  %416 = vmatprep.subr.bf16.mxu0 0
  %417 = vmatpush1.bf16.msra.mxu0 %v327
  %418 = vmatprep.subr.bf16.mxu0 0
  %419 = vmatpush1.bf16.msra.mxu0 %v328
  %420 = vmatprep.subr.bf16.mxu0 0
  %421 = vmatpush1.bf16.msra.mxu0 %v329
  %422 = vmatprep.subr.bf16.mxu0 0
  %423 = vmatpush1.bf16.msra.mxu0 %v330
  %424 = vmatprep.subr.bf16.mxu0 0
  %425 = vmatpush1.bf16.msra.mxu0 %v331
  %426 = vmatprep.subr.bf16.mxu0 0
  %427 = vmatpush1.bf16.msra.mxu0 %v332
  %428 = vmatprep.mubr.bf16.mxu0 %v156
  %429 = vmatmul.mubr.bf16.gmra.mrb[0].mxu0 %v155
  %v430 = vpop.f32.mrb[0].mxu0
  %v431 = vadd.f32 %v106, %v430
  %v432 = vpop.f32.mrb[0].mxu0
  %v433 = vpop.f32.mrb[0].mxu0
  %v434 = vadd.f32 %v111, %v433
  %v435 = vpop.f32.mrb[0].mxu0
  %436 = vmatprep.mubr.bf16.mxu0 %v161
  %437 = vmatmul.mubr.bf16.gmra.mrb[0].mxu0 %v160
  %v438 = vpop.f32.mrb[0].mxu0
  %v439 = vadd.f32 %v116, %v438
  %v440 = vpop.f32.mrb[0].mxu0
  %v441 = vpop.f32.mrb[0].mxu0
  %v442 = vadd.f32 %v121, %v441
  %v443 = vpop.f32.mrb[0].mxu0
  %444 = vdwg.mxu0
  %445 = vmatprep.subr.bf16.mxu0 0
  %446 = vmatpush1.bf16.msra.mxu0 %v333
  %447 = vmatprep.subr.bf16.mxu0 0
  %448 = vmatpush1.bf16.msra.mxu0 %v334
  %449 = vmatprep.subr.bf16.mxu0 0
  %450 = vmatpush1.bf16.msra.mxu0 %v335
  %451 = vmatprep.subr.bf16.mxu0 0
  %452 = vmatpush1.bf16.msra.mxu0 %v336
  %453 = vmatprep.subr.bf16.mxu0 0
  %454 = vmatpush1.bf16.msra.mxu0 %v337
  %455 = vmatprep.subr.bf16.mxu0 0
  %456 = vmatpush1.bf16.msra.mxu0 %v338
  %457 = vmatprep.subr.bf16.mxu0 0
  %458 = vmatpush1.bf16.msra.mxu0 %v339
  %459 = vmatprep.subr.bf16.mxu0 0
  %460 = vmatpush1.bf16.msra.mxu0 %v340
  %461 = vmatprep.subr.bf16.mxu0 0
  %462 = vmatpush1.bf16.msra.mxu0 %v341
  %463 = vmatprep.subr.bf16.mxu0 0
  %464 = vmatpush1.bf16.msra.mxu0 %v342
  %465 = vmatprep.subr.bf16.mxu0 0
  %466 = vmatpush1.bf16.msra.mxu0 %v343
  %467 = vmatprep.subr.bf16.mxu0 0
  %468 = vmatpush1.bf16.msra.mxu0 %v344
  %469 = vmatprep.subr.bf16.mxu0 0
  %470 = vmatpush1.bf16.msra.mxu0 %v345
  %471 = vmatprep.subr.bf16.mxu0 0
  %472 = vmatpush1.bf16.msra.mxu0 %v346
  %473 = vmatprep.subr.bf16.mxu0 0
  %474 = vmatpush1.bf16.msra.mxu0 %v347
  %475 = vmatprep.subr.bf16.mxu0 0
  %476 = vmatpush1.bf16.msra.mxu0 %v348
  %477 = vmatprep.mubr.bf16.mxu0 %v158
  %478 = vmatmul.mubr.bf16.gmra.mrb[0].mxu0 %v157
  %v479 = vpop.f32.mrb[0].mxu0
  %v480 = vadd.f32 %v431, %v479
  %v481 = vpop.f32.mrb[0].mxu0
  %v482 = vpop.f32.mrb[0].mxu0
  %v483 = vadd.f32 %v434, %v482
  %v484 = vpop.f32.mrb[0].mxu0
  %485 = vmatprep.mubr.bf16.mxu0 %v163
  %486 = vmatmul.mubr.bf16.gmra.mrb[0].mxu0 %v162
  %v487 = vpop.f32.mrb[0].mxu0
  %v488 = vadd.f32 %v439, %v487
  %v489 = vpop.f32.mrb[0].mxu0
  %v490 = vpop.f32.mrb[0].mxu0
  %v491 = vadd.f32 %v442, %v490
  %v492 = vpop.f32.mrb[0].mxu0
  %493 = vdwg.mxu0
  %494 = vmatprep.subr.bf16.mxu0 0
  %495 = vmatpush1.bf16.msra.mxu0 %v349
  %496 = vmatprep.subr.bf16.mxu0 0
  %497 = vmatpush1.bf16.msra.mxu0 %v350
  %498 = vmatprep.subr.bf16.mxu0 0
  %499 = vmatpush1.bf16.msra.mxu0 %v351
  %500 = vmatprep.subr.bf16.mxu0 0
  %501 = vmatpush1.bf16.msra.mxu0 %v352
  %502 = vmatprep.subr.bf16.mxu0 0
  %503 = vmatpush1.bf16.msra.mxu0 0
  %504 = vmatprep.subr.bf16.mxu0 0
  %505 = vmatpush1.bf16.msra.mxu0 0
  %506 = vmatprep.subr.bf16.mxu0 0
  %507 = vmatpush1.bf16.msra.mxu0 0
  %508 = vmatprep.subr.bf16.mxu0 0
  %509 = vmatpush1.bf16.msra.mxu0 0
  %510 = vmatprep.subr.bf16.mxu0 0
  %511 = vmatpush1.bf16.msra.mxu0 0
  %512 = vmatprep.subr.bf16.mxu0 0
  %513 = vmatpush1.bf16.msra.mxu0 0
  %514 = vmatprep.subr.bf16.mxu0 0
  %515 = vmatpush1.bf16.msra.mxu0 0
  %516 = vmatprep.subr.bf16.mxu0 0
  %517 = vmatpush1.bf16.msra.mxu0 0
  %518 = vmatprep.subr.bf16.mxu0 0
  %519 = vmatpush1.bf16.msra.mxu0 0
  %520 = vmatprep.subr.bf16.mxu0 0
  %521 = vmatpush1.bf16.msra.mxu0 0
  %522 = vmatprep.subr.bf16.mxu0 0
  %523 = vmatpush1.bf16.msra.mxu0 0
  %524 = vmatprep.subr.bf16.mxu0 0
  %525 = vmatpush1.bf16.msra.mxu0 0
  %526 = vmatprep.mubr.bf16.mxu0 0
  %527 = vmatmul.mubr.bf16.gmra.mrb[0].mxu0 %v391
  %v528 = vpop.f32.mrb[0].mxu0
  %v529 = vadd.f32 %v480, %v528
  %v530 = vpop.f32.mrb[0].mxu0
  %v531 = vpop.f32.mrb[0].mxu0
  %v532 = vadd.f32 %v483, %v531
  %v533 = vpop.f32.mrb[0].mxu0
  %534 = vmatprep.mubr.bf16.mxu0 0
  %535 = vmatmul.mubr.bf16.gmra.mrb[0].mxu0 %v394
  %v536 = vpop.f32.mrb[0].mxu0
  %v537 = vadd.f32 %v488, %v536
  %v538 = vpop.f32.mrb[0].mxu0
  %v539 = vpop.f32.mrb[0].mxu0
  %v540 = vadd.f32 %v491, %v539
  %v541 = vpop.f32.mrb[0].mxu0
  %542 = vdwg.mxu0
  %v543 = vmax.f32 %v529, 0.0
  %v544 = vmax.f32 %v532, 0.0
  %v545 = vmax.f32 %v537, 0.0
  %v546 = vmax.f32 %v540, 0.0
  %547 = vst [vmem:[%s3] sm:$0xff] %v543
  %548 = vst [vmem:[%s3 + $0x8] sm:$0xff] %v544
  %549 = vst [vmem:[%s3 + $0x10] sm:$0xff] %v545
  %550 = vst [vmem:[%s3 + $0x18] sm:$0xff] %v546
  // Predicated region
  $region14: #{_lambda_.13} parent=0 // pred_check
    _
  $region15: #{_lambda_.13} parent=0 // pred_check_branch
    %552 = sbr.rel (0) target = $region17
  $region16: #{_lambda_.13} parent=0 // pred_region
    _
  $region17: #{_lambda_.13} parent=0 // pred_fallthru
    _
  // Predicated region
  $region18: #{_lambda_.13} parent=0 // pred_check
    _
  $region19: #{_lambda_.13} parent=0 // pred_check_branch
    %554 = sbr.rel (0) target = $region21
  $region20: #{_lambda_.13} parent=0 // pred_region
    _
  $region21: #{_lambda_.13} parent=0 // pred_fallthru
    _

// kernel: _lambda_.14
$region0: #{_lambda_.14}
  #allocation0 [shape = 'u32[]', space=smem, size = 0x4, offset = 0x4, fixed_abs, tag = 'smem constant byte address 0x4 - core index']
  #allocation1 [shape = 'u32[144,128]{1,0:T(1,128)}', space=vmem, size = 0x12000, scoped, tag = 'internal scratch']
  %s0 = inlined_call_operand.vmem [shape: bf16[64,64], index: 0, kind: input, shape index: {}]
  %s1 = inlined_call_operand.vmem [shape: bf16[64,256], index: 1, kind: input, shape index: {}]
  %s2 = inlined_call_operand.vmem [shape: f32[64,256], index: 2, kind: output, shape index: {}]
  %s3 = sld [smem:[#allocation0]]
  $region18: #{_lambda_.14} parent=0
    _
  %s5 = ssub.s32 1, %s3
  %s6 = scalar_select 0, %s5, %s3
  // Predicated region
  $region2: #{_lambda_.14} parent=0 // pred_check
    _
  $region3: #{_lambda_.14} parent=0 // pred_check_branch
    %8 = sbr.rel (0) target = $region5
  $region4: #{_lambda_.14} parent=0 // pred_region
    _
  $region5: #{_lambda_.14} parent=0 // pred_fallthru
    _
  // Predicated region
  $region6: #{_lambda_.14} parent=0 // pred_check
    _
  $region7: #{_lambda_.14} parent=0 // pred_check_branch
    %10 = sbr.rel (0) target = $region9
  $region8: #{_lambda_.14} parent=0 // pred_region
    _
  $region9: #{_lambda_.14} parent=0 // pred_fallthru
    _
  %v12 = vld [vmem:[%s0] sm:$0xf]
  %v13 = vld [vmem:[%s0 + $0x4] sm:$0xf]
  %v14 = vld [vmem:[%s0 + $0x8] sm:$0xf]
  %v15 = vld [vmem:[%s0 + $0xc] sm:$0xf]
  %v16 = vld [vmem:[%s0 + $0x10] sm:$0xf]
  %v17 = vld [vmem:[%s0 + $0x14] sm:$0xf]
  %v18 = vld [vmem:[%s0 + $0x18] sm:$0xf]
  %v19 = vld [vmem:[%s0 + $0x1c] sm:$0xf]
  %v20 = vld [vmem:[%s1] sm:$0xff]
  %v21 = vld [vmem:[%s1 + $0x8] sm:$0xff]
  %v22 = vld [vmem:[%s1 + $0x10] sm:$0xff]
  %v23 = vld [vmem:[%s1 + $0x18] sm:$0xff]
  %v24 = vld [vmem:[%s1 + $0x20] sm:$0xff]
  %v25 = vld [vmem:[%s1 + $0x28] sm:$0xff]
  %v26 = vld [vmem:[%s1 + $0x30] sm:$0xff]
  %v27 = vld [vmem:[%s1 + $0x38] sm:$0xff]
  %v36 = vunpack.c.l.b16 %v12
  %v37 = vunpack.c.l.b16 %v13
  %v38 = vunpack.c.l.b16 %v14
  %v39 = vunpack.c.l.b16 %v15
  %v40 = vunpack.c.l.b16 %v16
  %v41 = vunpack.c.l.b16 %v17
  %v42 = vunpack.c.l.b16 %v18
  %v43 = vunpack.c.l.b16 %v19
  %v44 = vpack.c.b16 %v37, %v36
  %v45 = vpack.c.b16 %v39, %v38
  %v46 = vpack.c.b16 %v41, %v40
  %v47 = vpack.c.b16 %v43, %v42
  %v56 = vunpack.c.l.b16 %v20
  %v57 = vunpack.c.h.b16 %v20
  %v58 = vunpack.c.l.b16 %v21
  %v59 = vunpack.c.h.b16 %v21
  %v60 = vunpack.c.l.b16 %v22
  %v61 = vunpack.c.h.b16 %v22
  %v62 = vunpack.c.l.b16 %v23
  %v63 = vunpack.c.h.b16 %v23
  %v64 = vunpack.c.l.b16 %v24
  %v65 = vunpack.c.h.b16 %v24
  %v66 = vunpack.c.l.b16 %v25
  %v67 = vunpack.c.h.b16 %v25
  %v68 = vunpack.c.l.b16 %v26
  %v69 = vunpack.c.h.b16 %v26
  %v70 = vunpack.c.l.b16 %v27
  %v71 = vunpack.c.h.b16 %v27
  %v72 = vpack.c.b16 %v58, %v56
  %v73 = vpack.c.b16 %v59, %v57
  %v74 = vpack.c.b16 %v62, %v60
  %v75 = vpack.c.b16 %v63, %v61
  %v76 = vpack.c.b16 %v66, %v64
  %v77 = vpack.c.b16 %v67, %v65
  %v78 = vpack.c.b16 %v70, %v68
  %v79 = vpack.c.b16 %v71, %v69
  %vm88 = vcmask 523264
  %v90 = vsel %vm88, %v44, 0
  %v93 = vsel %vm88, %v45, 0
  %v96 = vsel %vm88, %v46, 0
  %v99 = vsel %vm88, %v47, 0
  %101 = vmatprep.subr.bf16.mxu0 %v73
  %102 = vmatpush1.bf16.msra.mxu0 %v72
  %103 = vmatprep.subr.bf16.mxu0 %v75
  %104 = vmatpush1.bf16.msra.mxu0 %v74
  %105 = vmatprep.subr.bf16.mxu0 %v77
  %106 = vmatpush1.bf16.msra.mxu0 %v76
  %107 = vmatprep.subr.bf16.mxu0 %v79
  %108 = vmatpush1.bf16.msra.mxu0 %v78
  %109 = vmatprep.subr.bf16.mxu0 0
  %110 = vmatpush1.bf16.msra.mxu0 0
  %111 = vmatprep.subr.bf16.mxu0 0
  %112 = vmatpush1.bf16.msra.mxu0 0
  %113 = vmatprep.subr.bf16.mxu0 0
  %114 = vmatpush1.bf16.msra.mxu0 0
  %115 = vmatprep.subr.bf16.mxu0 0
  %116 = vmatpush1.bf16.msra.mxu0 0
  %117 = vmatprep.subr.bf16.mxu0 0
  %118 = vmatpush1.bf16.msra.mxu0 0
  %119 = vmatprep.subr.bf16.mxu0 0
  %120 = vmatpush1.bf16.msra.mxu0 0
  %121 = vmatprep.subr.bf16.mxu0 0
  %122 = vmatpush1.bf16.msra.mxu0 0
  %123 = vmatprep.subr.bf16.mxu0 0
  %124 = vmatpush1.bf16.msra.mxu0 0
  %125 = vmatprep.subr.bf16.mxu0 0
  %126 = vmatpush1.bf16.msra.mxu0 0
  %127 = vmatprep.subr.bf16.mxu0 0
  %128 = vmatpush1.bf16.msra.mxu0 0
  %129 = vmatprep.subr.bf16.mxu0 0
  %130 = vmatpush1.bf16.msra.mxu0 0
  %131 = vmatprep.subr.bf16.mxu0 0
  %132 = vmatpush1.bf16.msra.mxu0 0
  %133 = vmatprep.mubr.bf16.mxu0 0
  %134 = vmatmul.mubr.bf16.gmra.mrb[0].mxu0 %v90
  %v135 = vpop.f32.mrb[0].mxu0
  %v136 = vadd.f32 0.0, %v135
  %v137 = vpop.f32.mrb[0].mxu0
  %v138 = vadd.f32 0.0, %v137
  %v139 = vpop.f32.mrb[0].mxu0
  %v140 = vadd.f32 0.0, %v139
  %v141 = vpop.f32.mrb[0].mxu0
  %v142 = vadd.f32 0.0, %v141
  %143 = vmatprep.mubr.bf16.mxu0 0
  %144 = vmatmul.mubr.bf16.gmra.mrb[0].mxu0 %v93
  %v145 = vpop.f32.mrb[0].mxu0
  %v146 = vadd.f32 0.0, %v145
  %v147 = vpop.f32.mrb[0].mxu0
  %v148 = vadd.f32 0.0, %v147
  %v149 = vpop.f32.mrb[0].mxu0
  %v150 = vadd.f32 0.0, %v149
  %v151 = vpop.f32.mrb[0].mxu0
  %v152 = vadd.f32 0.0, %v151
  %153 = vmatprep.mubr.bf16.mxu0 0
  %154 = vmatmul.mubr.bf16.gmra.mrb[0].mxu0 %v96
  %v155 = vpop.f32.mrb[0].mxu0
  %v156 = vadd.f32 0.0, %v155
  %v157 = vpop.f32.mrb[0].mxu0
  %v158 = vadd.f32 0.0, %v157
  %v159 = vpop.f32.mrb[0].mxu0
  %v160 = vadd.f32 0.0, %v159
  %v161 = vpop.f32.mrb[0].mxu0
  %v162 = vadd.f32 0.0, %v161
  %163 = vmatprep.mubr.bf16.mxu0 0
  %164 = vmatmul.mubr.bf16.gmra.mrb[0].mxu0 %v99
  %v165 = vpop.f32.mrb[0].mxu0
  %v166 = vadd.f32 0.0, %v165
  %v167 = vpop.f32.mrb[0].mxu0
  %v168 = vadd.f32 0.0, %v167
  %v169 = vpop.f32.mrb[0].mxu0
  %v170 = vadd.f32 0.0, %v169
  %v171 = vpop.f32.mrb[0].mxu0
  %v172 = vadd.f32 0.0, %v171
  %173 = vdwg.mxu0
  %174 = vst [vmem:[%s2] sm:$0xff] %v136
  %175 = vst [vmem:[%s2 + $0x8] sm:$0xff] %v138
  %176 = vst [vmem:[%s2 + $0x10] sm:$0xff] %v140
  %177 = vst [vmem:[%s2 + $0x18] sm:$0xff] %v142
  %178 = vst [vmem:[%s2 + $0x20] sm:$0xff] %v146
  %179 = vst [vmem:[%s2 + $0x28] sm:$0xff] %v148
  %180 = vst [vmem:[%s2 + $0x30] sm:$0xff] %v150
  %181 = vst [vmem:[%s2 + $0x38] sm:$0xff] %v152
  %182 = vst [vmem:[%s2 + $0x40] sm:$0xff] %v156
  %183 = vst [vmem:[%s2 + $0x48] sm:$0xff] %v158
  %184 = vst [vmem:[%s2 + $0x50] sm:$0xff] %v160
  %185 = vst [vmem:[%s2 + $0x58] sm:$0xff] %v162
  %186 = vst [vmem:[%s2 + $0x60] sm:$0xff] %v166
  %187 = vst [vmem:[%s2 + $0x68] sm:$0xff] %v168
  %188 = vst [vmem:[%s2 + $0x70] sm:$0xff] %v170
  %189 = vst [vmem:[%s2 + $0x78] sm:$0xff] %v172
  // Predicated region
  $region10: #{_lambda_.14} parent=0 // pred_check
    _
  $region11: #{_lambda_.14} parent=0 // pred_check_branch
    %191 = sbr.rel (0) target = $region13
  $region12: #{_lambda_.14} parent=0 // pred_region
    _
  $region13: #{_lambda_.14} parent=0 // pred_fallthru
    _
  // Predicated region
  $region14: #{_lambda_.14} parent=0 // pred_check
    _
  $region15: #{_lambda_.14} parent=0 // pred_check_branch
    %193 = sbr.rel (0) target = $region17
  $region16: #{_lambda_.14} parent=0 // pred_region
    _
  $region17: #{_lambda_.14} parent=0 // pred_fallthru
    _

// kernel: _lambda_.15
$region0: #{_lambda_.15}
  #allocation0 [shape = 'u32[]', space=smem, size = 0x4, offset = 0x4, fixed_abs, tag = 'smem constant byte address 0x4 - core index']
  #allocation1 [shape = 'u32[144,128]{1,0:T(1,128)}', space=vmem, size = 0x12000, scoped, tag = 'internal scratch']
  %s0 = inlined_call_operand.vmem [shape: bf16[16,288], index: 0, kind: input, shape index: {}]
  %s1 = inlined_call_operand.vmem [shape: bf16[288,392], index: 1, kind: input, shape index: {}]
  %s2 = inlined_call_operand.vmem [shape: f32[16,1], index: 2, kind: input, shape index: {}]
  %s3 = inlined_call_operand.vmem [shape: f32[16,392], index: 3, kind: output, shape index: {}]
  %s4 = sld [smem:[#allocation0]]
  $region22: #{_lambda_.15} parent=0
    _
  %s6 = ssub.s32 1, %s4
  %s7 = scalar_select 0, %s6, %s4
  // Predicated region
  $region2: #{_lambda_.15} parent=0 // pred_check
    _
  $region3: #{_lambda_.15} parent=0 // pred_check_branch
    %9 = sbr.rel (0) target = $region5
  $region4: #{_lambda_.15} parent=0 // pred_region
    _
  $region5: #{_lambda_.15} parent=0 // pred_fallthru
    _
  // Predicated region
  $region6: #{_lambda_.15} parent=0 // pred_check
    _
  $region7: #{_lambda_.15} parent=0 // pred_check_branch
    %11 = sbr.rel (0) target = $region9
  $region8: #{_lambda_.15} parent=0 // pred_region
    _
  $region9: #{_lambda_.15} parent=0 // pred_fallthru
    _
  // Predicated region
  $region10: #{_lambda_.15} parent=0 // pred_check
    _
  $region11: #{_lambda_.15} parent=0 // pred_check_branch
    %13 = sbr.rel (0) target = $region13
  $region12: #{_lambda_.15} parent=0 // pred_region
    _
  $region13: #{_lambda_.15} parent=0 // pred_fallthru
    _
  %v15 = vld [vmem:[%s0] sm:$0xff]
  %v16 = vld [vmem:[%s0 + $0x8] sm:$0xf]
  %v17 = vld [vmem:[%s0 + $0xc] sm:$0xff]
  %v18 = vld [vmem:[%s0 + $0x14] sm:$0xf]
  %v19 = vld [vmem:[%s1] sm:$0xff]
  %v20 = vld [vmem:[%s1 + $0x8] sm:$0xff]
  %v21 = vld [vmem:[%s1 + $0x10] sm:$0xff]
  %v22 = vld [vmem:[%s1 + $0x18] sm:$0xff]
  %v23 = vld [vmem:[%s1 + $0x20] sm:$0xff]
  %v24 = vld [vmem:[%s1 + $0x28] sm:$0xff]
  %v25 = vld [vmem:[%s1 + $0x30] sm:$0xff]
  %v26 = vld [vmem:[%s1 + $0x38] sm:$0xff]
  %v27 = vld [vmem:[%s1 + $0x40] sm:$0xff]
  %v28 = vld [vmem:[%s1 + $0x48] sm:$0xff]
  %v29 = vld [vmem:[%s1 + $0x50] sm:$0xff]
  %v30 = vld [vmem:[%s1 + $0x58] sm:$0xff]
  %v31 = vld [vmem:[%s1 + $0x60] sm:$0xff]
  %v32 = vld [vmem:[%s1 + $0x68] sm:$0xff]
  %v33 = vld [vmem:[%s1 + $0x70] sm:$0xff]
  %v34 = vld [vmem:[%s1 + $0x78] sm:$0xff]
  %v35 = vld [vmem:[%s1 + $0x80] sm:$0xff]
  %v36 = vld [vmem:[%s1 + $0x88] sm:$0xff]
  %v37 = vld [vmem:[%s1 + $0x90] sm:$0xff]
  %v38 = vld [vmem:[%s1 + $0x98] sm:$0xff]
  %v39 = vld [vmem:[%s1 + $0xa0] sm:$0xff]
  %v40 = vld [vmem:[%s1 + $0xa8] sm:$0xff]
  %v41 = vld [vmem:[%s1 + $0xb0] sm:$0xff]
  %v42 = vld [vmem:[%s1 + $0xb8] sm:$0xff]
  %v43 = vld [vmem:[%s1 + $0xc0] sm:$0xff]
  %v44 = vld [vmem:[%s1 + $0xc8] sm:$0xff]
  %v45 = vld [vmem:[%s1 + $0xd0] sm:$0xff]
  %v46 = vld [vmem:[%s1 + $0xd8] sm:$0xff]
  %v47 = vld [vmem:[%s1 + $0xe0] sm:$0xff]
  %v48 = vld [vmem:[%s1 + $0xe8] sm:$0xff]
  %v49 = vld [vmem:[%s1 + $0xf0] sm:$0xff]
  %v50 = vld [vmem:[%s1 + $0xf8] sm:$0xff]
  %v51 = vld [vmem:[%s1 + $0x100] sm:$0xff]
  %v52 = vld [vmem:[%s1 + $0x108] sm:$0xff]
  %v53 = vld [vmem:[%s1 + $0x110] sm:$0xff]
  %v54 = vld [vmem:[%s1 + $0x118] sm:$0xff]
  %v55 = vld [vmem:[%s1 + $0x120] sm:$0xff]
  %v56 = vld [vmem:[%s1 + $0x128] sm:$0xff]
  %v57 = vld [vmem:[%s1 + $0x130] sm:$0xff]
  %v58 = vld [vmem:[%s1 + $0x138] sm:$0xff]
  %v59 = vld [vmem:[%s1 + $0x140] sm:$0xff]
  %v60 = vld [vmem:[%s1 + $0x148] sm:$0xff]
  %v61 = vld [vmem:[%s1 + $0x150] sm:$0xff]
  %v62 = vld [vmem:[%s1 + $0x158] sm:$0xff]
  %v63 = vld [vmem:[%s1 + $0x160] sm:$0xff]
  %v64 = vld [vmem:[%s1 + $0x168] sm:$0xff]
  %v65 = vld [vmem:[%s1 + $0x170] sm:$0xff]
  %v66 = vld [vmem:[%s1 + $0x178] sm:$0xff]
  %v67 = vld [vmem:[%s1 + $0x180] sm:$0xff]
  %v68 = vld [vmem:[%s1 + $0x188] sm:$0xff]
  %v69 = vld [vmem:[%s1 + $0x190] sm:$0xff]
  %v70 = vld [vmem:[%s1 + $0x198] sm:$0xff]
  %v71 = vld [vmem:[%s1 + $0x1a0] sm:$0xff]
  %v72 = vld [vmem:[%s1 + $0x1a8] sm:$0xff]
  %v73 = vld [vmem:[%s1 + $0x1b0] sm:$0xff]
  %v74 = vld [vmem:[%s1 + $0x1b8] sm:$0xff]
  %v75 = vld [vmem:[%s1 + $0x1c0] sm:$0xff]
  %v76 = vld [vmem:[%s1 + $0x1c8] sm:$0xff]
  %v77 = vld [vmem:[%s1 + $0x1d0] sm:$0xff]
  %v78 = vld [vmem:[%s1 + $0x1d8] sm:$0xff]
  %v79 = vld [vmem:[%s1 + $0x1e0] sm:$0xff]
  %v80 = vld [vmem:[%s1 + $0x1e8] sm:$0xff]
  %v81 = vld [vmem:[%s1 + $0x1f0] sm:$0xff]
  %v82 = vld [vmem:[%s1 + $0x1f8] sm:$0xff]
  %v83 = vld [vmem:[%s1 + $0x200] sm:$0xff]
  %v84 = vld [vmem:[%s1 + $0x208] sm:$0xff]
  %v85 = vld [vmem:[%s1 + $0x210] sm:$0xff]
  %v86 = vld [vmem:[%s1 + $0x218] sm:$0xff]
  %v87 = vld [vmem:[%s1 + $0x220] sm:$0xff]
  %v88 = vld [vmem:[%s1 + $0x228] sm:$0xff]
  %v89 = vld [vmem:[%s1 + $0x230] sm:$0xff]
  %v90 = vld [vmem:[%s1 + $0x238] sm:$0xff]
  %v91 = vld [vmem:[%s2] sm:$0xff]
  %v92 = vld [vmem:[%s2 + $0x8] sm:$0xff]
  %94 = vset.pattern.permute.xlu0 0
  %95 = vperm.xlu0 %94, %v91
  %v96 = vpop.permute.xlu0 %95
  %99 = vset.pattern.permute.xlu0 0
  %100 = vperm.xlu0 %99, %v92
  %v101 = vpop.permute.xlu0 %100
  %v107 = vunpack.c.l.b16 %v15
  %v108 = vunpack.c.h.b16 %v15
  %v109 = vunpack.c.l.b16 %v16
  %v110 = vunpack.c.l.b16 %v17
  %v111 = vunpack.c.h.b16 %v17
  %v112 = vunpack.c.l.b16 %v18
  %v113 = vpack.c.b16 %v110, %v107
  %v114 = vpack.c.b16 %v111, %v108
  %v115 = vpack.c.b16 %v112, %v109
  %v190 = vunpack.c.l.b16 %v19
  %v191 = vunpack.c.h.b16 %v19
  %v192 = vunpack.c.l.b16 %v20
  %v193 = vunpack.c.h.b16 %v20
  %v194 = vunpack.c.l.b16 %v21
  %v195 = vunpack.c.h.b16 %v21
  %v196 = vunpack.c.l.b16 %v22
  %v197 = vunpack.c.h.b16 %v22
  %v198 = vunpack.c.l.b16 %v23
  %v199 = vunpack.c.h.b16 %v23
  %v200 = vunpack.c.l.b16 %v24
  %v201 = vunpack.c.h.b16 %v24
  %v202 = vunpack.c.l.b16 %v25
  %v203 = vunpack.c.h.b16 %v25
  %v204 = vunpack.c.l.b16 %v26
  %v205 = vunpack.c.h.b16 %v26
  %v206 = vunpack.c.l.b16 %v27
  %v207 = vunpack.c.h.b16 %v27
  %v208 = vunpack.c.l.b16 %v28
  %v209 = vunpack.c.h.b16 %v28
  %v210 = vunpack.c.l.b16 %v29
  %v211 = vunpack.c.h.b16 %v29
  %v212 = vunpack.c.l.b16 %v30
  %v213 = vunpack.c.h.b16 %v30
  %v214 = vunpack.c.l.b16 %v31
  %v215 = vunpack.c.h.b16 %v31
  %v216 = vunpack.c.l.b16 %v32
  %v217 = vunpack.c.h.b16 %v32
  %v218 = vunpack.c.l.b16 %v33
  %v219 = vunpack.c.h.b16 %v33
  %v220 = vunpack.c.l.b16 %v34
  %v221 = vunpack.c.h.b16 %v34
  %v222 = vunpack.c.l.b16 %v35
  %v223 = vunpack.c.h.b16 %v35
  %v224 = vunpack.c.l.b16 %v36
  %v225 = vunpack.c.h.b16 %v36
  %v226 = vunpack.c.l.b16 %v37
  %v227 = vunpack.c.h.b16 %v37
  %v228 = vunpack.c.l.b16 %v38
  %v229 = vunpack.c.h.b16 %v38
  %v230 = vunpack.c.l.b16 %v39
  %v231 = vunpack.c.h.b16 %v39
  %v232 = vunpack.c.l.b16 %v40
  %v233 = vunpack.c.h.b16 %v40
  %v234 = vunpack.c.l.b16 %v41
  %v235 = vunpack.c.h.b16 %v41
  %v236 = vunpack.c.l.b16 %v42
  %v237 = vunpack.c.h.b16 %v42
  %v238 = vunpack.c.l.b16 %v43
  %v239 = vunpack.c.h.b16 %v43
  %v240 = vunpack.c.l.b16 %v44
  %v241 = vunpack.c.h.b16 %v44
  %v242 = vunpack.c.l.b16 %v45
  %v243 = vunpack.c.h.b16 %v45
  %v244 = vunpack.c.l.b16 %v46
  %v245 = vunpack.c.h.b16 %v46
  %v246 = vunpack.c.l.b16 %v47
  %v247 = vunpack.c.h.b16 %v47
  %v248 = vunpack.c.l.b16 %v48
  %v249 = vunpack.c.h.b16 %v48
  %v250 = vunpack.c.l.b16 %v49
  %v251 = vunpack.c.h.b16 %v49
  %v252 = vunpack.c.l.b16 %v50
  %v253 = vunpack.c.h.b16 %v50
  %v254 = vunpack.c.l.b16 %v51
  %v255 = vunpack.c.h.b16 %v51
  %v256 = vunpack.c.l.b16 %v52
  %v257 = vunpack.c.h.b16 %v52
  %v258 = vunpack.c.l.b16 %v53
  %v259 = vunpack.c.h.b16 %v53
  %v260 = vunpack.c.l.b16 %v54
  %v261 = vunpack.c.h.b16 %v54
  %v262 = vunpack.c.l.b16 %v55
  %v263 = vunpack.c.h.b16 %v55
  %v264 = vunpack.c.l.b16 %v56
  %v265 = vunpack.c.h.b16 %v56
  %v266 = vunpack.c.l.b16 %v57
  %v267 = vunpack.c.h.b16 %v57
  %v268 = vunpack.c.l.b16 %v58
  %v269 = vunpack.c.h.b16 %v58
  %v270 = vunpack.c.l.b16 %v59
  %v271 = vunpack.c.h.b16 %v59
  %v272 = vunpack.c.l.b16 %v60
  %v273 = vunpack.c.h.b16 %v60
  %v274 = vunpack.c.l.b16 %v61
  %v275 = vunpack.c.h.b16 %v61
  %v276 = vunpack.c.l.b16 %v62
  %v277 = vunpack.c.h.b16 %v62
  %v278 = vunpack.c.l.b16 %v63
  %v279 = vunpack.c.h.b16 %v63
  %v280 = vunpack.c.l.b16 %v64
  %v281 = vunpack.c.h.b16 %v64
  %v282 = vunpack.c.l.b16 %v65
  %v283 = vunpack.c.h.b16 %v65
  %v284 = vunpack.c.l.b16 %v66
  %v285 = vunpack.c.h.b16 %v66
  %v286 = vunpack.c.l.b16 %v67
  %v287 = vunpack.c.h.b16 %v67
  %v288 = vunpack.c.l.b16 %v68
  %v289 = vunpack.c.h.b16 %v68
  %v290 = vunpack.c.l.b16 %v69
  %v291 = vunpack.c.h.b16 %v69
  %v292 = vunpack.c.l.b16 %v70
  %v293 = vunpack.c.h.b16 %v70
  %v294 = vunpack.c.l.b16 %v71
  %v295 = vunpack.c.h.b16 %v71
  %v296 = vunpack.c.l.b16 %v72
  %v297 = vunpack.c.h.b16 %v72
  %v298 = vunpack.c.l.b16 %v73
  %v299 = vunpack.c.h.b16 %v73
  %v300 = vunpack.c.l.b16 %v74
  %v301 = vunpack.c.h.b16 %v74
  %v302 = vunpack.c.l.b16 %v75
  %v303 = vunpack.c.h.b16 %v75
  %v304 = vunpack.c.l.b16 %v76
  %v305 = vunpack.c.h.b16 %v76
  %v306 = vunpack.c.l.b16 %v77
  %v307 = vunpack.c.h.b16 %v77
  %v308 = vunpack.c.l.b16 %v78
  %v309 = vunpack.c.h.b16 %v78
  %v310 = vunpack.c.l.b16 %v79
  %v311 = vunpack.c.h.b16 %v79
  %v312 = vunpack.c.l.b16 %v80
  %v313 = vunpack.c.h.b16 %v80
  %v314 = vunpack.c.l.b16 %v81
  %v315 = vunpack.c.h.b16 %v81
  %v316 = vunpack.c.l.b16 %v82
  %v317 = vunpack.c.h.b16 %v82
  %v318 = vunpack.c.l.b16 %v83
  %v319 = vunpack.c.h.b16 %v83
  %v320 = vunpack.c.l.b16 %v84
  %v321 = vunpack.c.h.b16 %v84
  %v322 = vunpack.c.l.b16 %v85
  %v323 = vunpack.c.h.b16 %v85
  %v324 = vunpack.c.l.b16 %v86
  %v325 = vunpack.c.h.b16 %v86
  %v326 = vunpack.c.l.b16 %v87
  %v327 = vunpack.c.h.b16 %v87
  %v328 = vunpack.c.l.b16 %v88
  %v329 = vunpack.c.h.b16 %v88
  %v330 = vunpack.c.l.b16 %v89
  %v331 = vunpack.c.h.b16 %v89
  %v332 = vunpack.c.l.b16 %v90
  %v333 = vunpack.c.h.b16 %v90
  %v334 = vpack.c.b16 %v194, %v190
  %v335 = vpack.c.b16 %v195, %v191
  %v336 = vpack.c.b16 %v196, %v192
  %v337 = vpack.c.b16 %v197, %v193
  %v338 = vpack.c.b16 %v202, %v198
  %v339 = vpack.c.b16 %v203, %v199
  %v340 = vpack.c.b16 %v204, %v200
  %v341 = vpack.c.b16 %v205, %v201
  %v342 = vpack.c.b16 %v210, %v206
  %v343 = vpack.c.b16 %v211, %v207
  %v344 = vpack.c.b16 %v212, %v208
  %v345 = vpack.c.b16 %v213, %v209
  %v346 = vpack.c.b16 %v218, %v214
  %v347 = vpack.c.b16 %v219, %v215
  %v348 = vpack.c.b16 %v220, %v216
  %v349 = vpack.c.b16 %v221, %v217
  %v350 = vpack.c.b16 %v226, %v222
  %v351 = vpack.c.b16 %v227, %v223
  %v352 = vpack.c.b16 %v228, %v224
  %v353 = vpack.c.b16 %v229, %v225
  %v354 = vpack.c.b16 %v234, %v230
  %v355 = vpack.c.b16 %v235, %v231
  %v356 = vpack.c.b16 %v236, %v232
  %v357 = vpack.c.b16 %v237, %v233
  %v358 = vpack.c.b16 %v242, %v238
  %v359 = vpack.c.b16 %v243, %v239
  %v360 = vpack.c.b16 %v244, %v240
  %v361 = vpack.c.b16 %v245, %v241
  %v362 = vpack.c.b16 %v250, %v246
  %v363 = vpack.c.b16 %v251, %v247
  %v364 = vpack.c.b16 %v252, %v248
  %v365 = vpack.c.b16 %v253, %v249
  %v366 = vpack.c.b16 %v258, %v254
  %v367 = vpack.c.b16 %v259, %v255
  %v368 = vpack.c.b16 %v260, %v256
  %v369 = vpack.c.b16 %v261, %v257
  %v370 = vpack.c.b16 %v266, %v262
  %v371 = vpack.c.b16 %v267, %v263
  %v372 = vpack.c.b16 %v268, %v264
  %v373 = vpack.c.b16 %v269, %v265
  %v374 = vpack.c.b16 %v274, %v270
  %v375 = vpack.c.b16 %v275, %v271
  %v376 = vpack.c.b16 %v276, %v272
  %v377 = vpack.c.b16 %v277, %v273
  %v378 = vpack.c.b16 %v282, %v278
  %v379 = vpack.c.b16 %v283, %v279
  %v380 = vpack.c.b16 %v284, %v280
  %v381 = vpack.c.b16 %v285, %v281
  %v382 = vpack.c.b16 %v290, %v286
  %v383 = vpack.c.b16 %v291, %v287
  %v384 = vpack.c.b16 %v292, %v288
  %v385 = vpack.c.b16 %v293, %v289
  %v386 = vpack.c.b16 %v298, %v294
  %v387 = vpack.c.b16 %v299, %v295
  %v388 = vpack.c.b16 %v300, %v296
  %v389 = vpack.c.b16 %v301, %v297
  %v390 = vpack.c.b16 %v306, %v302
  %v391 = vpack.c.b16 %v307, %v303
  %v392 = vpack.c.b16 %v308, %v304
  %v393 = vpack.c.b16 %v309, %v305
  %v394 = vpack.c.b16 %v314, %v310
  %v395 = vpack.c.b16 %v315, %v311
  %v396 = vpack.c.b16 %v316, %v312
  %v397 = vpack.c.b16 %v317, %v313
  %v398 = vpack.c.b16 %v322, %v318
  %v399 = vpack.c.b16 %v323, %v319
  %v400 = vpack.c.b16 %v324, %v320
  %v401 = vpack.c.b16 %v325, %v321
  %v402 = vpack.c.b16 %v330, %v326
  %v403 = vpack.c.b16 %v331, %v327
  %v404 = vpack.c.b16 %v332, %v328
  %v405 = vpack.c.b16 %v333, %v329
  %vm478 = vcmask 261120
  %v480 = vsel %vm478, %v115, 0
  %482 = vmatprep.subr.bf16.mxu0 %v335
  %483 = vmatpush1.bf16.msra.mxu0 %v334
  %484 = vmatprep.subr.bf16.mxu0 %v339
  %485 = vmatpush1.bf16.msra.mxu0 %v338
  %486 = vmatprep.subr.bf16.mxu0 %v343
  %487 = vmatpush1.bf16.msra.mxu0 %v342
  %488 = vmatprep.subr.bf16.mxu0 %v347
  %489 = vmatpush1.bf16.msra.mxu0 %v346
  %490 = vmatprep.subr.bf16.mxu0 %v351
  %491 = vmatpush1.bf16.msra.mxu0 %v350
  %492 = vmatprep.subr.bf16.mxu0 %v355
  %493 = vmatpush1.bf16.msra.mxu0 %v354
  %494 = vmatprep.subr.bf16.mxu0 %v359
  %495 = vmatpush1.bf16.msra.mxu0 %v358
  %496 = vmatprep.subr.bf16.mxu0 %v363
  %497 = vmatpush1.bf16.msra.mxu0 %v362
  %498 = vmatprep.subr.bf16.mxu0 %v367
  %499 = vmatpush1.bf16.msra.mxu0 %v366
  %500 = vmatprep.subr.bf16.mxu0 %v371
  %501 = vmatpush1.bf16.msra.mxu0 %v370
  %502 = vmatprep.subr.bf16.mxu0 %v375
  %503 = vmatpush1.bf16.msra.mxu0 %v374
  %504 = vmatprep.subr.bf16.mxu0 %v379
  %505 = vmatpush1.bf16.msra.mxu0 %v378
  %506 = vmatprep.subr.bf16.mxu0 %v383
  %507 = vmatpush1.bf16.msra.mxu0 %v382
  %508 = vmatprep.subr.bf16.mxu0 %v387
  %509 = vmatpush1.bf16.msra.mxu0 %v386
  %510 = vmatprep.subr.bf16.mxu0 %v391
  %511 = vmatpush1.bf16.msra.mxu0 %v390
  %512 = vmatprep.subr.bf16.mxu0 %v395
  %513 = vmatpush1.bf16.msra.mxu0 %v394
  %514 = vmatprep.mubr.bf16.mxu0 %v114
  %515 = vmatmul.mubr.bf16.gmra.mrb[0].mxu0 %v113
  %v516 = vpop.f32.mrb[0].mxu0
  %v517 = vadd.f32 %v96, %v516
  %v518 = vpop.f32.mrb[0].mxu0
  %v519 = vadd.f32 %v96, %v518
  %v520 = vpop.f32.mrb[0].mxu0
  %v521 = vadd.f32 %v101, %v520
  %v522 = vpop.f32.mrb[0].mxu0
  %v523 = vadd.f32 %v101, %v522
  %524 = vdwg.mxu0
  %525 = vmatprep.subr.bf16.mxu0 %v399
  %526 = vmatpush1.bf16.msra.mxu0 %v398
  %527 = vmatprep.subr.bf16.mxu0 %v403
  %528 = vmatpush1.bf16.msra.mxu0 %v402
  %529 = vmatprep.subr.bf16.mxu0 0
  %530 = vmatpush1.bf16.msra.mxu0 0
  %531 = vmatprep.subr.bf16.mxu0 0
  %532 = vmatpush1.bf16.msra.mxu0 0
  %533 = vmatprep.subr.bf16.mxu0 0
  %534 = vmatpush1.bf16.msra.mxu0 0
  %535 = vmatprep.subr.bf16.mxu0 0
  %536 = vmatpush1.bf16.msra.mxu0 0
  %537 = vmatprep.subr.bf16.mxu0 0
  %538 = vmatpush1.bf16.msra.mxu0 0
  %539 = vmatprep.subr.bf16.mxu0 0
  %540 = vmatpush1.bf16.msra.mxu0 0
  %541 = vmatprep.subr.bf16.mxu0 0
  %542 = vmatpush1.bf16.msra.mxu0 0
  %543 = vmatprep.subr.bf16.mxu0 0
  %544 = vmatpush1.bf16.msra.mxu0 0
  %545 = vmatprep.subr.bf16.mxu0 0
  %546 = vmatpush1.bf16.msra.mxu0 0
  %547 = vmatprep.subr.bf16.mxu0 0
  %548 = vmatpush1.bf16.msra.mxu0 0
  %549 = vmatprep.subr.bf16.mxu0 0
  %550 = vmatpush1.bf16.msra.mxu0 0
  %551 = vmatprep.subr.bf16.mxu0 0
  %552 = vmatpush1.bf16.msra.mxu0 0
  %553 = vmatprep.subr.bf16.mxu0 0
  %554 = vmatpush1.bf16.msra.mxu0 0
  %555 = vmatprep.subr.bf16.mxu0 0
  %556 = vmatpush1.bf16.msra.mxu0 0
  %557 = vmatprep.mubr.bf16.mxu0 0
  %558 = vmatmul.mubr.bf16.gmra.mrb[0].mxu0 %v480
  %v559 = vpop.f32.mrb[0].mxu0
  %v560 = vadd.f32 %v517, %v559
  %v561 = vpop.f32.mrb[0].mxu0
  %v562 = vadd.f32 %v519, %v561
  %v563 = vpop.f32.mrb[0].mxu0
  %v564 = vadd.f32 %v521, %v563
  %v565 = vpop.f32.mrb[0].mxu0
  %v566 = vadd.f32 %v523, %v565
  %567 = vdwg.mxu0
  %568 = vmatprep.subr.bf16.mxu0 %v337
  %569 = vmatpush1.bf16.msra.mxu0 %v336
  %570 = vmatprep.subr.bf16.mxu0 %v341
  %571 = vmatpush1.bf16.msra.mxu0 %v340
  %572 = vmatprep.subr.bf16.mxu0 %v345
  %573 = vmatpush1.bf16.msra.mxu0 %v344
  %574 = vmatprep.subr.bf16.mxu0 %v349
  %575 = vmatpush1.bf16.msra.mxu0 %v348
  %576 = vmatprep.subr.bf16.mxu0 %v353
  %577 = vmatpush1.bf16.msra.mxu0 %v352
  %578 = vmatprep.subr.bf16.mxu0 %v357
  %579 = vmatpush1.bf16.msra.mxu0 %v356
  %580 = vmatprep.subr.bf16.mxu0 %v361
  %581 = vmatpush1.bf16.msra.mxu0 %v360
  %582 = vmatprep.subr.bf16.mxu0 %v365
  %583 = vmatpush1.bf16.msra.mxu0 %v364
  %584 = vmatprep.subr.bf16.mxu0 %v369
  %585 = vmatpush1.bf16.msra.mxu0 %v368
  %586 = vmatprep.subr.bf16.mxu0 %v373
  %587 = vmatpush1.bf16.msra.mxu0 %v372
  %588 = vmatprep.subr.bf16.mxu0 %v377
  %589 = vmatpush1.bf16.msra.mxu0 %v376
  %590 = vmatprep.subr.bf16.mxu0 %v381
  %591 = vmatpush1.bf16.msra.mxu0 %v380
  %592 = vmatprep.subr.bf16.mxu0 %v385
  %593 = vmatpush1.bf16.msra.mxu0 %v384
  %594 = vmatprep.subr.bf16.mxu0 %v389
  %595 = vmatpush1.bf16.msra.mxu0 %v388
  %596 = vmatprep.subr.bf16.mxu0 %v393
  %597 = vmatpush1.bf16.msra.mxu0 %v392
  %598 = vmatprep.subr.bf16.mxu0 %v397
  %599 = vmatpush1.bf16.msra.mxu0 %v396
  %600 = vmatprep.mubr.bf16.mxu0 %v114
  %601 = vmatmul.mubr.bf16.gmra.mrb[0].mxu0 %v113
  %v602 = vpop.f32.mrb[0].mxu0
  %v603 = vadd.f32 %v96, %v602
  %v604 = vpop.f32.mrb[0].mxu0
  %v605 = vadd.f32 %v96, %v604
  %v606 = vpop.f32.mrb[0].mxu0
  %v607 = vadd.f32 %v101, %v606
  %v608 = vpop.f32.mrb[0].mxu0
  %v609 = vadd.f32 %v101, %v608
  %610 = vdwg.mxu0
  %611 = vmatprep.subr.bf16.mxu0 %v401
  %612 = vmatpush1.bf16.msra.mxu0 %v400
  %613 = vmatprep.subr.bf16.mxu0 %v405
  %614 = vmatpush1.bf16.msra.mxu0 %v404
  %615 = vmatprep.subr.bf16.mxu0 0
  %616 = vmatpush1.bf16.msra.mxu0 0
  %617 = vmatprep.subr.bf16.mxu0 0
  %618 = vmatpush1.bf16.msra.mxu0 0
  %619 = vmatprep.subr.bf16.mxu0 0
  %620 = vmatpush1.bf16.msra.mxu0 0
  %621 = vmatprep.subr.bf16.mxu0 0
  %622 = vmatpush1.bf16.msra.mxu0 0
  %623 = vmatprep.subr.bf16.mxu0 0
  %624 = vmatpush1.bf16.msra.mxu0 0
  %625 = vmatprep.subr.bf16.mxu0 0
  %626 = vmatpush1.bf16.msra.mxu0 0
  %627 = vmatprep.subr.bf16.mxu0 0
  %628 = vmatpush1.bf16.msra.mxu0 0
  %629 = vmatprep.subr.bf16.mxu0 0
  %630 = vmatpush1.bf16.msra.mxu0 0
  %631 = vmatprep.subr.bf16.mxu0 0
  %632 = vmatpush1.bf16.msra.mxu0 0
  %633 = vmatprep.subr.bf16.mxu0 0
  %634 = vmatpush1.bf16.msra.mxu0 0
  %635 = vmatprep.subr.bf16.mxu0 0
  %636 = vmatpush1.bf16.msra.mxu0 0
  %637 = vmatprep.subr.bf16.mxu0 0
  %638 = vmatpush1.bf16.msra.mxu0 0
  %639 = vmatprep.subr.bf16.mxu0 0
  %640 = vmatpush1.bf16.msra.mxu0 0
  %641 = vmatprep.subr.bf16.mxu0 0
  %642 = vmatpush1.bf16.msra.mxu0 0
  %643 = vmatprep.mubr.bf16.mxu0 0
  %644 = vmatmul.mubr.bf16.gmra.mrb[0].mxu0 %v480
  %v645 = vpop.f32.mrb[0].mxu0
  %v646 = vadd.f32 %v603, %v645
  %v647 = vpop.f32.mrb[0].mxu0
  %v648 = vadd.f32 %v605, %v647
  %v649 = vpop.f32.mrb[0].mxu0
  %v650 = vadd.f32 %v607, %v649
  %v651 = vpop.f32.mrb[0].mxu0
  %v652 = vadd.f32 %v609, %v651
  %653 = vdwg.mxu0
  %v654 = vmax.f32 %v560, 0.0
  %v655 = vmax.f32 %v562, 0.0
  %v656 = vmax.f32 %v646, 0.0
  %v657 = vmax.f32 %v648, 0.0
  %v658 = vmax.f32 %v564, 0.0
  %v659 = vmax.f32 %v566, 0.0
  %v660 = vmax.f32 %v650, 0.0
  %v661 = vmax.f32 %v652, 0.0
  %662 = vst [vmem:[%s3] sm:$0xff] %v654
  %663 = vst [vmem:[%s3 + $0x8] sm:$0xff] %v655
  %664 = vst [vmem:[%s3 + $0x10] sm:$0xff] %v656
  %vm665 = vcmask 64512
  %666 = vst.msk [vmem:[%s3 + $0x18] sm:$0xff] %vm665, %v657
  %667 = vst [vmem:[%s3 + $0x20] sm:$0xff] %v658
  %668 = vst [vmem:[%s3 + $0x28] sm:$0xff] %v659
  %669 = vst [vmem:[%s3 + $0x30] sm:$0xff] %v660
  %670 = vst.msk [vmem:[%s3 + $0x38] sm:$0xff] %vm665, %v661
  // Predicated region
  $region14: #{_lambda_.15} parent=0 // pred_check
    _
  $region15: #{_lambda_.15} parent=0 // pred_check_branch
    %672 = sbr.rel (0) target = $region17
  $region16: #{_lambda_.15} parent=0 // pred_region
    _
  $region17: #{_lambda_.15} parent=0 // pred_fallthru
    _
  // Predicated region
  $region18: #{_lambda_.15} parent=0 // pred_check
    _
  $region19: #{_lambda_.15} parent=0 // pred_check_branch
    %674 = sbr.rel (0) target = $region21
  $region20: #{_lambda_.15} parent=0 // pred_region
    _
  $region21: #{_lambda_.15} parent=0 // pred_fallthru
    _

// kernel: _lambda_.16
$region0: #{_lambda_.16}
  #allocation0 [shape = 'u32[]', space=smem, size = 0x4, offset = 0x4, fixed_abs, tag = 'smem constant byte address 0x4 - core index']
  #allocation1 [shape = 'u32[144,128]{1,0:T(1,128)}', space=vmem, size = 0x12000, scoped, tag = 'internal scratch']
  %s0 = inlined_call_operand.vmem [shape: bf16[32,196], index: 0, kind: input, shape index: {}]
  %s1 = inlined_call_operand.vmem [shape: bf16[196,676], index: 1, kind: input, shape index: {}]
  %s2 = inlined_call_operand.vmem [shape: f32[32,676], index: 2, kind: output, shape index: {}]
  %s3 = sld [smem:[#allocation0]]
  $region18: #{_lambda_.16} parent=0
    _
  %s5 = ssub.s32 1, %s3
  %s6 = scalar_select 0, %s5, %s3
  // Predicated region
  $region2: #{_lambda_.16} parent=0 // pred_check
    _
  $region3: #{_lambda_.16} parent=0 // pred_check_branch
    %8 = sbr.rel (0) target = $region5
  $region4: #{_lambda_.16} parent=0 // pred_region
    _
  $region5: #{_lambda_.16} parent=0 // pred_fallthru
    _
  // Predicated region
  $region6: #{_lambda_.16} parent=0 // pred_check
    _
  $region7: #{_lambda_.16} parent=0 // pred_check_branch
    %10 = sbr.rel (0) target = $region9
  $region8: #{_lambda_.16} parent=0 // pred_region
    _
  $region9: #{_lambda_.16} parent=0 // pred_fallthru
    _
  %v12 = vld [vmem:[%s0] sm:$0xff]
  %v13 = vld [vmem:[%s0 + $0x8] sm:$0xff]
  %v14 = vld [vmem:[%s0 + $0x10] sm:$0xff]
  %v15 = vld [vmem:[%s0 + $0x18] sm:$0xff]
  %v16 = vld [vmem:[%s1] sm:$0xff]
  %v17 = vld [vmem:[%s1 + $0x8] sm:$0xff]
  %v18 = vld [vmem:[%s1 + $0x10] sm:$0xff]
  %v19 = vld [vmem:[%s1 + $0x18] sm:$0xff]
  %v20 = vld [vmem:[%s1 + $0x20] sm:$0xff]
  %v21 = vld [vmem:[%s1 + $0x28] sm:$0xff]
  %v22 = vld [vmem:[%s1 + $0x30] sm:$0xff]
  %v23 = vld [vmem:[%s1 + $0x38] sm:$0xff]
  %v24 = vld [vmem:[%s1 + $0x40] sm:$0xff]
  %v25 = vld [vmem:[%s1 + $0x48] sm:$0xff]
  %v26 = vld [vmem:[%s1 + $0x50] sm:$0xff]
  %v27 = vld [vmem:[%s1 + $0x58] sm:$0xff]
  %v28 = vld [vmem:[%s1 + $0x60] sm:$0xff]
  %v29 = vld [vmem:[%s1 + $0x68] sm:$0xff]
  %v30 = vld [vmem:[%s1 + $0x70] sm:$0xff]
  %v31 = vld [vmem:[%s1 + $0x78] sm:$0xff]
  %v32 = vld [vmem:[%s1 + $0x80] sm:$0xff]
  %v33 = vld [vmem:[%s1 + $0x88] sm:$0xff]
  %v34 = vld [vmem:[%s1 + $0x90] sm:$0xff]
  %v35 = vld [vmem:[%s1 + $0x98] sm:$0xff]
  %v36 = vld [vmem:[%s1 + $0xa0] sm:$0xff]
  %v37 = vld [vmem:[%s1 + $0xa8] sm:$0xff]
  %v38 = vld [vmem:[%s1 + $0xb0] sm:$0xff]
  %v39 = vld [vmem:[%s1 + $0xb8] sm:$0xff]
  %v40 = vld [vmem:[%s1 + $0xc0] sm:$0xff]
  %v41 = vld [vmem:[%s1 + $0xc8] sm:$0xff]
  %v42 = vld [vmem:[%s1 + $0xd0] sm:$0xff]
  %v43 = vld [vmem:[%s1 + $0xd8] sm:$0xff]
  %v44 = vld [vmem:[%s1 + $0xe0] sm:$0xff]
  %v45 = vld [vmem:[%s1 + $0xe8] sm:$0xff]
  %v46 = vld [vmem:[%s1 + $0xf0] sm:$0xff]
  %v47 = vld [vmem:[%s1 + $0xf8] sm:$0xff]
  %v48 = vld [vmem:[%s1 + $0x100] sm:$0xff]
  %v49 = vld [vmem:[%s1 + $0x108] sm:$0xff]
  %v50 = vld [vmem:[%s1 + $0x110] sm:$0xff]
  %v51 = vld [vmem:[%s1 + $0x118] sm:$0xff]
  %v52 = vld [vmem:[%s1 + $0x120] sm:$0xff]
  %v53 = vld [vmem:[%s1 + $0x128] sm:$0xff]
  %v54 = vld [vmem:[%s1 + $0x130] sm:$0xff]
  %v55 = vld [vmem:[%s1 + $0x138] sm:$0xff]
  %v56 = vld [vmem:[%s1 + $0x140] sm:$0xff]
  %v57 = vld [vmem:[%s1 + $0x148] sm:$0xff]
  %v58 = vld [vmem:[%s1 + $0x150] sm:$0xff]
  %v59 = vld [vmem:[%s1 + $0x158] sm:$0xff]
  %v60 = vld [vmem:[%s1 + $0x160] sm:$0xff]
  %v61 = vld [vmem:[%s1 + $0x168] sm:$0xff]
  %v62 = vld [vmem:[%s1 + $0x170] sm:$0xff]
  %v63 = vld [vmem:[%s1 + $0x178] sm:$0xff]
  %v64 = vld [vmem:[%s1 + $0x180] sm:$0xff]
  %v65 = vld [vmem:[%s1 + $0x188] sm:$0xff]
  %v66 = vld [vmem:[%s1 + $0x190] sm:$0xff]
  %v67 = vld [vmem:[%s1 + $0x198] sm:$0xff]
  %v68 = vld [vmem:[%s1 + $0x1a0] sm:$0xff]
  %v69 = vld [vmem:[%s1 + $0x1a8] sm:$0xff]
  %v70 = vld [vmem:[%s1 + $0x1b0] sm:$0xff]
  %v71 = vld [vmem:[%s1 + $0x1b8] sm:$0xff]
  %v72 = vld [vmem:[%s1 + $0x1c0] sm:$0xff]
  %v73 = vld [vmem:[%s1 + $0x1c8] sm:$0xff]
  %v74 = vld [vmem:[%s1 + $0x1d0] sm:$0xff]
  %v75 = vld [vmem:[%s1 + $0x1d8] sm:$0xff]
  %v76 = vld [vmem:[%s1 + $0x1e0] sm:$0xff]
  %v77 = vld [vmem:[%s1 + $0x1e8] sm:$0xff]
  %v78 = vld [vmem:[%s1 + $0x1f0] sm:$0xff]
  %v79 = vld [vmem:[%s1 + $0x1f8] sm:$0xff]
  %v80 = vld [vmem:[%s1 + $0x200] sm:$0xff]
  %v81 = vld [vmem:[%s1 + $0x208] sm:$0xff]
  %v82 = vld [vmem:[%s1 + $0x210] sm:$0xff]
  %v83 = vld [vmem:[%s1 + $0x218] sm:$0xff]
  %v84 = vld [vmem:[%s1 + $0x220] sm:$0xff]
  %v85 = vld [vmem:[%s1 + $0x228] sm:$0xff]
  %v86 = vld [vmem:[%s1 + $0x230] sm:$0xff]
  %v87 = vld [vmem:[%s1 + $0x238] sm:$0xff]
  %v88 = vld [vmem:[%s1 + $0x240] sm:$0x33]
  %v89 = vld [vmem:[%s1 + $0x248] sm:$0x33]
  %v90 = vld [vmem:[%s1 + $0x250] sm:$0x33]
  %v95 = vunpack.c.l.b16 %v12
  %v96 = vunpack.c.h.b16 %v12
  %v97 = vunpack.c.l.b16 %v13
  %v98 = vunpack.c.h.b16 %v13
  %v99 = vunpack.c.l.b16 %v14
  %v100 = vunpack.c.h.b16 %v14
  %v101 = vunpack.c.l.b16 %v15
  %v102 = vunpack.c.h.b16 %v15
  %v103 = vpack.c.b16 %v97, %v95
  %v104 = vpack.c.b16 %v98, %v96
  %v105 = vpack.c.b16 %v101, %v99
  %v106 = vpack.c.b16 %v102, %v100
  %v184 = vunpack.c.l.b16 %v16
  %v185 = vunpack.c.h.b16 %v16
  %v186 = vunpack.c.l.b16 %v17
  %v187 = vunpack.c.h.b16 %v17
  %v188 = vunpack.c.l.b16 %v18
  %v189 = vunpack.c.h.b16 %v18
  %v190 = vunpack.c.l.b16 %v19
  %v191 = vunpack.c.h.b16 %v19
  %v192 = vunpack.c.l.b16 %v20
  %v193 = vunpack.c.h.b16 %v20
  %v194 = vunpack.c.l.b16 %v21
  %v195 = vunpack.c.h.b16 %v21
  %v196 = vunpack.c.l.b16 %v22
  %v197 = vunpack.c.h.b16 %v22
  %v198 = vunpack.c.l.b16 %v23
  %v199 = vunpack.c.h.b16 %v23
  %v200 = vunpack.c.l.b16 %v24
  %v201 = vunpack.c.h.b16 %v24
  %v202 = vunpack.c.l.b16 %v25
  %v203 = vunpack.c.h.b16 %v25
  %v204 = vunpack.c.l.b16 %v26
  %v205 = vunpack.c.h.b16 %v26
  %v206 = vunpack.c.l.b16 %v27
  %v207 = vunpack.c.h.b16 %v27
  %v208 = vunpack.c.l.b16 %v28
  %v209 = vunpack.c.h.b16 %v28
  %v210 = vunpack.c.l.b16 %v29
  %v211 = vunpack.c.h.b16 %v29
  %v212 = vunpack.c.l.b16 %v30
  %v213 = vunpack.c.h.b16 %v30
  %v214 = vunpack.c.l.b16 %v31
  %v215 = vunpack.c.h.b16 %v31
  %v216 = vunpack.c.l.b16 %v32
  %v217 = vunpack.c.h.b16 %v32
  %v218 = vunpack.c.l.b16 %v33
  %v219 = vunpack.c.h.b16 %v33
  %v220 = vunpack.c.l.b16 %v34
  %v221 = vunpack.c.h.b16 %v34
  %v222 = vunpack.c.l.b16 %v35
  %v223 = vunpack.c.h.b16 %v35
  %v224 = vunpack.c.l.b16 %v36
  %v225 = vunpack.c.h.b16 %v36
  %v226 = vunpack.c.l.b16 %v37
  %v227 = vunpack.c.h.b16 %v37
  %v228 = vunpack.c.l.b16 %v38
  %v229 = vunpack.c.h.b16 %v38
  %v230 = vunpack.c.l.b16 %v39
  %v231 = vunpack.c.h.b16 %v39
  %v232 = vunpack.c.l.b16 %v40
  %v233 = vunpack.c.h.b16 %v40
  %v234 = vunpack.c.l.b16 %v41
  %v235 = vunpack.c.h.b16 %v41
  %v236 = vunpack.c.l.b16 %v42
  %v237 = vunpack.c.h.b16 %v42
  %v238 = vunpack.c.l.b16 %v43
  %v239 = vunpack.c.h.b16 %v43
  %v240 = vunpack.c.l.b16 %v44
  %v241 = vunpack.c.h.b16 %v44
  %v242 = vunpack.c.l.b16 %v45
  %v243 = vunpack.c.h.b16 %v45
  %v244 = vunpack.c.l.b16 %v46
  %v245 = vunpack.c.h.b16 %v46
  %v246 = vunpack.c.l.b16 %v47
  %v247 = vunpack.c.h.b16 %v47
  %v248 = vunpack.c.l.b16 %v48
  %v249 = vunpack.c.h.b16 %v48
  %v250 = vunpack.c.l.b16 %v49
  %v251 = vunpack.c.h.b16 %v49
  %v252 = vunpack.c.l.b16 %v50
  %v253 = vunpack.c.h.b16 %v50
  %v254 = vunpack.c.l.b16 %v51
  %v255 = vunpack.c.h.b16 %v51
  %v256 = vunpack.c.l.b16 %v52
  %v257 = vunpack.c.h.b16 %v52
  %v258 = vunpack.c.l.b16 %v53
  %v259 = vunpack.c.h.b16 %v53
  %v260 = vunpack.c.l.b16 %v54
  %v261 = vunpack.c.h.b16 %v54
  %v262 = vunpack.c.l.b16 %v55
  %v263 = vunpack.c.h.b16 %v55
  %v264 = vunpack.c.l.b16 %v56
  %v265 = vunpack.c.h.b16 %v56
  %v266 = vunpack.c.l.b16 %v57
  %v267 = vunpack.c.h.b16 %v57
  %v268 = vunpack.c.l.b16 %v58
  %v269 = vunpack.c.h.b16 %v58
  %v270 = vunpack.c.l.b16 %v59
  %v271 = vunpack.c.h.b16 %v59
  %v272 = vunpack.c.l.b16 %v60
  %v273 = vunpack.c.h.b16 %v60
  %v274 = vunpack.c.l.b16 %v61
  %v275 = vunpack.c.h.b16 %v61
  %v276 = vunpack.c.l.b16 %v62
  %v277 = vunpack.c.h.b16 %v62
  %v278 = vunpack.c.l.b16 %v63
  %v279 = vunpack.c.h.b16 %v63
  %v280 = vunpack.c.l.b16 %v64
  %v281 = vunpack.c.h.b16 %v64
  %v282 = vunpack.c.l.b16 %v65
  %v283 = vunpack.c.h.b16 %v65
  %v284 = vunpack.c.l.b16 %v66
  %v285 = vunpack.c.h.b16 %v66
  %v286 = vunpack.c.l.b16 %v67
  %v287 = vunpack.c.h.b16 %v67
  %v288 = vunpack.c.l.b16 %v68
  %v289 = vunpack.c.h.b16 %v68
  %v290 = vunpack.c.l.b16 %v69
  %v291 = vunpack.c.h.b16 %v69
  %v292 = vunpack.c.l.b16 %v70
  %v293 = vunpack.c.h.b16 %v70
  %v294 = vunpack.c.l.b16 %v71
  %v295 = vunpack.c.h.b16 %v71
  %v296 = vunpack.c.l.b16 %v72
  %v297 = vunpack.c.h.b16 %v72
  %v298 = vunpack.c.l.b16 %v73
  %v299 = vunpack.c.h.b16 %v73
  %v300 = vunpack.c.l.b16 %v74
  %v301 = vunpack.c.h.b16 %v74
  %v302 = vunpack.c.l.b16 %v75
  %v303 = vunpack.c.h.b16 %v75
  %v304 = vunpack.c.l.b16 %v76
  %v305 = vunpack.c.h.b16 %v76
  %v306 = vunpack.c.l.b16 %v77
  %v307 = vunpack.c.h.b16 %v77
  %v308 = vunpack.c.l.b16 %v78
  %v309 = vunpack.c.h.b16 %v78
  %v310 = vunpack.c.l.b16 %v79
  %v311 = vunpack.c.h.b16 %v79
  %v312 = vunpack.c.l.b16 %v80
  %v313 = vunpack.c.h.b16 %v80
  %v314 = vunpack.c.l.b16 %v81
  %v315 = vunpack.c.h.b16 %v81
  %v316 = vunpack.c.l.b16 %v82
  %v317 = vunpack.c.h.b16 %v82
  %v318 = vunpack.c.l.b16 %v83
  %v319 = vunpack.c.h.b16 %v83
  %v320 = vunpack.c.l.b16 %v84
  %v321 = vunpack.c.h.b16 %v84
  %v322 = vunpack.c.l.b16 %v85
  %v323 = vunpack.c.h.b16 %v85
  %v324 = vunpack.c.l.b16 %v86
  %v325 = vunpack.c.h.b16 %v86
  %v326 = vunpack.c.l.b16 %v87
  %v327 = vunpack.c.h.b16 %v87
  %v328 = vunpack.c.l.b16 %v88
  %v329 = vunpack.c.h.b16 %v88
  %v330 = vunpack.c.l.b16 %v89
  %v331 = vunpack.c.h.b16 %v89
  %v332 = vunpack.c.l.b16 %v90
  %v333 = vunpack.c.h.b16 %v90
  %v334 = vpack.c.b16 %v190, %v184
  %v335 = vpack.c.b16 %v191, %v185
  %v336 = vpack.c.b16 %v192, %v186
  %v337 = vpack.c.b16 %v193, %v187
  %v338 = vpack.c.b16 %v194, %v188
  %v339 = vpack.c.b16 %v195, %v189
  %v340 = vpack.c.b16 %v202, %v196
  %v341 = vpack.c.b16 %v203, %v197
  %v342 = vpack.c.b16 %v204, %v198
  %v343 = vpack.c.b16 %v205, %v199
  %v344 = vpack.c.b16 %v206, %v200
  %v345 = vpack.c.b16 %v207, %v201
  %v346 = vpack.c.b16 %v214, %v208
  %v347 = vpack.c.b16 %v215, %v209
  %v348 = vpack.c.b16 %v216, %v210
  %v349 = vpack.c.b16 %v217, %v211
  %v350 = vpack.c.b16 %v218, %v212
  %v351 = vpack.c.b16 %v219, %v213
  %v352 = vpack.c.b16 %v226, %v220
  %v353 = vpack.c.b16 %v227, %v221
  %v354 = vpack.c.b16 %v228, %v222
  %v355 = vpack.c.b16 %v229, %v223
  %v356 = vpack.c.b16 %v230, %v224
  %v357 = vpack.c.b16 %v231, %v225
  %v358 = vpack.c.b16 %v238, %v232
  %v359 = vpack.c.b16 %v239, %v233
  %v360 = vpack.c.b16 %v240, %v234
  %v361 = vpack.c.b16 %v241, %v235
  %v362 = vpack.c.b16 %v242, %v236
  %v363 = vpack.c.b16 %v243, %v237
  %v364 = vpack.c.b16 %v250, %v244
  %v365 = vpack.c.b16 %v251, %v245
  %v366 = vpack.c.b16 %v252, %v246
  %v367 = vpack.c.b16 %v253, %v247
  %v368 = vpack.c.b16 %v254, %v248
  %v369 = vpack.c.b16 %v255, %v249
  %v370 = vpack.c.b16 %v262, %v256
  %v371 = vpack.c.b16 %v263, %v257
  %v372 = vpack.c.b16 %v264, %v258
  %v373 = vpack.c.b16 %v265, %v259
  %v374 = vpack.c.b16 %v266, %v260
  %v375 = vpack.c.b16 %v267, %v261
  %v376 = vpack.c.b16 %v274, %v268
  %v377 = vpack.c.b16 %v275, %v269
  %v378 = vpack.c.b16 %v276, %v270
  %v379 = vpack.c.b16 %v277, %v271
  %v380 = vpack.c.b16 %v278, %v272
  %v381 = vpack.c.b16 %v279, %v273
  %v382 = vpack.c.b16 %v286, %v280
  %v383 = vpack.c.b16 %v287, %v281
  %v384 = vpack.c.b16 %v288, %v282
  %v385 = vpack.c.b16 %v289, %v283
  %v386 = vpack.c.b16 %v290, %v284
  %v387 = vpack.c.b16 %v291, %v285
  %v388 = vpack.c.b16 %v298, %v292
  %v389 = vpack.c.b16 %v299, %v293
  %v390 = vpack.c.b16 %v300, %v294
  %v391 = vpack.c.b16 %v301, %v295
  %v392 = vpack.c.b16 %v302, %v296
  %v393 = vpack.c.b16 %v303, %v297
  %v394 = vpack.c.b16 %v310, %v304
  %v395 = vpack.c.b16 %v311, %v305
  %v396 = vpack.c.b16 %v312, %v306
  %v397 = vpack.c.b16 %v313, %v307
  %v398 = vpack.c.b16 %v314, %v308
  %v399 = vpack.c.b16 %v315, %v309
  %v400 = vpack.c.b16 %v322, %v316
  %v401 = vpack.c.b16 %v323, %v317
  %v402 = vpack.c.b16 %v324, %v318
  %v403 = vpack.c.b16 %v325, %v319
  %v404 = vpack.c.b16 %v326, %v320
  %v405 = vpack.c.b16 %v327, %v321
  %v406 = vpack.c.b16 %v328, %v328
  %v407 = vpack.c.b16 %v329, %v329
  %v408 = vpack.c.b16 %v330, %v330
  %v409 = vpack.c.b16 %v331, %v331
  %v410 = vpack.c.b16 %v332, %v332
  %v411 = vpack.c.b16 %v333, %v333
  %vm484 = vcmask 556032
  %v486 = vsel %vm484, %v104, 0
  %v489 = vsel %vm484, %v106, 0
  %vm491 = vcmask 1041408
  %v493 = vsel %vm491, %v406, 0
  %v496 = vsel %vm491, %v407, 0
  %v499 = vsel %vm491, %v408, 0
  %v502 = vsel %vm491, %v409, 0
  %v505 = vsel %vm491, %v410, 0
  %v508 = vsel %vm491, %v411, 0
  %510 = vmatprep.subr.bf16.mxu0 %v335
  %511 = vmatpush1.bf16.msra.mxu0 %v334
  %512 = vmatprep.subr.bf16.mxu0 %v341
  %513 = vmatpush1.bf16.msra.mxu0 %v340
  %514 = vmatprep.subr.bf16.mxu0 %v347
  %515 = vmatpush1.bf16.msra.mxu0 %v346
  %516 = vmatprep.subr.bf16.mxu0 %v353
  %517 = vmatpush1.bf16.msra.mxu0 %v352
  %518 = vmatprep.subr.bf16.mxu0 %v359
  %519 = vmatpush1.bf16.msra.mxu0 %v358
  %520 = vmatprep.subr.bf16.mxu0 %v365
  %521 = vmatpush1.bf16.msra.mxu0 %v364
  %522 = vmatprep.subr.bf16.mxu0 %v371
  %523 = vmatpush1.bf16.msra.mxu0 %v370
  %524 = vmatprep.subr.bf16.mxu0 %v377
  %525 = vmatpush1.bf16.msra.mxu0 %v376
  %526 = vmatprep.subr.bf16.mxu0 %v383
  %527 = vmatpush1.bf16.msra.mxu0 %v382
  %528 = vmatprep.subr.bf16.mxu0 %v389
  %529 = vmatpush1.bf16.msra.mxu0 %v388
  %530 = vmatprep.subr.bf16.mxu0 %v395
  %531 = vmatpush1.bf16.msra.mxu0 %v394
  %532 = vmatprep.subr.bf16.mxu0 %v401
  %533 = vmatpush1.bf16.msra.mxu0 %v400
  %534 = vmatprep.subr.bf16.mxu0 %v496
  %535 = vmatpush1.bf16.msra.mxu0 %v493
  %536 = vmatprep.subr.bf16.mxu0 0
  %537 = vmatpush1.bf16.msra.mxu0 0
  %538 = vmatprep.subr.bf16.mxu0 0
  %539 = vmatpush1.bf16.msra.mxu0 0
  %540 = vmatprep.subr.bf16.mxu0 0
  %541 = vmatpush1.bf16.msra.mxu0 0
  %542 = vmatprep.mubr.bf16.mxu0 %v486
  %543 = vmatmul.mubr.bf16.gmra.mrb[0].mxu0 %v103
  %v544 = vpop.f32.mrb[0].mxu0
  %v545 = vadd.f32 0.0, %v544
  %v546 = vpop.f32.mrb[0].mxu0
  %v547 = vadd.f32 0.0, %v546
  %v548 = vpop.f32.mrb[0].mxu0
  %v549 = vadd.f32 0.0, %v548
  %v550 = vpop.f32.mrb[0].mxu0
  %v551 = vadd.f32 0.0, %v550
  %552 = vmatprep.mubr.bf16.mxu0 %v489
  %553 = vmatmul.mubr.bf16.gmra.mrb[0].mxu0 %v105
  %v554 = vpop.f32.mrb[0].mxu0
  %v555 = vadd.f32 0.0, %v554
  %v556 = vpop.f32.mrb[0].mxu0
  %v557 = vadd.f32 0.0, %v556
  %v558 = vpop.f32.mrb[0].mxu0
  %v559 = vadd.f32 0.0, %v558
  %v560 = vpop.f32.mrb[0].mxu0
  %v561 = vadd.f32 0.0, %v560
  %562 = vdwg.mxu0
  %563 = vmatprep.subr.bf16.mxu0 %v337
  %564 = vmatpush1.bf16.msra.mxu0 %v336
  %565 = vmatprep.subr.bf16.mxu0 %v343
  %566 = vmatpush1.bf16.msra.mxu0 %v342
  %567 = vmatprep.subr.bf16.mxu0 %v349
  %568 = vmatpush1.bf16.msra.mxu0 %v348
  %569 = vmatprep.subr.bf16.mxu0 %v355
  %570 = vmatpush1.bf16.msra.mxu0 %v354
  %571 = vmatprep.subr.bf16.mxu0 %v361
  %572 = vmatpush1.bf16.msra.mxu0 %v360
  %573 = vmatprep.subr.bf16.mxu0 %v367
  %574 = vmatpush1.bf16.msra.mxu0 %v366
  %575 = vmatprep.subr.bf16.mxu0 %v373
  %576 = vmatpush1.bf16.msra.mxu0 %v372
  %577 = vmatprep.subr.bf16.mxu0 %v379
  %578 = vmatpush1.bf16.msra.mxu0 %v378
  %579 = vmatprep.subr.bf16.mxu0 %v385
  %580 = vmatpush1.bf16.msra.mxu0 %v384
  %581 = vmatprep.subr.bf16.mxu0 %v391
  %582 = vmatpush1.bf16.msra.mxu0 %v390
  %583 = vmatprep.subr.bf16.mxu0 %v397
  %584 = vmatpush1.bf16.msra.mxu0 %v396
  %585 = vmatprep.subr.bf16.mxu0 %v403
  %586 = vmatpush1.bf16.msra.mxu0 %v402
  %587 = vmatprep.subr.bf16.mxu0 %v502
  %588 = vmatpush1.bf16.msra.mxu0 %v499
  %589 = vmatprep.subr.bf16.mxu0 0
  %590 = vmatpush1.bf16.msra.mxu0 0
  %591 = vmatprep.subr.bf16.mxu0 0
  %592 = vmatpush1.bf16.msra.mxu0 0
  %593 = vmatprep.subr.bf16.mxu0 0
  %594 = vmatpush1.bf16.msra.mxu0 0
  %595 = vmatprep.mubr.bf16.mxu0 %v486
  %596 = vmatmul.mubr.bf16.gmra.mrb[0].mxu0 %v103
  %v597 = vpop.f32.mrb[0].mxu0
  %v598 = vadd.f32 0.0, %v597
  %v599 = vpop.f32.mrb[0].mxu0
  %v600 = vadd.f32 0.0, %v599
  %v601 = vpop.f32.mrb[0].mxu0
  %v602 = vadd.f32 0.0, %v601
  %v603 = vpop.f32.mrb[0].mxu0
  %v604 = vadd.f32 0.0, %v603
  %605 = vmatprep.mubr.bf16.mxu0 %v489
  %606 = vmatmul.mubr.bf16.gmra.mrb[0].mxu0 %v105
  %v607 = vpop.f32.mrb[0].mxu0
  %v608 = vadd.f32 0.0, %v607
  %v609 = vpop.f32.mrb[0].mxu0
  %v610 = vadd.f32 0.0, %v609
  %v611 = vpop.f32.mrb[0].mxu0
  %v612 = vadd.f32 0.0, %v611
  %v613 = vpop.f32.mrb[0].mxu0
  %v614 = vadd.f32 0.0, %v613
  %615 = vdwg.mxu0
  %616 = vmatprep.subr.bf16.mxu0 %v339
  %617 = vmatpush1.bf16.msra.mxu0 %v338
  %618 = vmatprep.subr.bf16.mxu0 %v345
  %619 = vmatpush1.bf16.msra.mxu0 %v344
  %620 = vmatprep.subr.bf16.mxu0 %v351
  %621 = vmatpush1.bf16.msra.mxu0 %v350
  %622 = vmatprep.subr.bf16.mxu0 %v357
  %623 = vmatpush1.bf16.msra.mxu0 %v356
  %624 = vmatprep.subr.bf16.mxu0 %v363
  %625 = vmatpush1.bf16.msra.mxu0 %v362
  %626 = vmatprep.subr.bf16.mxu0 %v369
  %627 = vmatpush1.bf16.msra.mxu0 %v368
  %628 = vmatprep.subr.bf16.mxu0 %v375
  %629 = vmatpush1.bf16.msra.mxu0 %v374
  %630 = vmatprep.subr.bf16.mxu0 %v381
  %631 = vmatpush1.bf16.msra.mxu0 %v380
  %632 = vmatprep.subr.bf16.mxu0 %v387
  %633 = vmatpush1.bf16.msra.mxu0 %v386
  %634 = vmatprep.subr.bf16.mxu0 %v393
  %635 = vmatpush1.bf16.msra.mxu0 %v392
  %636 = vmatprep.subr.bf16.mxu0 %v399
  %637 = vmatpush1.bf16.msra.mxu0 %v398
  %638 = vmatprep.subr.bf16.mxu0 %v405
  %639 = vmatpush1.bf16.msra.mxu0 %v404
  %640 = vmatprep.subr.bf16.mxu0 %v508
  %641 = vmatpush1.bf16.msra.mxu0 %v505
  %642 = vmatprep.subr.bf16.mxu0 0
  %643 = vmatpush1.bf16.msra.mxu0 0
  %644 = vmatprep.subr.bf16.mxu0 0
  %645 = vmatpush1.bf16.msra.mxu0 0
  %646 = vmatprep.subr.bf16.mxu0 0
  %647 = vmatpush1.bf16.msra.mxu0 0
  %648 = vmatprep.mubr.bf16.mxu0 %v486
  %649 = vmatmul.mubr.bf16.gmra.mrb[0].mxu0 %v103
  %v650 = vpop.f32.mrb[0].mxu0
  %v651 = vadd.f32 0.0, %v650
  %v652 = vpop.f32.mrb[0].mxu0
  %v653 = vadd.f32 0.0, %v652
  %v654 = vpop.f32.mrb[0].mxu0
  %v655 = vadd.f32 0.0, %v654
  %v656 = vpop.f32.mrb[0].mxu0
  %v657 = vadd.f32 0.0, %v656
  %658 = vmatprep.mubr.bf16.mxu0 %v489
  %659 = vmatmul.mubr.bf16.gmra.mrb[0].mxu0 %v105
  %v660 = vpop.f32.mrb[0].mxu0
  %v661 = vadd.f32 0.0, %v660
  %v662 = vpop.f32.mrb[0].mxu0
  %v663 = vadd.f32 0.0, %v662
  %v664 = vpop.f32.mrb[0].mxu0
  %v665 = vadd.f32 0.0, %v664
  %v666 = vpop.f32.mrb[0].mxu0
  %v667 = vadd.f32 0.0, %v666
  %668 = vdwg.mxu0
  %669 = vst [vmem:[%s2] sm:$0xff] %v545
  %670 = vst [vmem:[%s2 + $0x8] sm:$0xff] %v547
  %671 = vst [vmem:[%s2 + $0x10] sm:$0xff] %v598
  %672 = vst [vmem:[%s2 + $0x18] sm:$0xff] %v600
  %673 = vst [vmem:[%s2 + $0x20] sm:$0xff] %v651
  %vm674 = vcmask 293888
  %675 = vst.msk [vmem:[%s2 + $0x28] sm:$0xff] %vm674, %v653
  %676 = vst [vmem:[%s2 + $0x30] sm:$0xff] %v549
  %677 = vst [vmem:[%s2 + $0x38] sm:$0xff] %v551
  %678 = vst [vmem:[%s2 + $0x40] sm:$0xff] %v602
  %679 = vst [vmem:[%s2 + $0x48] sm:$0xff] %v604
  %680 = vst [vmem:[%s2 + $0x50] sm:$0xff] %v655
  %681 = vst.msk [vmem:[%s2 + $0x58] sm:$0xff] %vm674, %v657
  %682 = vst [vmem:[%s2 + $0x60] sm:$0xff] %v555
  %683 = vst [vmem:[%s2 + $0x68] sm:$0xff] %v557
  %684 = vst [vmem:[%s2 + $0x70] sm:$0xff] %v608
  %685 = vst [vmem:[%s2 + $0x78] sm:$0xff] %v610
  %686 = vst [vmem:[%s2 + $0x80] sm:$0xff] %v661
  %687 = vst.msk [vmem:[%s2 + $0x88] sm:$0xff] %vm674, %v663
  %688 = vst [vmem:[%s2 + $0x90] sm:$0xff] %v559
  %689 = vst [vmem:[%s2 + $0x98] sm:$0xff] %v561
  %690 = vst [vmem:[%s2 + $0xa0] sm:$0xff] %v612
  %691 = vst [vmem:[%s2 + $0xa8] sm:$0xff] %v614
  %692 = vst [vmem:[%s2 + $0xb0] sm:$0xff] %v665
  %693 = vst.msk [vmem:[%s2 + $0xb8] sm:$0xff] %vm674, %v667
  // Predicated region
  $region10: #{_lambda_.16} parent=0 // pred_check
    _
  $region11: #{_lambda_.16} parent=0 // pred_check_branch
    %695 = sbr.rel (0) target = $region13
  $region12: #{_lambda_.16} parent=0 // pred_region
    _
  $region13: #{_lambda_.16} parent=0 // pred_fallthru
    _
  // Predicated region
  $region14: #{_lambda_.16} parent=0 // pred_check
    _
  $region15: #{_lambda_.16} parent=0 // pred_check_branch
    %697 = sbr.rel (0) target = $region17
  $region16: #{_lambda_.16} parent=0 // pred_region
    _
  $region17: #{_lambda_.16} parent=0 // pred_fallthru
    _

// kernel: _lambda_.17
$region0: #{_lambda_.17}
  #allocation0 [shape = 'u32[]', space=smem, size = 0x4, offset = 0x4, fixed_abs, tag = 'smem constant byte address 0x4 - core index']
  #allocation1 [shape = 'u32[144,128]{1,0:T(1,128)}', space=vmem, size = 0x12000, scoped, tag = 'internal scratch']
  %s0 = inlined_call_operand.vmem [shape: bf16[8,144], index: 0, kind: input, shape index: {}]
  %s1 = inlined_call_operand.vmem [shape: bf16[144,1152], index: 1, kind: input, shape index: {}]
  %s2 = inlined_call_operand.vmem [shape: f32[8,1], index: 2, kind: input, shape index: {}]
  %s3 = inlined_call_operand.vmem [shape: f32[8,1152], index: 3, kind: output, shape index: {}]
  %s4 = sld [smem:[#allocation0]]
  $region22: #{_lambda_.17} parent=0
    _
  %s6 = ssub.s32 1, %s4
  %s7 = scalar_select 0, %s6, %s4
  // Predicated region
  $region2: #{_lambda_.17} parent=0 // pred_check
    _
  $region3: #{_lambda_.17} parent=0 // pred_check_branch
    %9 = sbr.rel (0) target = $region5
  $region4: #{_lambda_.17} parent=0 // pred_region
    _
  $region5: #{_lambda_.17} parent=0 // pred_fallthru
    _
  // Predicated region
  $region6: #{_lambda_.17} parent=0 // pred_check
    _
  $region7: #{_lambda_.17} parent=0 // pred_check_branch
    %11 = sbr.rel (0) target = $region9
  $region8: #{_lambda_.17} parent=0 // pred_region
    _
  $region9: #{_lambda_.17} parent=0 // pred_fallthru
    _
  // Predicated region
  $region10: #{_lambda_.17} parent=0 // pred_check
    _
  $region11: #{_lambda_.17} parent=0 // pred_check_branch
    %13 = sbr.rel (0) target = $region13
  $region12: #{_lambda_.17} parent=0 // pred_region
    _
  $region13: #{_lambda_.17} parent=0 // pred_fallthru
    _
  %v15 = vld [vmem:[%s0] sm:$0xff]
  %v16 = vld [vmem:[%s1] sm:$0xff]
  %v17 = vld [vmem:[%s1 + $0x8] sm:$0xff]
  %v18 = vld [vmem:[%s1 + $0x10] sm:$0xff]
  %v19 = vld [vmem:[%s1 + $0x18] sm:$0xff]
  %v20 = vld [vmem:[%s1 + $0x20] sm:$0xf]
  %v21 = vld [vmem:[%s1 + $0x24] sm:$0xff]
  %v22 = vld [vmem:[%s1 + $0x2c] sm:$0xff]
  %v23 = vld [vmem:[%s1 + $0x34] sm:$0xff]
  %v24 = vld [vmem:[%s1 + $0x3c] sm:$0xff]
  %v25 = vld [vmem:[%s1 + $0x44] sm:$0xf]
  %v26 = vld [vmem:[%s1 + $0x48] sm:$0xff]
  %v27 = vld [vmem:[%s1 + $0x50] sm:$0xff]
  %v28 = vld [vmem:[%s1 + $0x58] sm:$0xff]
  %v29 = vld [vmem:[%s1 + $0x60] sm:$0xff]
  %v30 = vld [vmem:[%s1 + $0x68] sm:$0xf]
  %v31 = vld [vmem:[%s1 + $0x6c] sm:$0xff]
  %v32 = vld [vmem:[%s1 + $0x74] sm:$0xff]
  %v33 = vld [vmem:[%s1 + $0x7c] sm:$0xff]
  %v34 = vld [vmem:[%s1 + $0x84] sm:$0xff]
  %v35 = vld [vmem:[%s1 + $0x8c] sm:$0xf]
  %v36 = vld [vmem:[%s1 + $0x90] sm:$0xff]
  %v37 = vld [vmem:[%s1 + $0x98] sm:$0xff]
  %v38 = vld [vmem:[%s1 + $0xa0] sm:$0xff]
  %v39 = vld [vmem:[%s1 + $0xa8] sm:$0xff]
  %v40 = vld [vmem:[%s1 + $0xb0] sm:$0xf]
  %v41 = vld [vmem:[%s1 + $0xb4] sm:$0xff]
  %v42 = vld [vmem:[%s1 + $0xbc] sm:$0xff]
  %v43 = vld [vmem:[%s1 + $0xc4] sm:$0xff]
  %v44 = vld [vmem:[%s1 + $0xcc] sm:$0xff]
  %v45 = vld [vmem:[%s1 + $0xd4] sm:$0xf]
  %v46 = vld [vmem:[%s1 + $0xd8] sm:$0xff]
  %v47 = vld [vmem:[%s1 + $0xe0] sm:$0xff]
  %v48 = vld [vmem:[%s1 + $0xe8] sm:$0xff]
  %v49 = vld [vmem:[%s1 + $0xf0] sm:$0xff]
  %v50 = vld [vmem:[%s1 + $0xf8] sm:$0xf]
  %v51 = vld [vmem:[%s1 + $0xfc] sm:$0xff]
  %v52 = vld [vmem:[%s1 + $0x104] sm:$0xff]
  %v53 = vld [vmem:[%s1 + $0x10c] sm:$0xff]
  %v54 = vld [vmem:[%s1 + $0x114] sm:$0xff]
  %v55 = vld [vmem:[%s1 + $0x11c] sm:$0xf]
  %v56 = vld [vmem:[%s1 + $0x120] sm:$0xff]
  %v57 = vld [vmem:[%s1 + $0x128] sm:$0xff]
  %v58 = vld [vmem:[%s1 + $0x130] sm:$0xff]
  %v59 = vld [vmem:[%s1 + $0x138] sm:$0xff]
  %v60 = vld [vmem:[%s1 + $0x140] sm:$0xf]
  %v61 = vld [vmem:[%s1 + $0x144] sm:$0xff]
  %v62 = vld [vmem:[%s1 + $0x14c] sm:$0xff]
  %v63 = vld [vmem:[%s1 + $0x154] sm:$0xff]
  %v64 = vld [vmem:[%s1 + $0x15c] sm:$0xff]
  %v65 = vld [vmem:[%s1 + $0x164] sm:$0xf]
  %v66 = vld [vmem:[%s1 + $0x168] sm:$0xff]
  %v67 = vld [vmem:[%s1 + $0x170] sm:$0xff]
  %v68 = vld [vmem:[%s1 + $0x178] sm:$0xff]
  %v69 = vld [vmem:[%s1 + $0x180] sm:$0xff]
  %v70 = vld [vmem:[%s1 + $0x188] sm:$0xf]
  %v71 = vld [vmem:[%s1 + $0x18c] sm:$0xff]
  %v72 = vld [vmem:[%s1 + $0x194] sm:$0xff]
  %v73 = vld [vmem:[%s1 + $0x19c] sm:$0xff]
  %v74 = vld [vmem:[%s1 + $0x1a4] sm:$0xff]
  %v75 = vld [vmem:[%s1 + $0x1ac] sm:$0xf]
  %v76 = vld [vmem:[%s1 + $0x1b0] sm:$0xff]
  %v77 = vld [vmem:[%s1 + $0x1b8] sm:$0xff]
  %v78 = vld [vmem:[%s1 + $0x1c0] sm:$0xff]
  %v79 = vld [vmem:[%s1 + $0x1c8] sm:$0xff]
  %v80 = vld [vmem:[%s1 + $0x1d0] sm:$0xf]
  %v81 = vld [vmem:[%s1 + $0x1d4] sm:$0xff]
  %v82 = vld [vmem:[%s1 + $0x1dc] sm:$0xff]
  %v83 = vld [vmem:[%s1 + $0x1e4] sm:$0xff]
  %v84 = vld [vmem:[%s1 + $0x1ec] sm:$0xff]
  %v85 = vld [vmem:[%s1 + $0x1f4] sm:$0xf]
  %v86 = vld [vmem:[%s1 + $0x1f8] sm:$0xff]
  %v87 = vld [vmem:[%s1 + $0x200] sm:$0xff]
  %v88 = vld [vmem:[%s1 + $0x208] sm:$0xff]
  %v89 = vld [vmem:[%s1 + $0x210] sm:$0xff]
  %v90 = vld [vmem:[%s1 + $0x218] sm:$0xf]
  %v91 = vld [vmem:[%s1 + $0x21c] sm:$0xff]
  %v92 = vld [vmem:[%s1 + $0x224] sm:$0xff]
  %v93 = vld [vmem:[%s1 + $0x22c] sm:$0xff]
  %v94 = vld [vmem:[%s1 + $0x234] sm:$0xff]
  %v95 = vld [vmem:[%s1 + $0x23c] sm:$0xf]
  %v96 = vld [vmem:[%s1 + $0x240] sm:$0xff]
  %v97 = vld [vmem:[%s1 + $0x248] sm:$0xff]
  %v98 = vld [vmem:[%s1 + $0x250] sm:$0xff]
  %v99 = vld [vmem:[%s1 + $0x258] sm:$0xff]
  %v100 = vld [vmem:[%s1 + $0x260] sm:$0xf]
  %v101 = vld [vmem:[%s1 + $0x264] sm:$0xff]
  %v102 = vld [vmem:[%s1 + $0x26c] sm:$0xff]
  %v103 = vld [vmem:[%s1 + $0x274] sm:$0xff]
  %v104 = vld [vmem:[%s1 + $0x27c] sm:$0xff]
  %v105 = vld [vmem:[%s1 + $0x284] sm:$0xf]
  %v106 = vld [vmem:[%s2] sm:$0xff]
  %108 = vset.pattern.permute.xlu0 0
  %109 = vperm.xlu0 %108, %v106
  %v110 = vpop.permute.xlu0 %109
  %v113 = vunpack.c.l.b16 %v15
  %v114 = vunpack.c.h.b16 %v15
  %v115 = vpack.c.b16 %v113, %v113
  %v116 = vpack.c.b16 %v114, %v114
  %v208 = vunpack.c.l.b16 %v16
  %v209 = vunpack.c.h.b16 %v16
  %v210 = vunpack.c.l.b16 %v17
  %v211 = vunpack.c.h.b16 %v17
  %v212 = vunpack.c.l.b16 %v18
  %v213 = vunpack.c.h.b16 %v18
  %v214 = vunpack.c.l.b16 %v19
  %v215 = vunpack.c.h.b16 %v19
  %v216 = vunpack.c.l.b16 %v20
  %v217 = vunpack.c.l.b16 %v21
  %v218 = vunpack.c.h.b16 %v21
  %v219 = vunpack.c.l.b16 %v22
  %v220 = vunpack.c.h.b16 %v22
  %v221 = vunpack.c.l.b16 %v23
  %v222 = vunpack.c.h.b16 %v23
  %v223 = vunpack.c.l.b16 %v24
  %v224 = vunpack.c.h.b16 %v24
  %v225 = vunpack.c.l.b16 %v25
  %v226 = vunpack.c.l.b16 %v26
  %v227 = vunpack.c.h.b16 %v26
  %v228 = vunpack.c.l.b16 %v27
  %v229 = vunpack.c.h.b16 %v27
  %v230 = vunpack.c.l.b16 %v28
  %v231 = vunpack.c.h.b16 %v28
  %v232 = vunpack.c.l.b16 %v29
  %v233 = vunpack.c.h.b16 %v29
  %v234 = vunpack.c.l.b16 %v30
  %v235 = vunpack.c.l.b16 %v31
  %v236 = vunpack.c.h.b16 %v31
  %v237 = vunpack.c.l.b16 %v32
  %v238 = vunpack.c.h.b16 %v32
  %v239 = vunpack.c.l.b16 %v33
  %v240 = vunpack.c.h.b16 %v33
  %v241 = vunpack.c.l.b16 %v34
  %v242 = vunpack.c.h.b16 %v34
  %v243 = vunpack.c.l.b16 %v35
  %v244 = vunpack.c.l.b16 %v36
  %v245 = vunpack.c.h.b16 %v36
  %v246 = vunpack.c.l.b16 %v37
  %v247 = vunpack.c.h.b16 %v37
  %v248 = vunpack.c.l.b16 %v38
  %v249 = vunpack.c.h.b16 %v38
  %v250 = vunpack.c.l.b16 %v39
  %v251 = vunpack.c.h.b16 %v39
  %v252 = vunpack.c.l.b16 %v40
  %v253 = vunpack.c.l.b16 %v41
  %v254 = vunpack.c.h.b16 %v41
  %v255 = vunpack.c.l.b16 %v42
  %v256 = vunpack.c.h.b16 %v42
  %v257 = vunpack.c.l.b16 %v43
  %v258 = vunpack.c.h.b16 %v43
  %v259 = vunpack.c.l.b16 %v44
  %v260 = vunpack.c.h.b16 %v44
  %v261 = vunpack.c.l.b16 %v45
  %v262 = vunpack.c.l.b16 %v46
  %v263 = vunpack.c.h.b16 %v46
  %v264 = vunpack.c.l.b16 %v47
  %v265 = vunpack.c.h.b16 %v47
  %v266 = vunpack.c.l.b16 %v48
  %v267 = vunpack.c.h.b16 %v48
  %v268 = vunpack.c.l.b16 %v49
  %v269 = vunpack.c.h.b16 %v49
  %v270 = vunpack.c.l.b16 %v50
  %v271 = vunpack.c.l.b16 %v51
  %v272 = vunpack.c.h.b16 %v51
  %v273 = vunpack.c.l.b16 %v52
  %v274 = vunpack.c.h.b16 %v52
  %v275 = vunpack.c.l.b16 %v53
  %v276 = vunpack.c.h.b16 %v53
  %v277 = vunpack.c.l.b16 %v54
  %v278 = vunpack.c.h.b16 %v54
  %v279 = vunpack.c.l.b16 %v55
  %v280 = vunpack.c.l.b16 %v56
  %v281 = vunpack.c.h.b16 %v56
  %v282 = vunpack.c.l.b16 %v57
  %v283 = vunpack.c.h.b16 %v57
  %v284 = vunpack.c.l.b16 %v58
  %v285 = vunpack.c.h.b16 %v58
  %v286 = vunpack.c.l.b16 %v59
  %v287 = vunpack.c.h.b16 %v59
  %v288 = vunpack.c.l.b16 %v60
  %v289 = vunpack.c.l.b16 %v61
  %v290 = vunpack.c.h.b16 %v61
  %v291 = vunpack.c.l.b16 %v62
  %v292 = vunpack.c.h.b16 %v62
  %v293 = vunpack.c.l.b16 %v63
  %v294 = vunpack.c.h.b16 %v63
  %v295 = vunpack.c.l.b16 %v64
  %v296 = vunpack.c.h.b16 %v64
  %v297 = vunpack.c.l.b16 %v65
  %v298 = vunpack.c.l.b16 %v66
  %v299 = vunpack.c.h.b16 %v66
  %v300 = vunpack.c.l.b16 %v67
  %v301 = vunpack.c.h.b16 %v67
  %v302 = vunpack.c.l.b16 %v68
  %v303 = vunpack.c.h.b16 %v68
  %v304 = vunpack.c.l.b16 %v69
  %v305 = vunpack.c.h.b16 %v69
  %v306 = vunpack.c.l.b16 %v70
  %v307 = vunpack.c.l.b16 %v71
  %v308 = vunpack.c.h.b16 %v71
  %v309 = vunpack.c.l.b16 %v72
  %v310 = vunpack.c.h.b16 %v72
  %v311 = vunpack.c.l.b16 %v73
  %v312 = vunpack.c.h.b16 %v73
  %v313 = vunpack.c.l.b16 %v74
  %v314 = vunpack.c.h.b16 %v74
  %v315 = vunpack.c.l.b16 %v75
  %v316 = vunpack.c.l.b16 %v76
  %v317 = vunpack.c.h.b16 %v76
  %v318 = vunpack.c.l.b16 %v77
  %v319 = vunpack.c.h.b16 %v77
  %v320 = vunpack.c.l.b16 %v78
  %v321 = vunpack.c.h.b16 %v78
  %v322 = vunpack.c.l.b16 %v79
  %v323 = vunpack.c.h.b16 %v79
  %v324 = vunpack.c.l.b16 %v80
  %v325 = vunpack.c.l.b16 %v81
  %v326 = vunpack.c.h.b16 %v81
  %v327 = vunpack.c.l.b16 %v82
  %v328 = vunpack.c.h.b16 %v82
  %v329 = vunpack.c.l.b16 %v83
  %v330 = vunpack.c.h.b16 %v83
  %v331 = vunpack.c.l.b16 %v84
  %v332 = vunpack.c.h.b16 %v84
  %v333 = vunpack.c.l.b16 %v85
  %v334 = vunpack.c.l.b16 %v86
  %v335 = vunpack.c.h.b16 %v86
  %v336 = vunpack.c.l.b16 %v87
  %v337 = vunpack.c.h.b16 %v87
  %v338 = vunpack.c.l.b16 %v88
  %v339 = vunpack.c.h.b16 %v88
  %v340 = vunpack.c.l.b16 %v89
  %v341 = vunpack.c.h.b16 %v89
  %v342 = vunpack.c.l.b16 %v90
  %v343 = vunpack.c.l.b16 %v91
  %v344 = vunpack.c.h.b16 %v91
  %v345 = vunpack.c.l.b16 %v92
  %v346 = vunpack.c.h.b16 %v92
  %v347 = vunpack.c.l.b16 %v93
  %v348 = vunpack.c.h.b16 %v93
  %v349 = vunpack.c.l.b16 %v94
  %v350 = vunpack.c.h.b16 %v94
  %v351 = vunpack.c.l.b16 %v95
  %v352 = vunpack.c.l.b16 %v96
  %v353 = vunpack.c.h.b16 %v96
  %v354 = vunpack.c.l.b16 %v97
  %v355 = vunpack.c.h.b16 %v97
  %v356 = vunpack.c.l.b16 %v98
  %v357 = vunpack.c.h.b16 %v98
  %v358 = vunpack.c.l.b16 %v99
  %v359 = vunpack.c.h.b16 %v99
  %v360 = vunpack.c.l.b16 %v100
  %v361 = vunpack.c.l.b16 %v101
  %v362 = vunpack.c.h.b16 %v101
  %v363 = vunpack.c.l.b16 %v102
  %v364 = vunpack.c.h.b16 %v102
  %v365 = vunpack.c.l.b16 %v103
  %v366 = vunpack.c.h.b16 %v103
  %v367 = vunpack.c.l.b16 %v104
  %v368 = vunpack.c.h.b16 %v104
  %v369 = vunpack.c.l.b16 %v105
  %v370 = vpack.c.b16 %v217, %v208
  %v371 = vpack.c.b16 %v218, %v209
  %v372 = vpack.c.b16 %v219, %v210
  %v373 = vpack.c.b16 %v220, %v211
  %v374 = vpack.c.b16 %v221, %v212
  %v375 = vpack.c.b16 %v222, %v213
  %v376 = vpack.c.b16 %v223, %v214
  %v377 = vpack.c.b16 %v224, %v215
  %v378 = vpack.c.b16 %v225, %v216
  %v379 = vpack.c.b16 %v235, %v226
  %v380 = vpack.c.b16 %v236, %v227
  %v381 = vpack.c.b16 %v237, %v228
  %v382 = vpack.c.b16 %v238, %v229
  %v383 = vpack.c.b16 %v239, %v230
  %v384 = vpack.c.b16 %v240, %v231
  %v385 = vpack.c.b16 %v241, %v232
  %v386 = vpack.c.b16 %v242, %v233
  %v387 = vpack.c.b16 %v243, %v234
  %v388 = vpack.c.b16 %v253, %v244
  %v389 = vpack.c.b16 %v254, %v245
  %v390 = vpack.c.b16 %v255, %v246
  %v391 = vpack.c.b16 %v256, %v247
  %v392 = vpack.c.b16 %v257, %v248
  %v393 = vpack.c.b16 %v258, %v249
  %v394 = vpack.c.b16 %v259, %v250
  %v395 = vpack.c.b16 %v260, %v251
  %v396 = vpack.c.b16 %v261, %v252
  %v397 = vpack.c.b16 %v271, %v262
  %v398 = vpack.c.b16 %v272, %v263
  %v399 = vpack.c.b16 %v273, %v264
  %v400 = vpack.c.b16 %v274, %v265
  %v401 = vpack.c.b16 %v275, %v266
  %v402 = vpack.c.b16 %v276, %v267
  %v403 = vpack.c.b16 %v277, %v268
  %v404 = vpack.c.b16 %v278, %v269
  %v405 = vpack.c.b16 %v279, %v270
  %v406 = vpack.c.b16 %v289, %v280
  %v407 = vpack.c.b16 %v290, %v281
  %v408 = vpack.c.b16 %v291, %v282
  %v409 = vpack.c.b16 %v292, %v283
  %v410 = vpack.c.b16 %v293, %v284
  %v411 = vpack.c.b16 %v294, %v285
  %v412 = vpack.c.b16 %v295, %v286
  %v413 = vpack.c.b16 %v296, %v287
  %v414 = vpack.c.b16 %v297, %v288
  %v415 = vpack.c.b16 %v307, %v298
  %v416 = vpack.c.b16 %v308, %v299
  %v417 = vpack.c.b16 %v309, %v300
  %v418 = vpack.c.b16 %v310, %v301
  %v419 = vpack.c.b16 %v311, %v302
  %v420 = vpack.c.b16 %v312, %v303
  %v421 = vpack.c.b16 %v313, %v304
  %v422 = vpack.c.b16 %v314, %v305
  %v423 = vpack.c.b16 %v315, %v306
  %v424 = vpack.c.b16 %v325, %v316
  %v425 = vpack.c.b16 %v326, %v317
  %v426 = vpack.c.b16 %v327, %v318
  %v427 = vpack.c.b16 %v328, %v319
  %v428 = vpack.c.b16 %v329, %v320
  %v429 = vpack.c.b16 %v330, %v321
  %v430 = vpack.c.b16 %v331, %v322
  %v431 = vpack.c.b16 %v332, %v323
  %v432 = vpack.c.b16 %v333, %v324
  %v433 = vpack.c.b16 %v343, %v334
  %v434 = vpack.c.b16 %v344, %v335
  %v435 = vpack.c.b16 %v345, %v336
  %v436 = vpack.c.b16 %v346, %v337
  %v437 = vpack.c.b16 %v347, %v338
  %v438 = vpack.c.b16 %v348, %v339
  %v439 = vpack.c.b16 %v349, %v340
  %v440 = vpack.c.b16 %v350, %v341
  %v441 = vpack.c.b16 %v351, %v342
  %v442 = vpack.c.b16 %v361, %v352
  %v443 = vpack.c.b16 %v362, %v353
  %v444 = vpack.c.b16 %v363, %v354
  %v445 = vpack.c.b16 %v364, %v355
  %v446 = vpack.c.b16 %v365, %v356
  %v447 = vpack.c.b16 %v366, %v357
  %v448 = vpack.c.b16 %v367, %v358
  %v449 = vpack.c.b16 %v368, %v359
  %v450 = vpack.c.b16 %v369, %v360
  %vm532 = vcmask 130048
  %v534 = vsel %vm532, %v116, 0
  %536 = vmatprep.subr.bf16.mxu0 %v371
  %537 = vmatpush1.bf16.msra.mxu0 %v370
  %538 = vmatprep.subr.bf16.mxu0 %v380
  %539 = vmatpush1.bf16.msra.mxu0 %v379
  %540 = vmatprep.subr.bf16.mxu0 %v389
  %541 = vmatpush1.bf16.msra.mxu0 %v388
  %542 = vmatprep.subr.bf16.mxu0 %v398
  %543 = vmatpush1.bf16.msra.mxu0 %v397
  %544 = vmatprep.subr.bf16.mxu0 %v407
  %545 = vmatpush1.bf16.msra.mxu0 %v406
  %546 = vmatprep.subr.bf16.mxu0 %v416
  %547 = vmatpush1.bf16.msra.mxu0 %v415
  %548 = vmatprep.subr.bf16.mxu0 %v425
  %549 = vmatpush1.bf16.msra.mxu0 %v424
  %550 = vmatprep.subr.bf16.mxu0 %v434
  %551 = vmatpush1.bf16.msra.mxu0 %v433
  %552 = vmatprep.subr.bf16.mxu0 %v443
  %553 = vmatpush1.bf16.msra.mxu0 %v442
  %554 = vmatprep.subr.bf16.mxu0 0
  %555 = vmatpush1.bf16.msra.mxu0 0
  %556 = vmatprep.subr.bf16.mxu0 0
  %557 = vmatpush1.bf16.msra.mxu0 0
  %558 = vmatprep.subr.bf16.mxu0 0
  %559 = vmatpush1.bf16.msra.mxu0 0
  %560 = vmatprep.subr.bf16.mxu0 0
  %561 = vmatpush1.bf16.msra.mxu0 0
  %562 = vmatprep.subr.bf16.mxu0 0
  %563 = vmatpush1.bf16.msra.mxu0 0
  %564 = vmatprep.subr.bf16.mxu0 0
  %565 = vmatpush1.bf16.msra.mxu0 0
  %566 = vmatprep.subr.bf16.mxu0 0
  %567 = vmatpush1.bf16.msra.mxu0 0
  %568 = vmatprep.mubr.bf16.mxu0 %v534
  %569 = vmatmul.mubr.bf16.gmra.mrb[0].mxu0 %v115
  %v570 = vpop.f32.mrb[0].mxu0
  %v571 = vadd.f32 %v110, %v570
  %v572 = vpop.f32.mrb[0].mxu0
  %v573 = vadd.f32 %v110, %v572
  %v574 = vpop.f32.mrb[0].mxu0
  %v575 = vpop.f32.mrb[0].mxu0
  %576 = vdwg.mxu0
  %577 = vmatprep.subr.bf16.mxu0 %v373
  %578 = vmatpush1.bf16.msra.mxu0 %v372
  %579 = vmatprep.subr.bf16.mxu0 %v382
  %580 = vmatpush1.bf16.msra.mxu0 %v381
  %581 = vmatprep.subr.bf16.mxu0 %v391
  %582 = vmatpush1.bf16.msra.mxu0 %v390
  %583 = vmatprep.subr.bf16.mxu0 %v400
  %584 = vmatpush1.bf16.msra.mxu0 %v399
  %585 = vmatprep.subr.bf16.mxu0 %v409
  %586 = vmatpush1.bf16.msra.mxu0 %v408
  %587 = vmatprep.subr.bf16.mxu0 %v418
  %588 = vmatpush1.bf16.msra.mxu0 %v417
  %589 = vmatprep.subr.bf16.mxu0 %v427
  %590 = vmatpush1.bf16.msra.mxu0 %v426
  %591 = vmatprep.subr.bf16.mxu0 %v436
  %592 = vmatpush1.bf16.msra.mxu0 %v435
  %593 = vmatprep.subr.bf16.mxu0 %v445
  %594 = vmatpush1.bf16.msra.mxu0 %v444
  %595 = vmatprep.subr.bf16.mxu0 0
  %596 = vmatpush1.bf16.msra.mxu0 0
  %597 = vmatprep.subr.bf16.mxu0 0
  %598 = vmatpush1.bf16.msra.mxu0 0
  %599 = vmatprep.subr.bf16.mxu0 0
  %600 = vmatpush1.bf16.msra.mxu0 0
  %601 = vmatprep.subr.bf16.mxu0 0
  %602 = vmatpush1.bf16.msra.mxu0 0
  %603 = vmatprep.subr.bf16.mxu0 0
  %604 = vmatpush1.bf16.msra.mxu0 0
  %605 = vmatprep.subr.bf16.mxu0 0
  %606 = vmatpush1.bf16.msra.mxu0 0
  %607 = vmatprep.subr.bf16.mxu0 0
  %608 = vmatpush1.bf16.msra.mxu0 0
  %609 = vmatprep.mubr.bf16.mxu0 %v534
  %610 = vmatmul.mubr.bf16.gmra.mrb[0].mxu0 %v115
  %v611 = vpop.f32.mrb[0].mxu0
  %v612 = vadd.f32 %v110, %v611
  %v613 = vpop.f32.mrb[0].mxu0
  %v614 = vadd.f32 %v110, %v613
  %v615 = vpop.f32.mrb[0].mxu0
  %v616 = vpop.f32.mrb[0].mxu0
  %617 = vdwg.mxu0
  %618 = vmatprep.subr.bf16.mxu0 %v375
  %619 = vmatpush1.bf16.msra.mxu0 %v374
  %620 = vmatprep.subr.bf16.mxu0 %v384
  %621 = vmatpush1.bf16.msra.mxu0 %v383
  %622 = vmatprep.subr.bf16.mxu0 %v393
  %623 = vmatpush1.bf16.msra.mxu0 %v392
  %624 = vmatprep.subr.bf16.mxu0 %v402
  %625 = vmatpush1.bf16.msra.mxu0 %v401
  %626 = vmatprep.subr.bf16.mxu0 %v411
  %627 = vmatpush1.bf16.msra.mxu0 %v410
  %628 = vmatprep.subr.bf16.mxu0 %v420
  %629 = vmatpush1.bf16.msra.mxu0 %v419
  %630 = vmatprep.subr.bf16.mxu0 %v429
  %631 = vmatpush1.bf16.msra.mxu0 %v428
  %632 = vmatprep.subr.bf16.mxu0 %v438
  %633 = vmatpush1.bf16.msra.mxu0 %v437
  %634 = vmatprep.subr.bf16.mxu0 %v447
  %635 = vmatpush1.bf16.msra.mxu0 %v446
  %636 = vmatprep.subr.bf16.mxu0 0
  %637 = vmatpush1.bf16.msra.mxu0 0
  %638 = vmatprep.subr.bf16.mxu0 0
  %639 = vmatpush1.bf16.msra.mxu0 0
  %640 = vmatprep.subr.bf16.mxu0 0
  %641 = vmatpush1.bf16.msra.mxu0 0
  %642 = vmatprep.subr.bf16.mxu0 0
  %643 = vmatpush1.bf16.msra.mxu0 0
  %644 = vmatprep.subr.bf16.mxu0 0
  %645 = vmatpush1.bf16.msra.mxu0 0
  %646 = vmatprep.subr.bf16.mxu0 0
  %647 = vmatpush1.bf16.msra.mxu0 0
  %648 = vmatprep.subr.bf16.mxu0 0
  %649 = vmatpush1.bf16.msra.mxu0 0
  %650 = vmatprep.mubr.bf16.mxu0 %v534
  %651 = vmatmul.mubr.bf16.gmra.mrb[0].mxu0 %v115
  %v652 = vpop.f32.mrb[0].mxu0
  %v653 = vadd.f32 %v110, %v652
  %v654 = vpop.f32.mrb[0].mxu0
  %v655 = vadd.f32 %v110, %v654
  %v656 = vpop.f32.mrb[0].mxu0
  %v657 = vpop.f32.mrb[0].mxu0
  %658 = vdwg.mxu0
  %659 = vmatprep.subr.bf16.mxu0 %v377
  %660 = vmatpush1.bf16.msra.mxu0 %v376
  %661 = vmatprep.subr.bf16.mxu0 %v386
  %662 = vmatpush1.bf16.msra.mxu0 %v385
  %663 = vmatprep.subr.bf16.mxu0 %v395
  %664 = vmatpush1.bf16.msra.mxu0 %v394
  %665 = vmatprep.subr.bf16.mxu0 %v404
  %666 = vmatpush1.bf16.msra.mxu0 %v403
  %667 = vmatprep.subr.bf16.mxu0 %v413
  %668 = vmatpush1.bf16.msra.mxu0 %v412
  %669 = vmatprep.subr.bf16.mxu0 %v422
  %670 = vmatpush1.bf16.msra.mxu0 %v421
  %671 = vmatprep.subr.bf16.mxu0 %v431
  %672 = vmatpush1.bf16.msra.mxu0 %v430
  %673 = vmatprep.subr.bf16.mxu0 %v440
  %674 = vmatpush1.bf16.msra.mxu0 %v439
  %675 = vmatprep.subr.bf16.mxu0 %v449
  %676 = vmatpush1.bf16.msra.mxu0 %v448
  %677 = vmatprep.subr.bf16.mxu0 0
  %678 = vmatpush1.bf16.msra.mxu0 0
  %679 = vmatprep.subr.bf16.mxu0 0
  %680 = vmatpush1.bf16.msra.mxu0 0
  %681 = vmatprep.subr.bf16.mxu0 0
  %682 = vmatpush1.bf16.msra.mxu0 0
  %683 = vmatprep.subr.bf16.mxu0 0
  %684 = vmatpush1.bf16.msra.mxu0 0
  %685 = vmatprep.subr.bf16.mxu0 0
  %686 = vmatpush1.bf16.msra.mxu0 0
  %687 = vmatprep.subr.bf16.mxu0 0
  %688 = vmatpush1.bf16.msra.mxu0 0
  %689 = vmatprep.subr.bf16.mxu0 0
  %690 = vmatpush1.bf16.msra.mxu0 0
  %691 = vmatprep.mubr.bf16.mxu0 %v534
  %692 = vmatmul.mubr.bf16.gmra.mrb[0].mxu0 %v115
  %v693 = vpop.f32.mrb[0].mxu0
  %v694 = vadd.f32 %v110, %v693
  %v695 = vpop.f32.mrb[0].mxu0
  %v696 = vadd.f32 %v110, %v695
  %v697 = vpop.f32.mrb[0].mxu0
  %v698 = vpop.f32.mrb[0].mxu0
  %699 = vdwg.mxu0
  %700 = vmatprep.subr.bf16.mxu0 0
  %701 = vmatpush1.bf16.msra.mxu0 %v378
  %702 = vmatprep.subr.bf16.mxu0 0
  %703 = vmatpush1.bf16.msra.mxu0 %v387
  %704 = vmatprep.subr.bf16.mxu0 0
  %705 = vmatpush1.bf16.msra.mxu0 %v396
  %706 = vmatprep.subr.bf16.mxu0 0
  %707 = vmatpush1.bf16.msra.mxu0 %v405
  %708 = vmatprep.subr.bf16.mxu0 0
  %709 = vmatpush1.bf16.msra.mxu0 %v414
  %710 = vmatprep.subr.bf16.mxu0 0
  %711 = vmatpush1.bf16.msra.mxu0 %v423
  %712 = vmatprep.subr.bf16.mxu0 0
  %713 = vmatpush1.bf16.msra.mxu0 %v432
  %714 = vmatprep.subr.bf16.mxu0 0
  %715 = vmatpush1.bf16.msra.mxu0 %v441
  %716 = vmatprep.subr.bf16.mxu0 0
  %717 = vmatpush1.bf16.msra.mxu0 %v450
  %718 = vmatprep.subr.bf16.mxu0 0
  %719 = vmatpush1.bf16.msra.mxu0 0
  %720 = vmatprep.subr.bf16.mxu0 0
  %721 = vmatpush1.bf16.msra.mxu0 0
  %722 = vmatprep.subr.bf16.mxu0 0
  %723 = vmatpush1.bf16.msra.mxu0 0
  %724 = vmatprep.subr.bf16.mxu0 0
  %725 = vmatpush1.bf16.msra.mxu0 0
  %726 = vmatprep.subr.bf16.mxu0 0
  %727 = vmatpush1.bf16.msra.mxu0 0
  %728 = vmatprep.subr.bf16.mxu0 0
  %729 = vmatpush1.bf16.msra.mxu0 0
  %730 = vmatprep.subr.bf16.mxu0 0
  %731 = vmatpush1.bf16.msra.mxu0 0
  %732 = vmatprep.mubr.bf16.mxu0 %v534
  %733 = vmatmul.mubr.bf16.gmra.mrb[0].mxu0 %v115
  %v734 = vpop.f32.mrb[0].mxu0
  %v735 = vadd.f32 %v110, %v734
  %v736 = vpop.f32.mrb[0].mxu0
  %v737 = vpop.f32.mrb[0].mxu0
  %v738 = vpop.f32.mrb[0].mxu0
  %739 = vdwg.mxu0
  %v740 = vmax.f32 %v571, 0.0
  %v741 = vmax.f32 %v573, 0.0
  %v742 = vmax.f32 %v612, 0.0
  %v743 = vmax.f32 %v614, 0.0
  %v744 = vmax.f32 %v653, 0.0
  %v745 = vmax.f32 %v655, 0.0
  %v746 = vmax.f32 %v694, 0.0
  %v747 = vmax.f32 %v696, 0.0
  %v748 = vmax.f32 %v735, 0.0
  %749 = vst [vmem:[%s3] sm:$0xff] %v740
  %750 = vst [vmem:[%s3 + $0x8] sm:$0xff] %v741
  %751 = vst [vmem:[%s3 + $0x10] sm:$0xff] %v742
  %752 = vst [vmem:[%s3 + $0x18] sm:$0xff] %v743
  %753 = vst [vmem:[%s3 + $0x20] sm:$0xff] %v744
  %754 = vst [vmem:[%s3 + $0x28] sm:$0xff] %v745
  %755 = vst [vmem:[%s3 + $0x30] sm:$0xff] %v746
  %756 = vst [vmem:[%s3 + $0x38] sm:$0xff] %v747
  %757 = vst [vmem:[%s3 + $0x40] sm:$0xff] %v748
  // Predicated region
  $region14: #{_lambda_.17} parent=0 // pred_check
    _
  $region15: #{_lambda_.17} parent=0 // pred_check_branch
    %759 = sbr.rel (0) target = $region17
  $region16: #{_lambda_.17} parent=0 // pred_region
    _
  $region17: #{_lambda_.17} parent=0 // pred_fallthru
    _
  // Predicated region
  $region18: #{_lambda_.17} parent=0 // pred_check
    _
  $region19: #{_lambda_.17} parent=0 // pred_check_branch
    %761 = sbr.rel (0) target = $region21
  $region20: #{_lambda_.17} parent=0 // pred_region
    _
  $region21: #{_lambda_.17} parent=0 // pred_fallthru
    _

// kernel: _lambda_.18
$region0: #{_lambda_.18}
  #allocation0 [shape = 'u32[]', space=smem, size = 0x4, offset = 0x4, fixed_abs, tag = 'smem constant byte address 0x4 - core index']
  #allocation1 [shape = 'u32[144,128]{1,0:T(1,128)}', space=vmem, size = 0x12000, scoped, tag = 'internal scratch']
  %s0 = inlined_call_operand.vmem [shape: bf16[16,576], index: 0, kind: input, shape index: {}]
  %s1 = inlined_call_operand.vmem [shape: bf16[576,900], index: 1, kind: input, shape index: {}]
  %s2 = inlined_call_operand.vmem [shape: f32[16,900], index: 2, kind: output, shape index: {}]
  %s3 = sld [smem:[#allocation0]]
  $region18: #{_lambda_.18} parent=0
    _
  %s5 = ssub.s32 1, %s3
  %s6 = scalar_select 0, %s5, %s3
  // Predicated region
  $region2: #{_lambda_.18} parent=0 // pred_check
    _
  $region3: #{_lambda_.18} parent=0 // pred_check_branch
    %8 = sbr.rel (0) target = $region5
  $region4: #{_lambda_.18} parent=0 // pred_region
    _
  $region5: #{_lambda_.18} parent=0 // pred_fallthru
    _
  // Predicated region
  $region6: #{_lambda_.18} parent=0 // pred_check
    _
  $region7: #{_lambda_.18} parent=0 // pred_check_branch
    %10 = sbr.rel (0) target = $region9
  $region8: #{_lambda_.18} parent=0 // pred_region
    _
  $region9: #{_lambda_.18} parent=0 // pred_fallthru
    _
  %v12 = vld [vmem:[%s0] sm:$0xff]
  %v13 = vld [vmem:[%s0 + $0x8] sm:$0xff]
  %v14 = vld [vmem:[%s0 + $0x10] sm:$0xf]
  %v15 = vld [vmem:[%s0 + $0x14] sm:$0xff]
  %v16 = vld [vmem:[%s0 + $0x1c] sm:$0xff]
  %v17 = vld [vmem:[%s0 + $0x24] sm:$0xf]
  %v18 = vld [vmem:[%s1] sm:$0xff]
  %v19 = vld [vmem:[%s1 + $0x8] sm:$0xff]
  %v20 = vld [vmem:[%s1 + $0x10] sm:$0xff]
  %v21 = vld [vmem:[%s1 + $0x18] sm:$0xff]
  %v22 = vld [vmem:[%s1 + $0x20] sm:$0xff]
  %v23 = vld [vmem:[%s1 + $0x28] sm:$0xff]
  %v24 = vld [vmem:[%s1 + $0x30] sm:$0xff]
  %v25 = vld [vmem:[%s1 + $0x38] sm:$0xff]
  %v26 = vld [vmem:[%s1 + $0x40] sm:$0xff]
  %v27 = vld [vmem:[%s1 + $0x48] sm:$0xff]
  %v28 = vld [vmem:[%s1 + $0x50] sm:$0xff]
  %v29 = vld [vmem:[%s1 + $0x58] sm:$0xff]
  %v30 = vld [vmem:[%s1 + $0x60] sm:$0xff]
  %v31 = vld [vmem:[%s1 + $0x68] sm:$0xff]
  %v32 = vld [vmem:[%s1 + $0x70] sm:$0xff]
  %v33 = vld [vmem:[%s1 + $0x78] sm:$0xff]
  %v34 = vld [vmem:[%s1 + $0x80] sm:$0xff]
  %v35 = vld [vmem:[%s1 + $0x88] sm:$0xff]
  %v36 = vld [vmem:[%s1 + $0x90] sm:$0xff]
  %v37 = vld [vmem:[%s1 + $0x98] sm:$0xff]
  %v38 = vld [vmem:[%s1 + $0xa0] sm:$0xff]
  %v39 = vld [vmem:[%s1 + $0xa8] sm:$0xff]
  %v40 = vld [vmem:[%s1 + $0xb0] sm:$0xff]
  %v41 = vld [vmem:[%s1 + $0xb8] sm:$0xff]
  %v42 = vld [vmem:[%s1 + $0xc0] sm:$0xff]
  %v43 = vld [vmem:[%s1 + $0xc8] sm:$0xff]
  %v44 = vld [vmem:[%s1 + $0xd0] sm:$0xff]
  %v45 = vld [vmem:[%s1 + $0xd8] sm:$0xff]
  %v46 = vld [vmem:[%s1 + $0xe0] sm:$0xff]
  %v47 = vld [vmem:[%s1 + $0xe8] sm:$0xff]
  %v48 = vld [vmem:[%s1 + $0xf0] sm:$0xff]
  %v49 = vld [vmem:[%s1 + $0xf8] sm:$0xff]
  %v50 = vld [vmem:[%s1 + $0x100] sm:$0xff]
  %v51 = vld [vmem:[%s1 + $0x108] sm:$0xff]
  %v52 = vld [vmem:[%s1 + $0x110] sm:$0xff]
  %v53 = vld [vmem:[%s1 + $0x118] sm:$0xff]
  %v54 = vld [vmem:[%s1 + $0x120] sm:$0xff]
  %v55 = vld [vmem:[%s1 + $0x128] sm:$0xff]
  %v56 = vld [vmem:[%s1 + $0x130] sm:$0xff]
  %v57 = vld [vmem:[%s1 + $0x138] sm:$0xff]
  %v58 = vld [vmem:[%s1 + $0x140] sm:$0xff]
  %v59 = vld [vmem:[%s1 + $0x148] sm:$0xff]
  %v60 = vld [vmem:[%s1 + $0x150] sm:$0xff]
  %v61 = vld [vmem:[%s1 + $0x158] sm:$0xff]
  %v62 = vld [vmem:[%s1 + $0x160] sm:$0xff]
  %v63 = vld [vmem:[%s1 + $0x168] sm:$0xff]
  %v64 = vld [vmem:[%s1 + $0x170] sm:$0xff]
  %v65 = vld [vmem:[%s1 + $0x178] sm:$0xff]
  %v66 = vld [vmem:[%s1 + $0x180] sm:$0xff]
  %v67 = vld [vmem:[%s1 + $0x188] sm:$0xff]
  %v68 = vld [vmem:[%s1 + $0x190] sm:$0xff]
  %v69 = vld [vmem:[%s1 + $0x198] sm:$0xff]
  %v70 = vld [vmem:[%s1 + $0x1a0] sm:$0xff]
  %v71 = vld [vmem:[%s1 + $0x1a8] sm:$0xff]
  %v72 = vld [vmem:[%s1 + $0x1b0] sm:$0xff]
  %v73 = vld [vmem:[%s1 + $0x1b8] sm:$0xff]
  %v74 = vld [vmem:[%s1 + $0x1c0] sm:$0xff]
  %v75 = vld [vmem:[%s1 + $0x1c8] sm:$0xff]
  %v76 = vld [vmem:[%s1 + $0x1d0] sm:$0xff]
  %v77 = vld [vmem:[%s1 + $0x1d8] sm:$0xff]
  %v78 = vld [vmem:[%s1 + $0x1e0] sm:$0xff]
  %v79 = vld [vmem:[%s1 + $0x1e8] sm:$0xff]
  %v80 = vld [vmem:[%s1 + $0x1f0] sm:$0xff]
  %v81 = vld [vmem:[%s1 + $0x1f8] sm:$0xff]
  %v82 = vld [vmem:[%s1 + $0x200] sm:$0xff]
  %v83 = vld [vmem:[%s1 + $0x208] sm:$0xff]
  %v84 = vld [vmem:[%s1 + $0x210] sm:$0xff]
  %v85 = vld [vmem:[%s1 + $0x218] sm:$0xff]
  %v86 = vld [vmem:[%s1 + $0x220] sm:$0xff]
  %v87 = vld [vmem:[%s1 + $0x228] sm:$0xff]
  %v88 = vld [vmem:[%s1 + $0x230] sm:$0xff]
  %v89 = vld [vmem:[%s1 + $0x238] sm:$0xff]
  %v90 = vld [vmem:[%s1 + $0x240] sm:$0xff]
  %v91 = vld [vmem:[%s1 + $0x248] sm:$0xff]
  %v92 = vld [vmem:[%s1 + $0x250] sm:$0xff]
  %v93 = vld [vmem:[%s1 + $0x258] sm:$0xff]
  %v94 = vld [vmem:[%s1 + $0x260] sm:$0xff]
  %v95 = vld [vmem:[%s1 + $0x268] sm:$0xff]
  %v96 = vld [vmem:[%s1 + $0x270] sm:$0xff]
  %v97 = vld [vmem:[%s1 + $0x278] sm:$0xff]
  %v98 = vld [vmem:[%s1 + $0x280] sm:$0xff]
  %v99 = vld [vmem:[%s1 + $0x288] sm:$0xff]
  %v100 = vld [vmem:[%s1 + $0x290] sm:$0xff]
  %v101 = vld [vmem:[%s1 + $0x298] sm:$0xff]
  %v102 = vld [vmem:[%s1 + $0x2a0] sm:$0xff]
  %v103 = vld [vmem:[%s1 + $0x2a8] sm:$0xff]
  %v104 = vld [vmem:[%s1 + $0x2b0] sm:$0xff]
  %v105 = vld [vmem:[%s1 + $0x2b8] sm:$0xff]
  %v106 = vld [vmem:[%s1 + $0x2c0] sm:$0xff]
  %v107 = vld [vmem:[%s1 + $0x2c8] sm:$0xff]
  %v108 = vld [vmem:[%s1 + $0x2d0] sm:$0xff]
  %v109 = vld [vmem:[%s1 + $0x2d8] sm:$0xff]
  %v110 = vld [vmem:[%s1 + $0x2e0] sm:$0xff]
  %v111 = vld [vmem:[%s1 + $0x2e8] sm:$0xff]
  %v112 = vld [vmem:[%s1 + $0x2f0] sm:$0xff]
  %v113 = vld [vmem:[%s1 + $0x2f8] sm:$0xff]
  %v114 = vld [vmem:[%s1 + $0x300] sm:$0xff]
  %v115 = vld [vmem:[%s1 + $0x308] sm:$0xff]
  %v116 = vld [vmem:[%s1 + $0x310] sm:$0xff]
  %v117 = vld [vmem:[%s1 + $0x318] sm:$0xff]
  %v118 = vld [vmem:[%s1 + $0x320] sm:$0xff]
  %v119 = vld [vmem:[%s1 + $0x328] sm:$0xff]
  %v120 = vld [vmem:[%s1 + $0x330] sm:$0xff]
  %v121 = vld [vmem:[%s1 + $0x338] sm:$0xff]
  %v122 = vld [vmem:[%s1 + $0x340] sm:$0xff]
  %v123 = vld [vmem:[%s1 + $0x348] sm:$0xff]
  %v124 = vld [vmem:[%s1 + $0x350] sm:$0xff]
  %v125 = vld [vmem:[%s1 + $0x358] sm:$0xff]
  %v126 = vld [vmem:[%s1 + $0x360] sm:$0xff]
  %v127 = vld [vmem:[%s1 + $0x368] sm:$0xff]
  %v128 = vld [vmem:[%s1 + $0x370] sm:$0xff]
  %v129 = vld [vmem:[%s1 + $0x378] sm:$0xff]
  %v130 = vld [vmem:[%s1 + $0x380] sm:$0xff]
  %v131 = vld [vmem:[%s1 + $0x388] sm:$0xff]
  %v132 = vld [vmem:[%s1 + $0x390] sm:$0xff]
  %v133 = vld [vmem:[%s1 + $0x398] sm:$0xff]
  %v134 = vld [vmem:[%s1 + $0x3a0] sm:$0xff]
  %v135 = vld [vmem:[%s1 + $0x3a8] sm:$0xff]
  %v136 = vld [vmem:[%s1 + $0x3b0] sm:$0xff]
  %v137 = vld [vmem:[%s1 + $0x3b8] sm:$0xff]
  %v138 = vld [vmem:[%s1 + $0x3c0] sm:$0xff]
  %v139 = vld [vmem:[%s1 + $0x3c8] sm:$0xff]
  %v140 = vld [vmem:[%s1 + $0x3d0] sm:$0xff]
  %v141 = vld [vmem:[%s1 + $0x3d8] sm:$0xff]
  %v142 = vld [vmem:[%s1 + $0x3e0] sm:$0xff]
  %v143 = vld [vmem:[%s1 + $0x3e8] sm:$0xff]
  %v144 = vld [vmem:[%s1 + $0x3f0] sm:$0xff]
  %v145 = vld [vmem:[%s1 + $0x3f8] sm:$0xff]
  %v146 = vld [vmem:[%s1 + $0x400] sm:$0xff]
  %v147 = vld [vmem:[%s1 + $0x408] sm:$0xff]
  %v148 = vld [vmem:[%s1 + $0x410] sm:$0xff]
  %v149 = vld [vmem:[%s1 + $0x418] sm:$0xff]
  %v150 = vld [vmem:[%s1 + $0x420] sm:$0xff]
  %v151 = vld [vmem:[%s1 + $0x428] sm:$0xff]
  %v152 = vld [vmem:[%s1 + $0x430] sm:$0xff]
  %v153 = vld [vmem:[%s1 + $0x438] sm:$0xff]
  %v154 = vld [vmem:[%s1 + $0x440] sm:$0xff]
  %v155 = vld [vmem:[%s1 + $0x448] sm:$0xff]
  %v156 = vld [vmem:[%s1 + $0x450] sm:$0xff]
  %v157 = vld [vmem:[%s1 + $0x458] sm:$0xff]
  %v158 = vld [vmem:[%s1 + $0x460] sm:$0xff]
  %v159 = vld [vmem:[%s1 + $0x468] sm:$0xff]
  %v160 = vld [vmem:[%s1 + $0x470] sm:$0xff]
  %v161 = vld [vmem:[%s1 + $0x478] sm:$0xff]
  %v162 = vld [vmem:[%s1 + $0x480] sm:$0xff]
  %v163 = vld [vmem:[%s1 + $0x488] sm:$0xff]
  %v164 = vld [vmem:[%s1 + $0x490] sm:$0xff]
  %v165 = vld [vmem:[%s1 + $0x498] sm:$0xff]
  %v166 = vld [vmem:[%s1 + $0x4a0] sm:$0xff]
  %v167 = vld [vmem:[%s1 + $0x4a8] sm:$0xff]
  %v168 = vld [vmem:[%s1 + $0x4b0] sm:$0xff]
  %v169 = vld [vmem:[%s1 + $0x4b8] sm:$0xff]
  %v170 = vld [vmem:[%s1 + $0x4c0] sm:$0xff]
  %v171 = vld [vmem:[%s1 + $0x4c8] sm:$0xff]
  %v172 = vld [vmem:[%s1 + $0x4d0] sm:$0xff]
  %v173 = vld [vmem:[%s1 + $0x4d8] sm:$0xff]
  %v174 = vld [vmem:[%s1 + $0x4e0] sm:$0xff]
  %v175 = vld [vmem:[%s1 + $0x4e8] sm:$0xff]
  %v176 = vld [vmem:[%s1 + $0x4f0] sm:$0xff]
  %v177 = vld [vmem:[%s1 + $0x4f8] sm:$0xff]
  %v178 = vld [vmem:[%s1 + $0x500] sm:$0xff]
  %v179 = vld [vmem:[%s1 + $0x508] sm:$0xff]
  %v180 = vld [vmem:[%s1 + $0x510] sm:$0xff]
  %v181 = vld [vmem:[%s1 + $0x518] sm:$0xff]
  %v182 = vld [vmem:[%s1 + $0x520] sm:$0xff]
  %v183 = vld [vmem:[%s1 + $0x528] sm:$0xff]
  %v184 = vld [vmem:[%s1 + $0x530] sm:$0xff]
  %v185 = vld [vmem:[%s1 + $0x538] sm:$0xff]
  %v186 = vld [vmem:[%s1 + $0x540] sm:$0xff]
  %v187 = vld [vmem:[%s1 + $0x548] sm:$0xff]
  %v188 = vld [vmem:[%s1 + $0x550] sm:$0xff]
  %v189 = vld [vmem:[%s1 + $0x558] sm:$0xff]
  %v190 = vld [vmem:[%s1 + $0x560] sm:$0xff]
  %v191 = vld [vmem:[%s1 + $0x568] sm:$0xff]
  %v192 = vld [vmem:[%s1 + $0x570] sm:$0xff]
  %v193 = vld [vmem:[%s1 + $0x578] sm:$0xff]
  %v194 = vld [vmem:[%s1 + $0x580] sm:$0xff]
  %v195 = vld [vmem:[%s1 + $0x588] sm:$0xff]
  %v196 = vld [vmem:[%s1 + $0x590] sm:$0xff]
  %v197 = vld [vmem:[%s1 + $0x598] sm:$0xff]
  %v198 = vld [vmem:[%s1 + $0x5a0] sm:$0xff]
  %v199 = vld [vmem:[%s1 + $0x5a8] sm:$0xff]
  %v200 = vld [vmem:[%s1 + $0x5b0] sm:$0xff]
  %v201 = vld [vmem:[%s1 + $0x5b8] sm:$0xff]
  %v202 = vld [vmem:[%s1 + $0x5c0] sm:$0xff]
  %v203 = vld [vmem:[%s1 + $0x5c8] sm:$0xff]
  %v204 = vld [vmem:[%s1 + $0x5d0] sm:$0xff]
  %v205 = vld [vmem:[%s1 + $0x5d8] sm:$0xff]
  %v206 = vld [vmem:[%s1 + $0x5e0] sm:$0xff]
  %v207 = vld [vmem:[%s1 + $0x5e8] sm:$0xff]
  %v208 = vld [vmem:[%s1 + $0x5f0] sm:$0xff]
  %v209 = vld [vmem:[%s1 + $0x5f8] sm:$0xff]
  %v210 = vld [vmem:[%s1 + $0x600] sm:$0xff]
  %v211 = vld [vmem:[%s1 + $0x608] sm:$0xff]
  %v212 = vld [vmem:[%s1 + $0x610] sm:$0xff]
  %v213 = vld [vmem:[%s1 + $0x618] sm:$0xff]
  %v214 = vld [vmem:[%s1 + $0x620] sm:$0xff]
  %v215 = vld [vmem:[%s1 + $0x628] sm:$0xff]
  %v216 = vld [vmem:[%s1 + $0x630] sm:$0xff]
  %v217 = vld [vmem:[%s1 + $0x638] sm:$0xff]
  %v218 = vld [vmem:[%s1 + $0x640] sm:$0xff]
  %v219 = vld [vmem:[%s1 + $0x648] sm:$0xff]
  %v220 = vld [vmem:[%s1 + $0x650] sm:$0xff]
  %v221 = vld [vmem:[%s1 + $0x658] sm:$0xff]
  %v222 = vld [vmem:[%s1 + $0x660] sm:$0xff]
  %v223 = vld [vmem:[%s1 + $0x668] sm:$0xff]
  %v224 = vld [vmem:[%s1 + $0x670] sm:$0xff]
  %v225 = vld [vmem:[%s1 + $0x678] sm:$0xff]
  %v226 = vld [vmem:[%s1 + $0x680] sm:$0xff]
  %v227 = vld [vmem:[%s1 + $0x688] sm:$0xff]
  %v228 = vld [vmem:[%s1 + $0x690] sm:$0xff]
  %v229 = vld [vmem:[%s1 + $0x698] sm:$0xff]
  %v230 = vld [vmem:[%s1 + $0x6a0] sm:$0xff]
  %v231 = vld [vmem:[%s1 + $0x6a8] sm:$0xff]
  %v232 = vld [vmem:[%s1 + $0x6b0] sm:$0xff]
  %v233 = vld [vmem:[%s1 + $0x6b8] sm:$0xff]
  %v234 = vld [vmem:[%s1 + $0x6c0] sm:$0xff]
  %v235 = vld [vmem:[%s1 + $0x6c8] sm:$0xff]
  %v236 = vld [vmem:[%s1 + $0x6d0] sm:$0xff]
  %v237 = vld [vmem:[%s1 + $0x6d8] sm:$0xff]
  %v238 = vld [vmem:[%s1 + $0x6e0] sm:$0xff]
  %v239 = vld [vmem:[%s1 + $0x6e8] sm:$0xff]
  %v240 = vld [vmem:[%s1 + $0x6f0] sm:$0xff]
  %v241 = vld [vmem:[%s1 + $0x6f8] sm:$0xff]
  %v242 = vld [vmem:[%s1 + $0x700] sm:$0xff]
  %v243 = vld [vmem:[%s1 + $0x708] sm:$0xff]
  %v244 = vld [vmem:[%s1 + $0x710] sm:$0xff]
  %v245 = vld [vmem:[%s1 + $0x718] sm:$0xff]
  %v246 = vld [vmem:[%s1 + $0x720] sm:$0xff]
  %v247 = vld [vmem:[%s1 + $0x728] sm:$0xff]
  %v248 = vld [vmem:[%s1 + $0x730] sm:$0xff]
  %v249 = vld [vmem:[%s1 + $0x738] sm:$0xff]
  %v250 = vld [vmem:[%s1 + $0x740] sm:$0xff]
  %v251 = vld [vmem:[%s1 + $0x748] sm:$0xff]
  %v252 = vld [vmem:[%s1 + $0x750] sm:$0xff]
  %v253 = vld [vmem:[%s1 + $0x758] sm:$0xff]
  %v254 = vld [vmem:[%s1 + $0x760] sm:$0xff]
  %v255 = vld [vmem:[%s1 + $0x768] sm:$0xff]
  %v256 = vld [vmem:[%s1 + $0x770] sm:$0xff]
  %v257 = vld [vmem:[%s1 + $0x778] sm:$0xff]
  %v258 = vld [vmem:[%s1 + $0x780] sm:$0xff]
  %v259 = vld [vmem:[%s1 + $0x788] sm:$0xff]
  %v260 = vld [vmem:[%s1 + $0x790] sm:$0xff]
  %v261 = vld [vmem:[%s1 + $0x798] sm:$0xff]
  %v262 = vld [vmem:[%s1 + $0x7a0] sm:$0xff]
  %v263 = vld [vmem:[%s1 + $0x7a8] sm:$0xff]
  %v264 = vld [vmem:[%s1 + $0x7b0] sm:$0xff]
  %v265 = vld [vmem:[%s1 + $0x7b8] sm:$0xff]
  %v266 = vld [vmem:[%s1 + $0x7c0] sm:$0xff]
  %v267 = vld [vmem:[%s1 + $0x7c8] sm:$0xff]
  %v268 = vld [vmem:[%s1 + $0x7d0] sm:$0xff]
  %v269 = vld [vmem:[%s1 + $0x7d8] sm:$0xff]
  %v270 = vld [vmem:[%s1 + $0x7e0] sm:$0xff]
  %v271 = vld [vmem:[%s1 + $0x7e8] sm:$0xff]
  %v272 = vld [vmem:[%s1 + $0x7f0] sm:$0xff]
  %v273 = vld [vmem:[%s1 + $0x7f8] sm:$0xff]
  %v274 = vld [vmem:[%s1 + $0x800] sm:$0xff]
  %v275 = vld [vmem:[%s1 + $0x808] sm:$0xff]
  %v276 = vld [vmem:[%s1 + $0x810] sm:$0xff]
  %v277 = vld [vmem:[%s1 + $0x818] sm:$0xff]
  %v278 = vld [vmem:[%s1 + $0x820] sm:$0xff]
  %v279 = vld [vmem:[%s1 + $0x828] sm:$0xff]
  %v280 = vld [vmem:[%s1 + $0x830] sm:$0xff]
  %v281 = vld [vmem:[%s1 + $0x838] sm:$0xff]
  %v282 = vld [vmem:[%s1 + $0x840] sm:$0xff]
  %v283 = vld [vmem:[%s1 + $0x848] sm:$0xff]
  %v284 = vld [vmem:[%s1 + $0x850] sm:$0xff]
  %v285 = vld [vmem:[%s1 + $0x858] sm:$0xff]
  %v286 = vld [vmem:[%s1 + $0x860] sm:$0xff]
  %v287 = vld [vmem:[%s1 + $0x868] sm:$0xff]
  %v288 = vld [vmem:[%s1 + $0x870] sm:$0xff]
  %v289 = vld [vmem:[%s1 + $0x878] sm:$0xff]
  %v290 = vld [vmem:[%s1 + $0x880] sm:$0xff]
  %v291 = vld [vmem:[%s1 + $0x888] sm:$0xff]
  %v292 = vld [vmem:[%s1 + $0x890] sm:$0xff]
  %v293 = vld [vmem:[%s1 + $0x898] sm:$0xff]
  %v294 = vld [vmem:[%s1 + $0x8a0] sm:$0xff]
  %v295 = vld [vmem:[%s1 + $0x8a8] sm:$0xff]
  %v296 = vld [vmem:[%s1 + $0x8b0] sm:$0xff]
  %v297 = vld [vmem:[%s1 + $0x8b8] sm:$0xff]
  %v298 = vld [vmem:[%s1 + $0x8c0] sm:$0xff]
  %v299 = vld [vmem:[%s1 + $0x8c8] sm:$0xff]
  %v300 = vld [vmem:[%s1 + $0x8d0] sm:$0xff]
  %v301 = vld [vmem:[%s1 + $0x8d8] sm:$0xff]
  %v302 = vld [vmem:[%s1 + $0x8e0] sm:$0xff]
  %v303 = vld [vmem:[%s1 + $0x8e8] sm:$0xff]
  %v304 = vld [vmem:[%s1 + $0x8f0] sm:$0xff]
  %v305 = vld [vmem:[%s1 + $0x8f8] sm:$0xff]
  %v312 = vunpack.c.l.b16 %v12
  %v313 = vunpack.c.h.b16 %v12
  %v314 = vunpack.c.l.b16 %v13
  %v315 = vunpack.c.h.b16 %v13
  %v316 = vunpack.c.l.b16 %v14
  %v317 = vunpack.c.l.b16 %v15
  %v318 = vunpack.c.h.b16 %v15
  %v319 = vunpack.c.l.b16 %v16
  %v320 = vunpack.c.h.b16 %v16
  %v321 = vunpack.c.l.b16 %v17
  %v322 = vpack.c.b16 %v317, %v312
  %v323 = vpack.c.b16 %v318, %v313
  %v324 = vpack.c.b16 %v319, %v314
  %v325 = vpack.c.b16 %v320, %v315
  %v326 = vpack.c.b16 %v321, %v316
  %v619 = vunpack.c.l.b16 %v18
  %v620 = vunpack.c.h.b16 %v18
  %v621 = vunpack.c.l.b16 %v19
  %v622 = vunpack.c.h.b16 %v19
  %v623 = vunpack.c.l.b16 %v20
  %v624 = vunpack.c.h.b16 %v20
  %v625 = vunpack.c.l.b16 %v21
  %v626 = vunpack.c.h.b16 %v21
  %v627 = vunpack.c.l.b16 %v22
  %v628 = vunpack.c.h.b16 %v22
  %v629 = vunpack.c.l.b16 %v23
  %v630 = vunpack.c.h.b16 %v23
  %v631 = vunpack.c.l.b16 %v24
  %v632 = vunpack.c.h.b16 %v24
  %v633 = vunpack.c.l.b16 %v25
  %v634 = vunpack.c.h.b16 %v25
  %v635 = vunpack.c.l.b16 %v26
  %v636 = vunpack.c.h.b16 %v26
  %v637 = vunpack.c.l.b16 %v27
  %v638 = vunpack.c.h.b16 %v27
  %v639 = vunpack.c.l.b16 %v28
  %v640 = vunpack.c.h.b16 %v28
  %v641 = vunpack.c.l.b16 %v29
  %v642 = vunpack.c.h.b16 %v29
  %v643 = vunpack.c.l.b16 %v30
  %v644 = vunpack.c.h.b16 %v30
  %v645 = vunpack.c.l.b16 %v31
  %v646 = vunpack.c.h.b16 %v31
  %v647 = vunpack.c.l.b16 %v32
  %v648 = vunpack.c.h.b16 %v32
  %v649 = vunpack.c.l.b16 %v33
  %v650 = vunpack.c.h.b16 %v33
  %v651 = vunpack.c.l.b16 %v34
  %v652 = vunpack.c.h.b16 %v34
  %v653 = vunpack.c.l.b16 %v35
  %v654 = vunpack.c.h.b16 %v35
  %v655 = vunpack.c.l.b16 %v36
  %v656 = vunpack.c.h.b16 %v36
  %v657 = vunpack.c.l.b16 %v37
  %v658 = vunpack.c.h.b16 %v37
  %v659 = vunpack.c.l.b16 %v38
  %v660 = vunpack.c.h.b16 %v38
  %v661 = vunpack.c.l.b16 %v39
  %v662 = vunpack.c.h.b16 %v39
  %v663 = vunpack.c.l.b16 %v40
  %v664 = vunpack.c.h.b16 %v40
  %v665 = vunpack.c.l.b16 %v41
  %v666 = vunpack.c.h.b16 %v41
  %v667 = vunpack.c.l.b16 %v42
  %v668 = vunpack.c.h.b16 %v42
  %v669 = vunpack.c.l.b16 %v43
  %v670 = vunpack.c.h.b16 %v43
  %v671 = vunpack.c.l.b16 %v44
  %v672 = vunpack.c.h.b16 %v44
  %v673 = vunpack.c.l.b16 %v45
  %v674 = vunpack.c.h.b16 %v45
  %v675 = vunpack.c.l.b16 %v46
  %v676 = vunpack.c.h.b16 %v46
  %v677 = vunpack.c.l.b16 %v47
  %v678 = vunpack.c.h.b16 %v47
  %v679 = vunpack.c.l.b16 %v48
  %v680 = vunpack.c.h.b16 %v48
  %v681 = vunpack.c.l.b16 %v49
  %v682 = vunpack.c.h.b16 %v49
  %v683 = vunpack.c.l.b16 %v50
  %v684 = vunpack.c.h.b16 %v50
  %v685 = vunpack.c.l.b16 %v51
  %v686 = vunpack.c.h.b16 %v51
  %v687 = vunpack.c.l.b16 %v52
  %v688 = vunpack.c.h.b16 %v52
  %v689 = vunpack.c.l.b16 %v53
  %v690 = vunpack.c.h.b16 %v53
  %v691 = vunpack.c.l.b16 %v54
  %v692 = vunpack.c.h.b16 %v54
  %v693 = vunpack.c.l.b16 %v55
  %v694 = vunpack.c.h.b16 %v55
  %v695 = vunpack.c.l.b16 %v56
  %v696 = vunpack.c.h.b16 %v56
  %v697 = vunpack.c.l.b16 %v57
  %v698 = vunpack.c.h.b16 %v57
  %v699 = vunpack.c.l.b16 %v58
  %v700 = vunpack.c.h.b16 %v58
  %v701 = vunpack.c.l.b16 %v59
  %v702 = vunpack.c.h.b16 %v59
  %v703 = vunpack.c.l.b16 %v60
  %v704 = vunpack.c.h.b16 %v60
  %v705 = vunpack.c.l.b16 %v61
  %v706 = vunpack.c.h.b16 %v61
  %v707 = vunpack.c.l.b16 %v62
  %v708 = vunpack.c.h.b16 %v62
  %v709 = vunpack.c.l.b16 %v63
  %v710 = vunpack.c.h.b16 %v63
  %v711 = vunpack.c.l.b16 %v64
  %v712 = vunpack.c.h.b16 %v64
  %v713 = vunpack.c.l.b16 %v65
  %v714 = vunpack.c.h.b16 %v65
  %v715 = vunpack.c.l.b16 %v66
  %v716 = vunpack.c.h.b16 %v66
  %v717 = vunpack.c.l.b16 %v67
  %v718 = vunpack.c.h.b16 %v67
  %v719 = vunpack.c.l.b16 %v68
  %v720 = vunpack.c.h.b16 %v68
  %v721 = vunpack.c.l.b16 %v69
  %v722 = vunpack.c.h.b16 %v69
  %v723 = vunpack.c.l.b16 %v70
  %v724 = vunpack.c.h.b16 %v70
  %v725 = vunpack.c.l.b16 %v71
  %v726 = vunpack.c.h.b16 %v71
  %v727 = vunpack.c.l.b16 %v72
  %v728 = vunpack.c.h.b16 %v72
  %v729 = vunpack.c.l.b16 %v73
  %v730 = vunpack.c.h.b16 %v73
  %v731 = vunpack.c.l.b16 %v74
  %v732 = vunpack.c.h.b16 %v74
  %v733 = vunpack.c.l.b16 %v75
  %v734 = vunpack.c.h.b16 %v75
  %v735 = vunpack.c.l.b16 %v76
  %v736 = vunpack.c.h.b16 %v76
  %v737 = vunpack.c.l.b16 %v77
  %v738 = vunpack.c.h.b16 %v77
  %v739 = vunpack.c.l.b16 %v78
  %v740 = vunpack.c.h.b16 %v78
  %v741 = vunpack.c.l.b16 %v79
  %v742 = vunpack.c.h.b16 %v79
  %v743 = vunpack.c.l.b16 %v80
  %v744 = vunpack.c.h.b16 %v80
  %v745 = vunpack.c.l.b16 %v81
  %v746 = vunpack.c.h.b16 %v81
  %v747 = vunpack.c.l.b16 %v82
  %v748 = vunpack.c.h.b16 %v82
  %v749 = vunpack.c.l.b16 %v83
  %v750 = vunpack.c.h.b16 %v83
  %v751 = vunpack.c.l.b16 %v84
  %v752 = vunpack.c.h.b16 %v84
  %v753 = vunpack.c.l.b16 %v85
  %v754 = vunpack.c.h.b16 %v85
  %v755 = vunpack.c.l.b16 %v86
  %v756 = vunpack.c.h.b16 %v86
  %v757 = vunpack.c.l.b16 %v87
  %v758 = vunpack.c.h.b16 %v87
  %v759 = vunpack.c.l.b16 %v88
  %v760 = vunpack.c.h.b16 %v88
  %v761 = vunpack.c.l.b16 %v89
  %v762 = vunpack.c.h.b16 %v89
  %v763 = vunpack.c.l.b16 %v90
  %v764 = vunpack.c.h.b16 %v90
  %v765 = vunpack.c.l.b16 %v91
  %v766 = vunpack.c.h.b16 %v91
  %v767 = vunpack.c.l.b16 %v92
  %v768 = vunpack.c.h.b16 %v92
  %v769 = vunpack.c.l.b16 %v93
  %v770 = vunpack.c.h.b16 %v93
  %v771 = vunpack.c.l.b16 %v94
  %v772 = vunpack.c.h.b16 %v94
  %v773 = vunpack.c.l.b16 %v95
  %v774 = vunpack.c.h.b16 %v95
  %v775 = vunpack.c.l.b16 %v96
  %v776 = vunpack.c.h.b16 %v96
  %v777 = vunpack.c.l.b16 %v97
  %v778 = vunpack.c.h.b16 %v97
  %v779 = vunpack.c.l.b16 %v98
  %v780 = vunpack.c.h.b16 %v98
  %v781 = vunpack.c.l.b16 %v99
  %v782 = vunpack.c.h.b16 %v99
  %v783 = vunpack.c.l.b16 %v100
  %v784 = vunpack.c.h.b16 %v100
  %v785 = vunpack.c.l.b16 %v101
  %v786 = vunpack.c.h.b16 %v101
  %v787 = vunpack.c.l.b16 %v102
  %v788 = vunpack.c.h.b16 %v102
  %v789 = vunpack.c.l.b16 %v103
  %v790 = vunpack.c.h.b16 %v103
  %v791 = vunpack.c.l.b16 %v104
  %v792 = vunpack.c.h.b16 %v104
  %v793 = vunpack.c.l.b16 %v105
  %v794 = vunpack.c.h.b16 %v105
  %v795 = vunpack.c.l.b16 %v106
  %v796 = vunpack.c.h.b16 %v106
  %v797 = vunpack.c.l.b16 %v107
  %v798 = vunpack.c.h.b16 %v107
  %v799 = vunpack.c.l.b16 %v108
  %v800 = vunpack.c.h.b16 %v108
  %v801 = vunpack.c.l.b16 %v109
  %v802 = vunpack.c.h.b16 %v109
  %v803 = vunpack.c.l.b16 %v110
  %v804 = vunpack.c.h.b16 %v110
  %v805 = vunpack.c.l.b16 %v111
  %v806 = vunpack.c.h.b16 %v111
  %v807 = vunpack.c.l.b16 %v112
  %v808 = vunpack.c.h.b16 %v112
  %v809 = vunpack.c.l.b16 %v113
  %v810 = vunpack.c.h.b16 %v113
  %v811 = vunpack.c.l.b16 %v114
  %v812 = vunpack.c.h.b16 %v114
  %v813 = vunpack.c.l.b16 %v115
  %v814 = vunpack.c.h.b16 %v115
  %v815 = vunpack.c.l.b16 %v116
  %v816 = vunpack.c.h.b16 %v116
  %v817 = vunpack.c.l.b16 %v117
  %v818 = vunpack.c.h.b16 %v117
  %v819 = vunpack.c.l.b16 %v118
  %v820 = vunpack.c.h.b16 %v118
  %v821 = vunpack.c.l.b16 %v119
  %v822 = vunpack.c.h.b16 %v119
  %v823 = vunpack.c.l.b16 %v120
  %v824 = vunpack.c.h.b16 %v120
  %v825 = vunpack.c.l.b16 %v121
  %v826 = vunpack.c.h.b16 %v121
  %v827 = vunpack.c.l.b16 %v122
  %v828 = vunpack.c.h.b16 %v122
  %v829 = vunpack.c.l.b16 %v123
  %v830 = vunpack.c.h.b16 %v123
  %v831 = vunpack.c.l.b16 %v124
  %v832 = vunpack.c.h.b16 %v124
  %v833 = vunpack.c.l.b16 %v125
  %v834 = vunpack.c.h.b16 %v125
  %v835 = vunpack.c.l.b16 %v126
  %v836 = vunpack.c.h.b16 %v126
  %v837 = vunpack.c.l.b16 %v127
  %v838 = vunpack.c.h.b16 %v127
  %v839 = vunpack.c.l.b16 %v128
  %v840 = vunpack.c.h.b16 %v128
  %v841 = vunpack.c.l.b16 %v129
  %v842 = vunpack.c.h.b16 %v129
  %v843 = vunpack.c.l.b16 %v130
  %v844 = vunpack.c.h.b16 %v130
  %v845 = vunpack.c.l.b16 %v131
  %v846 = vunpack.c.h.b16 %v131
  %v847 = vunpack.c.l.b16 %v132
  %v848 = vunpack.c.h.b16 %v132
  %v849 = vunpack.c.l.b16 %v133
  %v850 = vunpack.c.h.b16 %v133
  %v851 = vunpack.c.l.b16 %v134
  %v852 = vunpack.c.h.b16 %v134
  %v853 = vunpack.c.l.b16 %v135
  %v854 = vunpack.c.h.b16 %v135
  %v855 = vunpack.c.l.b16 %v136
  %v856 = vunpack.c.h.b16 %v136
  %v857 = vunpack.c.l.b16 %v137
  %v858 = vunpack.c.h.b16 %v137
  %v859 = vunpack.c.l.b16 %v138
  %v860 = vunpack.c.h.b16 %v138
  %v861 = vunpack.c.l.b16 %v139
  %v862 = vunpack.c.h.b16 %v139
  %v863 = vunpack.c.l.b16 %v140
  %v864 = vunpack.c.h.b16 %v140
  %v865 = vunpack.c.l.b16 %v141
  %v866 = vunpack.c.h.b16 %v141
  %v867 = vunpack.c.l.b16 %v142
  %v868 = vunpack.c.h.b16 %v142
  %v869 = vunpack.c.l.b16 %v143
  %v870 = vunpack.c.h.b16 %v143
  %v871 = vunpack.c.l.b16 %v144
  %v872 = vunpack.c.h.b16 %v144
  %v873 = vunpack.c.l.b16 %v145
  %v874 = vunpack.c.h.b16 %v145
  %v875 = vunpack.c.l.b16 %v146
  %v876 = vunpack.c.h.b16 %v146
  %v877 = vunpack.c.l.b16 %v147
  %v878 = vunpack.c.h.b16 %v147
  %v879 = vunpack.c.l.b16 %v148
  %v880 = vunpack.c.h.b16 %v148
  %v881 = vunpack.c.l.b16 %v149
  %v882 = vunpack.c.h.b16 %v149
  %v883 = vunpack.c.l.b16 %v150
  %v884 = vunpack.c.h.b16 %v150
  %v885 = vunpack.c.l.b16 %v151
  %v886 = vunpack.c.h.b16 %v151
  %v887 = vunpack.c.l.b16 %v152
  %v888 = vunpack.c.h.b16 %v152
  %v889 = vunpack.c.l.b16 %v153
  %v890 = vunpack.c.h.b16 %v153
  %v891 = vunpack.c.l.b16 %v154
  %v892 = vunpack.c.h.b16 %v154
  %v893 = vunpack.c.l.b16 %v155
  %v894 = vunpack.c.h.b16 %v155
  %v895 = vunpack.c.l.b16 %v156
  %v896 = vunpack.c.h.b16 %v156
  %v897 = vunpack.c.l.b16 %v157
  %v898 = vunpack.c.h.b16 %v157
  %v899 = vunpack.c.l.b16 %v158
  %v900 = vunpack.c.h.b16 %v158
  %v901 = vunpack.c.l.b16 %v159
  %v902 = vunpack.c.h.b16 %v159
  %v903 = vunpack.c.l.b16 %v160
  %v904 = vunpack.c.h.b16 %v160
  %v905 = vunpack.c.l.b16 %v161
  %v906 = vunpack.c.h.b16 %v161
  %v907 = vunpack.c.l.b16 %v162
  %v908 = vunpack.c.h.b16 %v162
  %v909 = vunpack.c.l.b16 %v163
  %v910 = vunpack.c.h.b16 %v163
  %v911 = vunpack.c.l.b16 %v164
  %v912 = vunpack.c.h.b16 %v164
  %v913 = vunpack.c.l.b16 %v165
  %v914 = vunpack.c.h.b16 %v165
  %v915 = vunpack.c.l.b16 %v166
  %v916 = vunpack.c.h.b16 %v166
  %v917 = vunpack.c.l.b16 %v167
  %v918 = vunpack.c.h.b16 %v167
  %v919 = vunpack.c.l.b16 %v168
  %v920 = vunpack.c.h.b16 %v168
  %v921 = vunpack.c.l.b16 %v169
  %v922 = vunpack.c.h.b16 %v169
  %v923 = vunpack.c.l.b16 %v170
  %v924 = vunpack.c.h.b16 %v170
  %v925 = vunpack.c.l.b16 %v171
  %v926 = vunpack.c.h.b16 %v171
  %v927 = vunpack.c.l.b16 %v172
  %v928 = vunpack.c.h.b16 %v172
  %v929 = vunpack.c.l.b16 %v173
  %v930 = vunpack.c.h.b16 %v173
  %v931 = vunpack.c.l.b16 %v174
  %v932 = vunpack.c.h.b16 %v174
  %v933 = vunpack.c.l.b16 %v175
  %v934 = vunpack.c.h.b16 %v175
  %v935 = vunpack.c.l.b16 %v176
  %v936 = vunpack.c.h.b16 %v176
  %v937 = vunpack.c.l.b16 %v177
  %v938 = vunpack.c.h.b16 %v177
  %v939 = vunpack.c.l.b16 %v178
  %v940 = vunpack.c.h.b16 %v178
  %v941 = vunpack.c.l.b16 %v179
  %v942 = vunpack.c.h.b16 %v179
  %v943 = vunpack.c.l.b16 %v180
  %v944 = vunpack.c.h.b16 %v180
  %v945 = vunpack.c.l.b16 %v181
  %v946 = vunpack.c.h.b16 %v181
  %v947 = vunpack.c.l.b16 %v182
  %v948 = vunpack.c.h.b16 %v182
  %v949 = vunpack.c.l.b16 %v183
  %v950 = vunpack.c.h.b16 %v183
  %v951 = vunpack.c.l.b16 %v184
  %v952 = vunpack.c.h.b16 %v184
  %v953 = vunpack.c.l.b16 %v185
  %v954 = vunpack.c.h.b16 %v185
  %v955 = vunpack.c.l.b16 %v186
  %v956 = vunpack.c.h.b16 %v186
  %v957 = vunpack.c.l.b16 %v187
  %v958 = vunpack.c.h.b16 %v187
  %v959 = vunpack.c.l.b16 %v188
  %v960 = vunpack.c.h.b16 %v188
  %v961 = vunpack.c.l.b16 %v189
  %v962 = vunpack.c.h.b16 %v189
  %v963 = vunpack.c.l.b16 %v190
  %v964 = vunpack.c.h.b16 %v190
  %v965 = vunpack.c.l.b16 %v191
  %v966 = vunpack.c.h.b16 %v191
  %v967 = vunpack.c.l.b16 %v192
  %v968 = vunpack.c.h.b16 %v192
  %v969 = vunpack.c.l.b16 %v193
  %v970 = vunpack.c.h.b16 %v193
  %v971 = vunpack.c.l.b16 %v194
  %v972 = vunpack.c.h.b16 %v194
  %v973 = vunpack.c.l.b16 %v195
  %v974 = vunpack.c.h.b16 %v195
  %v975 = vunpack.c.l.b16 %v196
  %v976 = vunpack.c.h.b16 %v196
  %v977 = vunpack.c.l.b16 %v197
  %v978 = vunpack.c.h.b16 %v197
  %v979 = vunpack.c.l.b16 %v198
  %v980 = vunpack.c.h.b16 %v198
  %v981 = vunpack.c.l.b16 %v199
  %v982 = vunpack.c.h.b16 %v199
  %v983 = vunpack.c.l.b16 %v200
  %v984 = vunpack.c.h.b16 %v200
  %v985 = vunpack.c.l.b16 %v201
  %v986 = vunpack.c.h.b16 %v201
  %v987 = vunpack.c.l.b16 %v202
  %v988 = vunpack.c.h.b16 %v202
  %v989 = vunpack.c.l.b16 %v203
  %v990 = vunpack.c.h.b16 %v203
  %v991 = vunpack.c.l.b16 %v204
  %v992 = vunpack.c.h.b16 %v204
  %v993 = vunpack.c.l.b16 %v205
  %v994 = vunpack.c.h.b16 %v205
  %v995 = vunpack.c.l.b16 %v206
  %v996 = vunpack.c.h.b16 %v206
  %v997 = vunpack.c.l.b16 %v207
  %v998 = vunpack.c.h.b16 %v207
  %v999 = vunpack.c.l.b16 %v208
  %v1000 = vunpack.c.h.b16 %v208
  %v1001 = vunpack.c.l.b16 %v209
  %v1002 = vunpack.c.h.b16 %v209
  %v1003 = vunpack.c.l.b16 %v210
  %v1004 = vunpack.c.h.b16 %v210
  %v1005 = vunpack.c.l.b16 %v211
  %v1006 = vunpack.c.h.b16 %v211
  %v1007 = vunpack.c.l.b16 %v212
  %v1008 = vunpack.c.h.b16 %v212
  %v1009 = vunpack.c.l.b16 %v213
  %v1010 = vunpack.c.h.b16 %v213
  %v1011 = vunpack.c.l.b16 %v214
  %v1012 = vunpack.c.h.b16 %v214
  %v1013 = vunpack.c.l.b16 %v215
  %v1014 = vunpack.c.h.b16 %v215
  %v1015 = vunpack.c.l.b16 %v216
  %v1016 = vunpack.c.h.b16 %v216
  %v1017 = vunpack.c.l.b16 %v217
  %v1018 = vunpack.c.h.b16 %v217
  %v1019 = vunpack.c.l.b16 %v218
  %v1020 = vunpack.c.h.b16 %v218
  %v1021 = vunpack.c.l.b16 %v219
  %v1022 = vunpack.c.h.b16 %v219
  %v1023 = vunpack.c.l.b16 %v220
  %v1024 = vunpack.c.h.b16 %v220
  %v1025 = vunpack.c.l.b16 %v221
  %v1026 = vunpack.c.h.b16 %v221
  %v1027 = vunpack.c.l.b16 %v222
  %v1028 = vunpack.c.h.b16 %v222
  %v1029 = vunpack.c.l.b16 %v223
  %v1030 = vunpack.c.h.b16 %v223
  %v1031 = vunpack.c.l.b16 %v224
  %v1032 = vunpack.c.h.b16 %v224
  %v1033 = vunpack.c.l.b16 %v225
  %v1034 = vunpack.c.h.b16 %v225
  %v1035 = vunpack.c.l.b16 %v226
  %v1036 = vunpack.c.h.b16 %v226
  %v1037 = vunpack.c.l.b16 %v227
  %v1038 = vunpack.c.h.b16 %v227
  %v1039 = vunpack.c.l.b16 %v228
  %v1040 = vunpack.c.h.b16 %v228
  %v1041 = vunpack.c.l.b16 %v229
  %v1042 = vunpack.c.h.b16 %v229
  %v1043 = vunpack.c.l.b16 %v230
  %v1044 = vunpack.c.h.b16 %v230
  %v1045 = vunpack.c.l.b16 %v231
  %v1046 = vunpack.c.h.b16 %v231
  %v1047 = vunpack.c.l.b16 %v232
  %v1048 = vunpack.c.h.b16 %v232
  %v1049 = vunpack.c.l.b16 %v233
  %v1050 = vunpack.c.h.b16 %v233
  %v1051 = vunpack.c.l.b16 %v234
  %v1052 = vunpack.c.h.b16 %v234
  %v1053 = vunpack.c.l.b16 %v235
  %v1054 = vunpack.c.h.b16 %v235
  %v1055 = vunpack.c.l.b16 %v236
  %v1056 = vunpack.c.h.b16 %v236
  %v1057 = vunpack.c.l.b16 %v237
  %v1058 = vunpack.c.h.b16 %v237
  %v1059 = vunpack.c.l.b16 %v238
  %v1060 = vunpack.c.h.b16 %v238
  %v1061 = vunpack.c.l.b16 %v239
  %v1062 = vunpack.c.h.b16 %v239
  %v1063 = vunpack.c.l.b16 %v240
  %v1064 = vunpack.c.h.b16 %v240
  %v1065 = vunpack.c.l.b16 %v241
  %v1066 = vunpack.c.h.b16 %v241
  %v1067 = vunpack.c.l.b16 %v242
  %v1068 = vunpack.c.h.b16 %v242
  %v1069 = vunpack.c.l.b16 %v243
  %v1070 = vunpack.c.h.b16 %v243
  %v1071 = vunpack.c.l.b16 %v244
  %v1072 = vunpack.c.h.b16 %v244
  %v1073 = vunpack.c.l.b16 %v245
  %v1074 = vunpack.c.h.b16 %v245
  %v1075 = vunpack.c.l.b16 %v246
  %v1076 = vunpack.c.h.b16 %v246
  %v1077 = vunpack.c.l.b16 %v247
  %v1078 = vunpack.c.h.b16 %v247
  %v1079 = vunpack.c.l.b16 %v248
  %v1080 = vunpack.c.h.b16 %v248
  %v1081 = vunpack.c.l.b16 %v249
  %v1082 = vunpack.c.h.b16 %v249
  %v1083 = vunpack.c.l.b16 %v250
  %v1084 = vunpack.c.h.b16 %v250
  %v1085 = vunpack.c.l.b16 %v251
  %v1086 = vunpack.c.h.b16 %v251
  %v1087 = vunpack.c.l.b16 %v252
  %v1088 = vunpack.c.h.b16 %v252
  %v1089 = vunpack.c.l.b16 %v253
  %v1090 = vunpack.c.h.b16 %v253
  %v1091 = vunpack.c.l.b16 %v254
  %v1092 = vunpack.c.h.b16 %v254
  %v1093 = vunpack.c.l.b16 %v255
  %v1094 = vunpack.c.h.b16 %v255
  %v1095 = vunpack.c.l.b16 %v256
  %v1096 = vunpack.c.h.b16 %v256
  %v1097 = vunpack.c.l.b16 %v257
  %v1098 = vunpack.c.h.b16 %v257
  %v1099 = vunpack.c.l.b16 %v258
  %v1100 = vunpack.c.h.b16 %v258
  %v1101 = vunpack.c.l.b16 %v259
  %v1102 = vunpack.c.h.b16 %v259
  %v1103 = vunpack.c.l.b16 %v260
  %v1104 = vunpack.c.h.b16 %v260
  %v1105 = vunpack.c.l.b16 %v261
  %v1106 = vunpack.c.h.b16 %v261
  %v1107 = vunpack.c.l.b16 %v262
  %v1108 = vunpack.c.h.b16 %v262
  %v1109 = vunpack.c.l.b16 %v263
  %v1110 = vunpack.c.h.b16 %v263
  %v1111 = vunpack.c.l.b16 %v264
  %v1112 = vunpack.c.h.b16 %v264
  %v1113 = vunpack.c.l.b16 %v265
  %v1114 = vunpack.c.h.b16 %v265
  %v1115 = vunpack.c.l.b16 %v266
  %v1116 = vunpack.c.h.b16 %v266
  %v1117 = vunpack.c.l.b16 %v267
  %v1118 = vunpack.c.h.b16 %v267
  %v1119 = vunpack.c.l.b16 %v268
  %v1120 = vunpack.c.h.b16 %v268
  %v1121 = vunpack.c.l.b16 %v269
  %v1122 = vunpack.c.h.b16 %v269
  %v1123 = vunpack.c.l.b16 %v270
  %v1124 = vunpack.c.h.b16 %v270
  %v1125 = vunpack.c.l.b16 %v271
  %v1126 = vunpack.c.h.b16 %v271
  %v1127 = vunpack.c.l.b16 %v272
  %v1128 = vunpack.c.h.b16 %v272
  %v1129 = vunpack.c.l.b16 %v273
  %v1130 = vunpack.c.h.b16 %v273
  %v1131 = vunpack.c.l.b16 %v274
  %v1132 = vunpack.c.h.b16 %v274
  %v1133 = vunpack.c.l.b16 %v275
  %v1134 = vunpack.c.h.b16 %v275
  %v1135 = vunpack.c.l.b16 %v276
  %v1136 = vunpack.c.h.b16 %v276
  %v1137 = vunpack.c.l.b16 %v277
  %v1138 = vunpack.c.h.b16 %v277
  %v1139 = vunpack.c.l.b16 %v278
  %v1140 = vunpack.c.h.b16 %v278
  %v1141 = vunpack.c.l.b16 %v279
  %v1142 = vunpack.c.h.b16 %v279
  %v1143 = vunpack.c.l.b16 %v280
  %v1144 = vunpack.c.h.b16 %v280
  %v1145 = vunpack.c.l.b16 %v281
  %v1146 = vunpack.c.h.b16 %v281
  %v1147 = vunpack.c.l.b16 %v282
  %v1148 = vunpack.c.h.b16 %v282
  %v1149 = vunpack.c.l.b16 %v283
  %v1150 = vunpack.c.h.b16 %v283
  %v1151 = vunpack.c.l.b16 %v284
  %v1152 = vunpack.c.h.b16 %v284
  %v1153 = vunpack.c.l.b16 %v285
  %v1154 = vunpack.c.h.b16 %v285
  %v1155 = vunpack.c.l.b16 %v286
  %v1156 = vunpack.c.h.b16 %v286
  %v1157 = vunpack.c.l.b16 %v287
  %v1158 = vunpack.c.h.b16 %v287
  %v1159 = vunpack.c.l.b16 %v288
  %v1160 = vunpack.c.h.b16 %v288
  %v1161 = vunpack.c.l.b16 %v289
  %v1162 = vunpack.c.h.b16 %v289
  %v1163 = vunpack.c.l.b16 %v290
  %v1164 = vunpack.c.h.b16 %v290
  %v1165 = vunpack.c.l.b16 %v291
  %v1166 = vunpack.c.h.b16 %v291
  %v1167 = vunpack.c.l.b16 %v292
  %v1168 = vunpack.c.h.b16 %v292
  %v1169 = vunpack.c.l.b16 %v293
  %v1170 = vunpack.c.h.b16 %v293
  %v1171 = vunpack.c.l.b16 %v294
  %v1172 = vunpack.c.h.b16 %v294
  %v1173 = vunpack.c.l.b16 %v295
  %v1174 = vunpack.c.h.b16 %v295
  %v1175 = vunpack.c.l.b16 %v296
  %v1176 = vunpack.c.h.b16 %v296
  %v1177 = vunpack.c.l.b16 %v297
  %v1178 = vunpack.c.h.b16 %v297
  %v1179 = vunpack.c.l.b16 %v298
  %v1180 = vunpack.c.h.b16 %v298
  %v1181 = vunpack.c.l.b16 %v299
  %v1182 = vunpack.c.h.b16 %v299
  %v1183 = vunpack.c.l.b16 %v300
  %v1184 = vunpack.c.h.b16 %v300
  %v1185 = vunpack.c.l.b16 %v301
  %v1186 = vunpack.c.h.b16 %v301
  %v1187 = vunpack.c.l.b16 %v302
  %v1188 = vunpack.c.h.b16 %v302
  %v1189 = vunpack.c.l.b16 %v303
  %v1190 = vunpack.c.h.b16 %v303
  %v1191 = vunpack.c.l.b16 %v304
  %v1192 = vunpack.c.h.b16 %v304
  %v1193 = vunpack.c.l.b16 %v305
  %v1194 = vunpack.c.h.b16 %v305
  %v1195 = vpack.c.b16 %v627, %v619
  %v1196 = vpack.c.b16 %v628, %v620
  %v1197 = vpack.c.b16 %v629, %v621
  %v1198 = vpack.c.b16 %v630, %v622
  %v1199 = vpack.c.b16 %v631, %v623
  %v1200 = vpack.c.b16 %v632, %v624
  %v1201 = vpack.c.b16 %v633, %v625
  %v1202 = vpack.c.b16 %v634, %v626
  %v1203 = vpack.c.b16 %v643, %v635
  %v1204 = vpack.c.b16 %v644, %v636
  %v1205 = vpack.c.b16 %v645, %v637
  %v1206 = vpack.c.b16 %v646, %v638
  %v1207 = vpack.c.b16 %v647, %v639
  %v1208 = vpack.c.b16 %v648, %v640
  %v1209 = vpack.c.b16 %v649, %v641
  %v1210 = vpack.c.b16 %v650, %v642
  %v1211 = vpack.c.b16 %v659, %v651
  %v1212 = vpack.c.b16 %v660, %v652
  %v1213 = vpack.c.b16 %v661, %v653
  %v1214 = vpack.c.b16 %v662, %v654
  %v1215 = vpack.c.b16 %v663, %v655
  %v1216 = vpack.c.b16 %v664, %v656
  %v1217 = vpack.c.b16 %v665, %v657
  %v1218 = vpack.c.b16 %v666, %v658
  %v1219 = vpack.c.b16 %v675, %v667
  %v1220 = vpack.c.b16 %v676, %v668
  %v1221 = vpack.c.b16 %v677, %v669
  %v1222 = vpack.c.b16 %v678, %v670
  %v1223 = vpack.c.b16 %v679, %v671
  %v1224 = vpack.c.b16 %v680, %v672
  %v1225 = vpack.c.b16 %v681, %v673
  %v1226 = vpack.c.b16 %v682, %v674
  %v1227 = vpack.c.b16 %v691, %v683
  %v1228 = vpack.c.b16 %v692, %v684
  %v1229 = vpack.c.b16 %v693, %v685
  %v1230 = vpack.c.b16 %v694, %v686
  %v1231 = vpack.c.b16 %v695, %v687
  %v1232 = vpack.c.b16 %v696, %v688
  %v1233 = vpack.c.b16 %v697, %v689
  %v1234 = vpack.c.b16 %v698, %v690
  %v1235 = vpack.c.b16 %v707, %v699
  %v1236 = vpack.c.b16 %v708, %v700
  %v1237 = vpack.c.b16 %v709, %v701
  %v1238 = vpack.c.b16 %v710, %v702
  %v1239 = vpack.c.b16 %v711, %v703
  %v1240 = vpack.c.b16 %v712, %v704
  %v1241 = vpack.c.b16 %v713, %v705
  %v1242 = vpack.c.b16 %v714, %v706
  %v1243 = vpack.c.b16 %v723, %v715
  %v1244 = vpack.c.b16 %v724, %v716
  %v1245 = vpack.c.b16 %v725, %v717
  %v1246 = vpack.c.b16 %v726, %v718
  %v1247 = vpack.c.b16 %v727, %v719
  %v1248 = vpack.c.b16 %v728, %v720
  %v1249 = vpack.c.b16 %v729, %v721
  %v1250 = vpack.c.b16 %v730, %v722
  %v1251 = vpack.c.b16 %v739, %v731
  %v1252 = vpack.c.b16 %v740, %v732
  %v1253 = vpack.c.b16 %v741, %v733
  %v1254 = vpack.c.b16 %v742, %v734
  %v1255 = vpack.c.b16 %v743, %v735
  %v1256 = vpack.c.b16 %v744, %v736
  %v1257 = vpack.c.b16 %v745, %v737
  %v1258 = vpack.c.b16 %v746, %v738
  %v1259 = vpack.c.b16 %v755, %v747
  %v1260 = vpack.c.b16 %v756, %v748
  %v1261 = vpack.c.b16 %v757, %v749
  %v1262 = vpack.c.b16 %v758, %v750
  %v1263 = vpack.c.b16 %v759, %v751
  %v1264 = vpack.c.b16 %v760, %v752
  %v1265 = vpack.c.b16 %v761, %v753
  %v1266 = vpack.c.b16 %v762, %v754
  %v1267 = vpack.c.b16 %v771, %v763
  %v1268 = vpack.c.b16 %v772, %v764
  %v1269 = vpack.c.b16 %v773, %v765
  %v1270 = vpack.c.b16 %v774, %v766
  %v1271 = vpack.c.b16 %v775, %v767
  %v1272 = vpack.c.b16 %v776, %v768
  %v1273 = vpack.c.b16 %v777, %v769
  %v1274 = vpack.c.b16 %v778, %v770
  %v1275 = vpack.c.b16 %v787, %v779
  %v1276 = vpack.c.b16 %v788, %v780
  %v1277 = vpack.c.b16 %v789, %v781
  %v1278 = vpack.c.b16 %v790, %v782
  %v1279 = vpack.c.b16 %v791, %v783
  %v1280 = vpack.c.b16 %v792, %v784
  %v1281 = vpack.c.b16 %v793, %v785
  %v1282 = vpack.c.b16 %v794, %v786
  %v1283 = vpack.c.b16 %v803, %v795
  %v1284 = vpack.c.b16 %v804, %v796
  %v1285 = vpack.c.b16 %v805, %v797
  %v1286 = vpack.c.b16 %v806, %v798
  %v1287 = vpack.c.b16 %v807, %v799
  %v1288 = vpack.c.b16 %v808, %v800
  %v1289 = vpack.c.b16 %v809, %v801
  %v1290 = vpack.c.b16 %v810, %v802
  %v1291 = vpack.c.b16 %v819, %v811
  %v1292 = vpack.c.b16 %v820, %v812
  %v1293 = vpack.c.b16 %v821, %v813
  %v1294 = vpack.c.b16 %v822, %v814
  %v1295 = vpack.c.b16 %v823, %v815
  %v1296 = vpack.c.b16 %v824, %v816
  %v1297 = vpack.c.b16 %v825, %v817
  %v1298 = vpack.c.b16 %v826, %v818
  %v1299 = vpack.c.b16 %v835, %v827
  %v1300 = vpack.c.b16 %v836, %v828
  %v1301 = vpack.c.b16 %v837, %v829
  %v1302 = vpack.c.b16 %v838, %v830
  %v1303 = vpack.c.b16 %v839, %v831
  %v1304 = vpack.c.b16 %v840, %v832
  %v1305 = vpack.c.b16 %v841, %v833
  %v1306 = vpack.c.b16 %v842, %v834
  %v1307 = vpack.c.b16 %v851, %v843
  %v1308 = vpack.c.b16 %v852, %v844
  %v1309 = vpack.c.b16 %v853, %v845
  %v1310 = vpack.c.b16 %v854, %v846
  %v1311 = vpack.c.b16 %v855, %v847
  %v1312 = vpack.c.b16 %v856, %v848
  %v1313 = vpack.c.b16 %v857, %v849
  %v1314 = vpack.c.b16 %v858, %v850
  %v1315 = vpack.c.b16 %v867, %v859
  %v1316 = vpack.c.b16 %v868, %v860
  %v1317 = vpack.c.b16 %v869, %v861
  %v1318 = vpack.c.b16 %v870, %v862
  %v1319 = vpack.c.b16 %v871, %v863
  %v1320 = vpack.c.b16 %v872, %v864
  %v1321 = vpack.c.b16 %v873, %v865
  %v1322 = vpack.c.b16 %v874, %v866
  %v1323 = vpack.c.b16 %v883, %v875
  %v1324 = vpack.c.b16 %v884, %v876
  %v1325 = vpack.c.b16 %v885, %v877
  %v1326 = vpack.c.b16 %v886, %v878
  %v1327 = vpack.c.b16 %v887, %v879
  %v1328 = vpack.c.b16 %v888, %v880
  %v1329 = vpack.c.b16 %v889, %v881
  %v1330 = vpack.c.b16 %v890, %v882
  %v1331 = vpack.c.b16 %v899, %v891
  %v1332 = vpack.c.b16 %v900, %v892
  %v1333 = vpack.c.b16 %v901, %v893
  %v1334 = vpack.c.b16 %v902, %v894
  %v1335 = vpack.c.b16 %v903, %v895
  %v1336 = vpack.c.b16 %v904, %v896
  %v1337 = vpack.c.b16 %v905, %v897
  %v1338 = vpack.c.b16 %v906, %v898
  %v1339 = vpack.c.b16 %v915, %v907
  %v1340 = vpack.c.b16 %v916, %v908
  %v1341 = vpack.c.b16 %v917, %v909
  %v1342 = vpack.c.b16 %v918, %v910
  %v1343 = vpack.c.b16 %v919, %v911
  %v1344 = vpack.c.b16 %v920, %v912
  %v1345 = vpack.c.b16 %v921, %v913
  %v1346 = vpack.c.b16 %v922, %v914
  %v1347 = vpack.c.b16 %v931, %v923
  %v1348 = vpack.c.b16 %v932, %v924
  %v1349 = vpack.c.b16 %v933, %v925
  %v1350 = vpack.c.b16 %v934, %v926
  %v1351 = vpack.c.b16 %v935, %v927
  %v1352 = vpack.c.b16 %v936, %v928
  %v1353 = vpack.c.b16 %v937, %v929
  %v1354 = vpack.c.b16 %v938, %v930
  %v1355 = vpack.c.b16 %v947, %v939
  %v1356 = vpack.c.b16 %v948, %v940
  %v1357 = vpack.c.b16 %v949, %v941
  %v1358 = vpack.c.b16 %v950, %v942
  %v1359 = vpack.c.b16 %v951, %v943
  %v1360 = vpack.c.b16 %v952, %v944
  %v1361 = vpack.c.b16 %v953, %v945
  %v1362 = vpack.c.b16 %v954, %v946
  %v1363 = vpack.c.b16 %v963, %v955
  %v1364 = vpack.c.b16 %v964, %v956
  %v1365 = vpack.c.b16 %v965, %v957
  %v1366 = vpack.c.b16 %v966, %v958
  %v1367 = vpack.c.b16 %v967, %v959
  %v1368 = vpack.c.b16 %v968, %v960
  %v1369 = vpack.c.b16 %v969, %v961
  %v1370 = vpack.c.b16 %v970, %v962
  %v1371 = vpack.c.b16 %v979, %v971
  %v1372 = vpack.c.b16 %v980, %v972
  %v1373 = vpack.c.b16 %v981, %v973
  %v1374 = vpack.c.b16 %v982, %v974
  %v1375 = vpack.c.b16 %v983, %v975
  %v1376 = vpack.c.b16 %v984, %v976
  %v1377 = vpack.c.b16 %v985, %v977
  %v1378 = vpack.c.b16 %v986, %v978
  %v1379 = vpack.c.b16 %v995, %v987
  %v1380 = vpack.c.b16 %v996, %v988
  %v1381 = vpack.c.b16 %v997, %v989
  %v1382 = vpack.c.b16 %v998, %v990
  %v1383 = vpack.c.b16 %v999, %v991
  %v1384 = vpack.c.b16 %v1000, %v992
  %v1385 = vpack.c.b16 %v1001, %v993
  %v1386 = vpack.c.b16 %v1002, %v994
  %v1387 = vpack.c.b16 %v1011, %v1003
  %v1388 = vpack.c.b16 %v1012, %v1004
  %v1389 = vpack.c.b16 %v1013, %v1005
  %v1390 = vpack.c.b16 %v1014, %v1006
  %v1391 = vpack.c.b16 %v1015, %v1007
  %v1392 = vpack.c.b16 %v1016, %v1008
  %v1393 = vpack.c.b16 %v1017, %v1009
  %v1394 = vpack.c.b16 %v1018, %v1010
  %v1395 = vpack.c.b16 %v1027, %v1019
  %v1396 = vpack.c.b16 %v1028, %v1020
  %v1397 = vpack.c.b16 %v1029, %v1021
  %v1398 = vpack.c.b16 %v1030, %v1022
  %v1399 = vpack.c.b16 %v1031, %v1023
  %v1400 = vpack.c.b16 %v1032, %v1024
  %v1401 = vpack.c.b16 %v1033, %v1025
  %v1402 = vpack.c.b16 %v1034, %v1026
  %v1403 = vpack.c.b16 %v1043, %v1035
  %v1404 = vpack.c.b16 %v1044, %v1036
  %v1405 = vpack.c.b16 %v1045, %v1037
  %v1406 = vpack.c.b16 %v1046, %v1038
  %v1407 = vpack.c.b16 %v1047, %v1039
  %v1408 = vpack.c.b16 %v1048, %v1040
  %v1409 = vpack.c.b16 %v1049, %v1041
  %v1410 = vpack.c.b16 %v1050, %v1042
  %v1411 = vpack.c.b16 %v1059, %v1051
  %v1412 = vpack.c.b16 %v1060, %v1052
  %v1413 = vpack.c.b16 %v1061, %v1053
  %v1414 = vpack.c.b16 %v1062, %v1054
  %v1415 = vpack.c.b16 %v1063, %v1055
  %v1416 = vpack.c.b16 %v1064, %v1056
  %v1417 = vpack.c.b16 %v1065, %v1057
  %v1418 = vpack.c.b16 %v1066, %v1058
  %v1419 = vpack.c.b16 %v1075, %v1067
  %v1420 = vpack.c.b16 %v1076, %v1068
  %v1421 = vpack.c.b16 %v1077, %v1069
  %v1422 = vpack.c.b16 %v1078, %v1070
  %v1423 = vpack.c.b16 %v1079, %v1071
  %v1424 = vpack.c.b16 %v1080, %v1072
  %v1425 = vpack.c.b16 %v1081, %v1073
  %v1426 = vpack.c.b16 %v1082, %v1074
  %v1427 = vpack.c.b16 %v1091, %v1083
  %v1428 = vpack.c.b16 %v1092, %v1084
  %v1429 = vpack.c.b16 %v1093, %v1085
  %v1430 = vpack.c.b16 %v1094, %v1086
  %v1431 = vpack.c.b16 %v1095, %v1087
  %v1432 = vpack.c.b16 %v1096, %v1088
  %v1433 = vpack.c.b16 %v1097, %v1089
  %v1434 = vpack.c.b16 %v1098, %v1090
  %v1435 = vpack.c.b16 %v1107, %v1099
  %v1436 = vpack.c.b16 %v1108, %v1100
  %v1437 = vpack.c.b16 %v1109, %v1101
  %v1438 = vpack.c.b16 %v1110, %v1102
  %v1439 = vpack.c.b16 %v1111, %v1103
  %v1440 = vpack.c.b16 %v1112, %v1104
  %v1441 = vpack.c.b16 %v1113, %v1105
  %v1442 = vpack.c.b16 %v1114, %v1106
  %v1443 = vpack.c.b16 %v1123, %v1115
  %v1444 = vpack.c.b16 %v1124, %v1116
  %v1445 = vpack.c.b16 %v1125, %v1117
  %v1446 = vpack.c.b16 %v1126, %v1118
  %v1447 = vpack.c.b16 %v1127, %v1119
  %v1448 = vpack.c.b16 %v1128, %v1120
  %v1449 = vpack.c.b16 %v1129, %v1121
  %v1450 = vpack.c.b16 %v1130, %v1122
  %v1451 = vpack.c.b16 %v1139, %v1131
  %v1452 = vpack.c.b16 %v1140, %v1132
  %v1453 = vpack.c.b16 %v1141, %v1133
  %v1454 = vpack.c.b16 %v1142, %v1134
  %v1455 = vpack.c.b16 %v1143, %v1135
  %v1456 = vpack.c.b16 %v1144, %v1136
  %v1457 = vpack.c.b16 %v1145, %v1137
  %v1458 = vpack.c.b16 %v1146, %v1138
  %v1459 = vpack.c.b16 %v1155, %v1147
  %v1460 = vpack.c.b16 %v1156, %v1148
  %v1461 = vpack.c.b16 %v1157, %v1149
  %v1462 = vpack.c.b16 %v1158, %v1150
  %v1463 = vpack.c.b16 %v1159, %v1151
  %v1464 = vpack.c.b16 %v1160, %v1152
  %v1465 = vpack.c.b16 %v1161, %v1153
  %v1466 = vpack.c.b16 %v1162, %v1154
  %v1467 = vpack.c.b16 %v1171, %v1163
  %v1468 = vpack.c.b16 %v1172, %v1164
  %v1469 = vpack.c.b16 %v1173, %v1165
  %v1470 = vpack.c.b16 %v1174, %v1166
  %v1471 = vpack.c.b16 %v1175, %v1167
  %v1472 = vpack.c.b16 %v1176, %v1168
  %v1473 = vpack.c.b16 %v1177, %v1169
  %v1474 = vpack.c.b16 %v1178, %v1170
  %v1475 = vpack.c.b16 %v1187, %v1179
  %v1476 = vpack.c.b16 %v1188, %v1180
  %v1477 = vpack.c.b16 %v1189, %v1181
  %v1478 = vpack.c.b16 %v1190, %v1182
  %v1479 = vpack.c.b16 %v1191, %v1183
  %v1480 = vpack.c.b16 %v1192, %v1184
  %v1481 = vpack.c.b16 %v1193, %v1185
  %v1482 = vpack.c.b16 %v1194, %v1186
  %vm1771 = vcmask 523264
  %v1773 = vsel %vm1771, %v326, 0
  %1775 = vmatprep.subr.bf16.mxu0 %v1196
  %1776 = vmatpush1.bf16.msra.mxu0 %v1195
  %1777 = vmatprep.subr.bf16.mxu0 %v1204
  %1778 = vmatpush1.bf16.msra.mxu0 %v1203
  %1779 = vmatprep.subr.bf16.mxu0 %v1212
  %1780 = vmatpush1.bf16.msra.mxu0 %v1211
  %1781 = vmatprep.subr.bf16.mxu0 %v1220
  %1782 = vmatpush1.bf16.msra.mxu0 %v1219
  %1783 = vmatprep.subr.bf16.mxu0 %v1228
  %1784 = vmatpush1.bf16.msra.mxu0 %v1227
  %1785 = vmatprep.subr.bf16.mxu0 %v1236
  %1786 = vmatpush1.bf16.msra.mxu0 %v1235
  %1787 = vmatprep.subr.bf16.mxu0 %v1244
  %1788 = vmatpush1.bf16.msra.mxu0 %v1243
  %1789 = vmatprep.subr.bf16.mxu0 %v1252
  %1790 = vmatpush1.bf16.msra.mxu0 %v1251
  %1791 = vmatprep.subr.bf16.mxu0 %v1260
  %1792 = vmatpush1.bf16.msra.mxu0 %v1259
  %1793 = vmatprep.subr.bf16.mxu0 %v1268
  %1794 = vmatpush1.bf16.msra.mxu0 %v1267
  %1795 = vmatprep.subr.bf16.mxu0 %v1276
  %1796 = vmatpush1.bf16.msra.mxu0 %v1275
  %1797 = vmatprep.subr.bf16.mxu0 %v1284
  %1798 = vmatpush1.bf16.msra.mxu0 %v1283
  %1799 = vmatprep.subr.bf16.mxu0 %v1292
  %1800 = vmatpush1.bf16.msra.mxu0 %v1291
  %1801 = vmatprep.subr.bf16.mxu0 %v1300
  %1802 = vmatpush1.bf16.msra.mxu0 %v1299
  %1803 = vmatprep.subr.bf16.mxu0 %v1308
  %1804 = vmatpush1.bf16.msra.mxu0 %v1307
  %1805 = vmatprep.subr.bf16.mxu0 %v1316
  %1806 = vmatpush1.bf16.msra.mxu0 %v1315
  %1807 = vmatprep.mubr.bf16.mxu0 %v323
  %1808 = vmatmul.mubr.bf16.gmra.mrb[0].mxu0 %v322
  %v1809 = vpop.f32.mrb[0].mxu0
  %v1810 = vadd.f32 0.0, %v1809
  %v1811 = vpop.f32.mrb[0].mxu0
  %v1812 = vadd.f32 0.0, %v1811
  %v1813 = vpop.f32.mrb[0].mxu0
  %v1814 = vadd.f32 0.0, %v1813
  %v1815 = vpop.f32.mrb[0].mxu0
  %v1816 = vadd.f32 0.0, %v1815
  %1817 = vdwg.mxu0
  %1818 = vmatprep.subr.bf16.mxu0 %v1324
  %1819 = vmatpush1.bf16.msra.mxu0 %v1323
  %1820 = vmatprep.subr.bf16.mxu0 %v1332
  %1821 = vmatpush1.bf16.msra.mxu0 %v1331
  %1822 = vmatprep.subr.bf16.mxu0 %v1340
  %1823 = vmatpush1.bf16.msra.mxu0 %v1339
  %1824 = vmatprep.subr.bf16.mxu0 %v1348
  %1825 = vmatpush1.bf16.msra.mxu0 %v1347
  %1826 = vmatprep.subr.bf16.mxu0 %v1356
  %1827 = vmatpush1.bf16.msra.mxu0 %v1355
  %1828 = vmatprep.subr.bf16.mxu0 %v1364
  %1829 = vmatpush1.bf16.msra.mxu0 %v1363
  %1830 = vmatprep.subr.bf16.mxu0 %v1372
  %1831 = vmatpush1.bf16.msra.mxu0 %v1371
  %1832 = vmatprep.subr.bf16.mxu0 %v1380
  %1833 = vmatpush1.bf16.msra.mxu0 %v1379
  %1834 = vmatprep.subr.bf16.mxu0 %v1388
  %1835 = vmatpush1.bf16.msra.mxu0 %v1387
  %1836 = vmatprep.subr.bf16.mxu0 %v1396
  %1837 = vmatpush1.bf16.msra.mxu0 %v1395
  %1838 = vmatprep.subr.bf16.mxu0 %v1404
  %1839 = vmatpush1.bf16.msra.mxu0 %v1403
  %1840 = vmatprep.subr.bf16.mxu0 %v1412
  %1841 = vmatpush1.bf16.msra.mxu0 %v1411
  %1842 = vmatprep.subr.bf16.mxu0 %v1420
  %1843 = vmatpush1.bf16.msra.mxu0 %v1419
  %1844 = vmatprep.subr.bf16.mxu0 %v1428
  %1845 = vmatpush1.bf16.msra.mxu0 %v1427
  %1846 = vmatprep.subr.bf16.mxu0 %v1436
  %1847 = vmatpush1.bf16.msra.mxu0 %v1435
  %1848 = vmatprep.subr.bf16.mxu0 %v1444
  %1849 = vmatpush1.bf16.msra.mxu0 %v1443
  %1850 = vmatprep.mubr.bf16.mxu0 %v325
  %1851 = vmatmul.mubr.bf16.gmra.mrb[0].mxu0 %v324
  %v1852 = vpop.f32.mrb[0].mxu0
  %v1853 = vadd.f32 %v1810, %v1852
  %v1854 = vpop.f32.mrb[0].mxu0
  %v1855 = vadd.f32 %v1812, %v1854
  %v1856 = vpop.f32.mrb[0].mxu0
  %v1857 = vadd.f32 %v1814, %v1856
  %v1858 = vpop.f32.mrb[0].mxu0
  %v1859 = vadd.f32 %v1816, %v1858
  %1860 = vdwg.mxu0
  %1861 = vmatprep.subr.bf16.mxu0 %v1452
  %1862 = vmatpush1.bf16.msra.mxu0 %v1451
  %1863 = vmatprep.subr.bf16.mxu0 %v1460
  %1864 = vmatpush1.bf16.msra.mxu0 %v1459
  %1865 = vmatprep.subr.bf16.mxu0 %v1468
  %1866 = vmatpush1.bf16.msra.mxu0 %v1467
  %1867 = vmatprep.subr.bf16.mxu0 %v1476
  %1868 = vmatpush1.bf16.msra.mxu0 %v1475
  %1869 = vmatprep.subr.bf16.mxu0 0
  %1870 = vmatpush1.bf16.msra.mxu0 0
  %1871 = vmatprep.subr.bf16.mxu0 0
  %1872 = vmatpush1.bf16.msra.mxu0 0
  %1873 = vmatprep.subr.bf16.mxu0 0
  %1874 = vmatpush1.bf16.msra.mxu0 0
  %1875 = vmatprep.subr.bf16.mxu0 0
  %1876 = vmatpush1.bf16.msra.mxu0 0
  %1877 = vmatprep.subr.bf16.mxu0 0
  %1878 = vmatpush1.bf16.msra.mxu0 0
  %1879 = vmatprep.subr.bf16.mxu0 0
  %1880 = vmatpush1.bf16.msra.mxu0 0
  %1881 = vmatprep.subr.bf16.mxu0 0
  %1882 = vmatpush1.bf16.msra.mxu0 0
  %1883 = vmatprep.subr.bf16.mxu0 0
  %1884 = vmatpush1.bf16.msra.mxu0 0
  %1885 = vmatprep.subr.bf16.mxu0 0
  %1886 = vmatpush1.bf16.msra.mxu0 0
  %1887 = vmatprep.subr.bf16.mxu0 0
  %1888 = vmatpush1.bf16.msra.mxu0 0
  %1889 = vmatprep.subr.bf16.mxu0 0
  %1890 = vmatpush1.bf16.msra.mxu0 0
  %1891 = vmatprep.subr.bf16.mxu0 0
  %1892 = vmatpush1.bf16.msra.mxu0 0
  %1893 = vmatprep.mubr.bf16.mxu0 0
  %1894 = vmatmul.mubr.bf16.gmra.mrb[0].mxu0 %v1773
  %v1895 = vpop.f32.mrb[0].mxu0
  %v1896 = vadd.f32 %v1853, %v1895
  %v1897 = vpop.f32.mrb[0].mxu0
  %v1898 = vadd.f32 %v1855, %v1897
  %v1899 = vpop.f32.mrb[0].mxu0
  %v1900 = vadd.f32 %v1857, %v1899
  %v1901 = vpop.f32.mrb[0].mxu0
  %v1902 = vadd.f32 %v1859, %v1901
  %1903 = vdwg.mxu0
  %1904 = vmatprep.subr.bf16.mxu0 %v1198
  %1905 = vmatpush1.bf16.msra.mxu0 %v1197
  %1906 = vmatprep.subr.bf16.mxu0 %v1206
  %1907 = vmatpush1.bf16.msra.mxu0 %v1205
  %1908 = vmatprep.subr.bf16.mxu0 %v1214
  %1909 = vmatpush1.bf16.msra.mxu0 %v1213
  %1910 = vmatprep.subr.bf16.mxu0 %v1222
  %1911 = vmatpush1.bf16.msra.mxu0 %v1221
  %1912 = vmatprep.subr.bf16.mxu0 %v1230
  %1913 = vmatpush1.bf16.msra.mxu0 %v1229
  %1914 = vmatprep.subr.bf16.mxu0 %v1238
  %1915 = vmatpush1.bf16.msra.mxu0 %v1237
  %1916 = vmatprep.subr.bf16.mxu0 %v1246
  %1917 = vmatpush1.bf16.msra.mxu0 %v1245
  %1918 = vmatprep.subr.bf16.mxu0 %v1254
  %1919 = vmatpush1.bf16.msra.mxu0 %v1253
  %1920 = vmatprep.subr.bf16.mxu0 %v1262
  %1921 = vmatpush1.bf16.msra.mxu0 %v1261
  %1922 = vmatprep.subr.bf16.mxu0 %v1270
  %1923 = vmatpush1.bf16.msra.mxu0 %v1269
  %1924 = vmatprep.subr.bf16.mxu0 %v1278
  %1925 = vmatpush1.bf16.msra.mxu0 %v1277
  %1926 = vmatprep.subr.bf16.mxu0 %v1286
  %1927 = vmatpush1.bf16.msra.mxu0 %v1285
  %1928 = vmatprep.subr.bf16.mxu0 %v1294
  %1929 = vmatpush1.bf16.msra.mxu0 %v1293
  %1930 = vmatprep.subr.bf16.mxu0 %v1302
  %1931 = vmatpush1.bf16.msra.mxu0 %v1301
  %1932 = vmatprep.subr.bf16.mxu0 %v1310
  %1933 = vmatpush1.bf16.msra.mxu0 %v1309
  %1934 = vmatprep.subr.bf16.mxu0 %v1318
  %1935 = vmatpush1.bf16.msra.mxu0 %v1317
  %1936 = vmatprep.mubr.bf16.mxu0 %v323
  %1937 = vmatmul.mubr.bf16.gmra.mrb[0].mxu0 %v322
  %v1938 = vpop.f32.mrb[0].mxu0
  %v1939 = vadd.f32 0.0, %v1938
  %v1940 = vpop.f32.mrb[0].mxu0
  %v1941 = vadd.f32 0.0, %v1940
  %v1942 = vpop.f32.mrb[0].mxu0
  %v1943 = vadd.f32 0.0, %v1942
  %v1944 = vpop.f32.mrb[0].mxu0
  %v1945 = vadd.f32 0.0, %v1944
  %1946 = vdwg.mxu0
  %1947 = vmatprep.subr.bf16.mxu0 %v1326
  %1948 = vmatpush1.bf16.msra.mxu0 %v1325
  %1949 = vmatprep.subr.bf16.mxu0 %v1334
  %1950 = vmatpush1.bf16.msra.mxu0 %v1333
  %1951 = vmatprep.subr.bf16.mxu0 %v1342
  %1952 = vmatpush1.bf16.msra.mxu0 %v1341
  %1953 = vmatprep.subr.bf16.mxu0 %v1350
  %1954 = vmatpush1.bf16.msra.mxu0 %v1349
  %1955 = vmatprep.subr.bf16.mxu0 %v1358
  %1956 = vmatpush1.bf16.msra.mxu0 %v1357
  %1957 = vmatprep.subr.bf16.mxu0 %v1366
  %1958 = vmatpush1.bf16.msra.mxu0 %v1365
  %1959 = vmatprep.subr.bf16.mxu0 %v1374
  %1960 = vmatpush1.bf16.msra.mxu0 %v1373
  %1961 = vmatprep.subr.bf16.mxu0 %v1382
  %1962 = vmatpush1.bf16.msra.mxu0 %v1381
  %1963 = vmatprep.subr.bf16.mxu0 %v1390
  %1964 = vmatpush1.bf16.msra.mxu0 %v1389
  %1965 = vmatprep.subr.bf16.mxu0 %v1398
  %1966 = vmatpush1.bf16.msra.mxu0 %v1397
  %1967 = vmatprep.subr.bf16.mxu0 %v1406
  %1968 = vmatpush1.bf16.msra.mxu0 %v1405
  %1969 = vmatprep.subr.bf16.mxu0 %v1414
  %1970 = vmatpush1.bf16.msra.mxu0 %v1413
  %1971 = vmatprep.subr.bf16.mxu0 %v1422
  %1972 = vmatpush1.bf16.msra.mxu0 %v1421
  %1973 = vmatprep.subr.bf16.mxu0 %v1430
  %1974 = vmatpush1.bf16.msra.mxu0 %v1429
  %1975 = vmatprep.subr.bf16.mxu0 %v1438
  %1976 = vmatpush1.bf16.msra.mxu0 %v1437
  %1977 = vmatprep.subr.bf16.mxu0 %v1446
  %1978 = vmatpush1.bf16.msra.mxu0 %v1445
  %1979 = vmatprep.mubr.bf16.mxu0 %v325
  %1980 = vmatmul.mubr.bf16.gmra.mrb[0].mxu0 %v324
  %v1981 = vpop.f32.mrb[0].mxu0
  %v1982 = vadd.f32 %v1939, %v1981
  %v1983 = vpop.f32.mrb[0].mxu0
  %v1984 = vadd.f32 %v1941, %v1983
  %v1985 = vpop.f32.mrb[0].mxu0
  %v1986 = vadd.f32 %v1943, %v1985
  %v1987 = vpop.f32.mrb[0].mxu0
  %v1988 = vadd.f32 %v1945, %v1987
  %1989 = vdwg.mxu0
  %1990 = vmatprep.subr.bf16.mxu0 %v1454
  %1991 = vmatpush1.bf16.msra.mxu0 %v1453
  %1992 = vmatprep.subr.bf16.mxu0 %v1462
  %1993 = vmatpush1.bf16.msra.mxu0 %v1461
  %1994 = vmatprep.subr.bf16.mxu0 %v1470
  %1995 = vmatpush1.bf16.msra.mxu0 %v1469
  %1996 = vmatprep.subr.bf16.mxu0 %v1478
  %1997 = vmatpush1.bf16.msra.mxu0 %v1477
  %1998 = vmatprep.subr.bf16.mxu0 0
  %1999 = vmatpush1.bf16.msra.mxu0 0
  %2000 = vmatprep.subr.bf16.mxu0 0
  %2001 = vmatpush1.bf16.msra.mxu0 0
  %2002 = vmatprep.subr.bf16.mxu0 0
  %2003 = vmatpush1.bf16.msra.mxu0 0
  %2004 = vmatprep.subr.bf16.mxu0 0
  %2005 = vmatpush1.bf16.msra.mxu0 0
  %2006 = vmatprep.subr.bf16.mxu0 0
  %2007 = vmatpush1.bf16.msra.mxu0 0
  %2008 = vmatprep.subr.bf16.mxu0 0
  %2009 = vmatpush1.bf16.msra.mxu0 0
  %2010 = vmatprep.subr.bf16.mxu0 0
  %2011 = vmatpush1.bf16.msra.mxu0 0
  %2012 = vmatprep.subr.bf16.mxu0 0
  %2013 = vmatpush1.bf16.msra.mxu0 0
  %2014 = vmatprep.subr.bf16.mxu0 0
  %2015 = vmatpush1.bf16.msra.mxu0 0
  %2016 = vmatprep.subr.bf16.mxu0 0
  %2017 = vmatpush1.bf16.msra.mxu0 0
  %2018 = vmatprep.subr.bf16.mxu0 0
  %2019 = vmatpush1.bf16.msra.mxu0 0
  %2020 = vmatprep.subr.bf16.mxu0 0
  %2021 = vmatpush1.bf16.msra.mxu0 0
  %2022 = vmatprep.mubr.bf16.mxu0 0
  %2023 = vmatmul.mubr.bf16.gmra.mrb[0].mxu0 %v1773
  %v2024 = vpop.f32.mrb[0].mxu0
  %v2025 = vadd.f32 %v1982, %v2024
  %v2026 = vpop.f32.mrb[0].mxu0
  %v2027 = vadd.f32 %v1984, %v2026
  %v2028 = vpop.f32.mrb[0].mxu0
  %v2029 = vadd.f32 %v1986, %v2028
  %v2030 = vpop.f32.mrb[0].mxu0
  %v2031 = vadd.f32 %v1988, %v2030
  %2032 = vdwg.mxu0
  %2033 = vmatprep.subr.bf16.mxu0 %v1200
  %2034 = vmatpush1.bf16.msra.mxu0 %v1199
  %2035 = vmatprep.subr.bf16.mxu0 %v1208
  %2036 = vmatpush1.bf16.msra.mxu0 %v1207
  %2037 = vmatprep.subr.bf16.mxu0 %v1216
  %2038 = vmatpush1.bf16.msra.mxu0 %v1215
  %2039 = vmatprep.subr.bf16.mxu0 %v1224
  %2040 = vmatpush1.bf16.msra.mxu0 %v1223
  %2041 = vmatprep.subr.bf16.mxu0 %v1232
  %2042 = vmatpush1.bf16.msra.mxu0 %v1231
  %2043 = vmatprep.subr.bf16.mxu0 %v1240
  %2044 = vmatpush1.bf16.msra.mxu0 %v1239
  %2045 = vmatprep.subr.bf16.mxu0 %v1248
  %2046 = vmatpush1.bf16.msra.mxu0 %v1247
  %2047 = vmatprep.subr.bf16.mxu0 %v1256
  %2048 = vmatpush1.bf16.msra.mxu0 %v1255
  %2049 = vmatprep.subr.bf16.mxu0 %v1264
  %2050 = vmatpush1.bf16.msra.mxu0 %v1263
  %2051 = vmatprep.subr.bf16.mxu0 %v1272
  %2052 = vmatpush1.bf16.msra.mxu0 %v1271
  %2053 = vmatprep.subr.bf16.mxu0 %v1280
  %2054 = vmatpush1.bf16.msra.mxu0 %v1279
  %2055 = vmatprep.subr.bf16.mxu0 %v1288
  %2056 = vmatpush1.bf16.msra.mxu0 %v1287
  %2057 = vmatprep.subr.bf16.mxu0 %v1296
  %2058 = vmatpush1.bf16.msra.mxu0 %v1295
  %2059 = vmatprep.subr.bf16.mxu0 %v1304
  %2060 = vmatpush1.bf16.msra.mxu0 %v1303
  %2061 = vmatprep.subr.bf16.mxu0 %v1312
  %2062 = vmatpush1.bf16.msra.mxu0 %v1311
  %2063 = vmatprep.subr.bf16.mxu0 %v1320
  %2064 = vmatpush1.bf16.msra.mxu0 %v1319
  %2065 = vmatprep.mubr.bf16.mxu0 %v323
  %2066 = vmatmul.mubr.bf16.gmra.mrb[0].mxu0 %v322
  %v2067 = vpop.f32.mrb[0].mxu0
  %v2068 = vadd.f32 0.0, %v2067
  %v2069 = vpop.f32.mrb[0].mxu0
  %v2070 = vadd.f32 0.0, %v2069
  %v2071 = vpop.f32.mrb[0].mxu0
  %v2072 = vadd.f32 0.0, %v2071
  %v2073 = vpop.f32.mrb[0].mxu0
  %v2074 = vadd.f32 0.0, %v2073
  %2075 = vdwg.mxu0
  %2076 = vmatprep.subr.bf16.mxu0 %v1328
  %2077 = vmatpush1.bf16.msra.mxu0 %v1327
  %2078 = vmatprep.subr.bf16.mxu0 %v1336
  %2079 = vmatpush1.bf16.msra.mxu0 %v1335
  %2080 = vmatprep.subr.bf16.mxu0 %v1344
  %2081 = vmatpush1.bf16.msra.mxu0 %v1343
  %2082 = vmatprep.subr.bf16.mxu0 %v1352
  %2083 = vmatpush1.bf16.msra.mxu0 %v1351
  %2084 = vmatprep.subr.bf16.mxu0 %v1360
  %2085 = vmatpush1.bf16.msra.mxu0 %v1359
  %2086 = vmatprep.subr.bf16.mxu0 %v1368
  %2087 = vmatpush1.bf16.msra.mxu0 %v1367
  %2088 = vmatprep.subr.bf16.mxu0 %v1376
  %2089 = vmatpush1.bf16.msra.mxu0 %v1375
  %2090 = vmatprep.subr.bf16.mxu0 %v1384
  %2091 = vmatpush1.bf16.msra.mxu0 %v1383
  %2092 = vmatprep.subr.bf16.mxu0 %v1392
  %2093 = vmatpush1.bf16.msra.mxu0 %v1391
  %2094 = vmatprep.subr.bf16.mxu0 %v1400
  %2095 = vmatpush1.bf16.msra.mxu0 %v1399
  %2096 = vmatprep.subr.bf16.mxu0 %v1408
  %2097 = vmatpush1.bf16.msra.mxu0 %v1407
  %2098 = vmatprep.subr.bf16.mxu0 %v1416
  %2099 = vmatpush1.bf16.msra.mxu0 %v1415
  %2100 = vmatprep.subr.bf16.mxu0 %v1424
  %2101 = vmatpush1.bf16.msra.mxu0 %v1423
  %2102 = vmatprep.subr.bf16.mxu0 %v1432
  %2103 = vmatpush1.bf16.msra.mxu0 %v1431
  %2104 = vmatprep.subr.bf16.mxu0 %v1440
  %2105 = vmatpush1.bf16.msra.mxu0 %v1439
  %2106 = vmatprep.subr.bf16.mxu0 %v1448
  %2107 = vmatpush1.bf16.msra.mxu0 %v1447
  %2108 = vmatprep.mubr.bf16.mxu0 %v325
  %2109 = vmatmul.mubr.bf16.gmra.mrb[0].mxu0 %v324
  %v2110 = vpop.f32.mrb[0].mxu0
  %v2111 = vadd.f32 %v2068, %v2110
  %v2112 = vpop.f32.mrb[0].mxu0
  %v2113 = vadd.f32 %v2070, %v2112
  %v2114 = vpop.f32.mrb[0].mxu0
  %v2115 = vadd.f32 %v2072, %v2114
  %v2116 = vpop.f32.mrb[0].mxu0
  %v2117 = vadd.f32 %v2074, %v2116
  %2118 = vdwg.mxu0
  %2119 = vmatprep.subr.bf16.mxu0 %v1456
  %2120 = vmatpush1.bf16.msra.mxu0 %v1455
  %2121 = vmatprep.subr.bf16.mxu0 %v1464
  %2122 = vmatpush1.bf16.msra.mxu0 %v1463
  %2123 = vmatprep.subr.bf16.mxu0 %v1472
  %2124 = vmatpush1.bf16.msra.mxu0 %v1471
  %2125 = vmatprep.subr.bf16.mxu0 %v1480
  %2126 = vmatpush1.bf16.msra.mxu0 %v1479
  %2127 = vmatprep.subr.bf16.mxu0 0
  %2128 = vmatpush1.bf16.msra.mxu0 0
  %2129 = vmatprep.subr.bf16.mxu0 0
  %2130 = vmatpush1.bf16.msra.mxu0 0
  %2131 = vmatprep.subr.bf16.mxu0 0
  %2132 = vmatpush1.bf16.msra.mxu0 0
  %2133 = vmatprep.subr.bf16.mxu0 0
  %2134 = vmatpush1.bf16.msra.mxu0 0
  %2135 = vmatprep.subr.bf16.mxu0 0
  %2136 = vmatpush1.bf16.msra.mxu0 0
  %2137 = vmatprep.subr.bf16.mxu0 0
  %2138 = vmatpush1.bf16.msra.mxu0 0
  %2139 = vmatprep.subr.bf16.mxu0 0
  %2140 = vmatpush1.bf16.msra.mxu0 0
  %2141 = vmatprep.subr.bf16.mxu0 0
  %2142 = vmatpush1.bf16.msra.mxu0 0
  %2143 = vmatprep.subr.bf16.mxu0 0
  %2144 = vmatpush1.bf16.msra.mxu0 0
  %2145 = vmatprep.subr.bf16.mxu0 0
  %2146 = vmatpush1.bf16.msra.mxu0 0
  %2147 = vmatprep.subr.bf16.mxu0 0
  %2148 = vmatpush1.bf16.msra.mxu0 0
  %2149 = vmatprep.subr.bf16.mxu0 0
  %2150 = vmatpush1.bf16.msra.mxu0 0
  %2151 = vmatprep.mubr.bf16.mxu0 0
  %2152 = vmatmul.mubr.bf16.gmra.mrb[0].mxu0 %v1773
  %v2153 = vpop.f32.mrb[0].mxu0
  %v2154 = vadd.f32 %v2111, %v2153
  %v2155 = vpop.f32.mrb[0].mxu0
  %v2156 = vadd.f32 %v2113, %v2155
  %v2157 = vpop.f32.mrb[0].mxu0
  %v2158 = vadd.f32 %v2115, %v2157
  %v2159 = vpop.f32.mrb[0].mxu0
  %v2160 = vadd.f32 %v2117, %v2159
  %2161 = vdwg.mxu0
  %2162 = vmatprep.subr.bf16.mxu0 %v1202
  %2163 = vmatpush1.bf16.msra.mxu0 %v1201
  %2164 = vmatprep.subr.bf16.mxu0 %v1210
  %2165 = vmatpush1.bf16.msra.mxu0 %v1209
  %2166 = vmatprep.subr.bf16.mxu0 %v1218
  %2167 = vmatpush1.bf16.msra.mxu0 %v1217
  %2168 = vmatprep.subr.bf16.mxu0 %v1226
  %2169 = vmatpush1.bf16.msra.mxu0 %v1225
  %2170 = vmatprep.subr.bf16.mxu0 %v1234
  %2171 = vmatpush1.bf16.msra.mxu0 %v1233
  %2172 = vmatprep.subr.bf16.mxu0 %v1242
  %2173 = vmatpush1.bf16.msra.mxu0 %v1241
  %2174 = vmatprep.subr.bf16.mxu0 %v1250
  %2175 = vmatpush1.bf16.msra.mxu0 %v1249
  %2176 = vmatprep.subr.bf16.mxu0 %v1258
  %2177 = vmatpush1.bf16.msra.mxu0 %v1257
  %2178 = vmatprep.subr.bf16.mxu0 %v1266
  %2179 = vmatpush1.bf16.msra.mxu0 %v1265
  %2180 = vmatprep.subr.bf16.mxu0 %v1274
  %2181 = vmatpush1.bf16.msra.mxu0 %v1273
  %2182 = vmatprep.subr.bf16.mxu0 %v1282
  %2183 = vmatpush1.bf16.msra.mxu0 %v1281
  %2184 = vmatprep.subr.bf16.mxu0 %v1290
  %2185 = vmatpush1.bf16.msra.mxu0 %v1289
  %2186 = vmatprep.subr.bf16.mxu0 %v1298
  %2187 = vmatpush1.bf16.msra.mxu0 %v1297
  %2188 = vmatprep.subr.bf16.mxu0 %v1306
  %2189 = vmatpush1.bf16.msra.mxu0 %v1305
  %2190 = vmatprep.subr.bf16.mxu0 %v1314
  %2191 = vmatpush1.bf16.msra.mxu0 %v1313
  %2192 = vmatprep.subr.bf16.mxu0 %v1322
  %2193 = vmatpush1.bf16.msra.mxu0 %v1321
  %2194 = vmatprep.mubr.bf16.mxu0 %v323
  %2195 = vmatmul.mubr.bf16.gmra.mrb[0].mxu0 %v322
  %v2196 = vpop.f32.mrb[0].mxu0
  %v2197 = vadd.f32 0.0, %v2196
  %v2198 = vpop.f32.mrb[0].mxu0
  %v2199 = vadd.f32 0.0, %v2198
  %v2200 = vpop.f32.mrb[0].mxu0
  %v2201 = vadd.f32 0.0, %v2200
  %v2202 = vpop.f32.mrb[0].mxu0
  %v2203 = vadd.f32 0.0, %v2202
  %2204 = vdwg.mxu0
  %2205 = vmatprep.subr.bf16.mxu0 %v1330
  %2206 = vmatpush1.bf16.msra.mxu0 %v1329
  %2207 = vmatprep.subr.bf16.mxu0 %v1338
  %2208 = vmatpush1.bf16.msra.mxu0 %v1337
  %2209 = vmatprep.subr.bf16.mxu0 %v1346
  %2210 = vmatpush1.bf16.msra.mxu0 %v1345
  %2211 = vmatprep.subr.bf16.mxu0 %v1354
  %2212 = vmatpush1.bf16.msra.mxu0 %v1353
  %2213 = vmatprep.subr.bf16.mxu0 %v1362
  %2214 = vmatpush1.bf16.msra.mxu0 %v1361
  %2215 = vmatprep.subr.bf16.mxu0 %v1370
  %2216 = vmatpush1.bf16.msra.mxu0 %v1369
  %2217 = vmatprep.subr.bf16.mxu0 %v1378
  %2218 = vmatpush1.bf16.msra.mxu0 %v1377
  %2219 = vmatprep.subr.bf16.mxu0 %v1386
  %2220 = vmatpush1.bf16.msra.mxu0 %v1385
  %2221 = vmatprep.subr.bf16.mxu0 %v1394
  %2222 = vmatpush1.bf16.msra.mxu0 %v1393
  %2223 = vmatprep.subr.bf16.mxu0 %v1402
  %2224 = vmatpush1.bf16.msra.mxu0 %v1401
  %2225 = vmatprep.subr.bf16.mxu0 %v1410
  %2226 = vmatpush1.bf16.msra.mxu0 %v1409
  %2227 = vmatprep.subr.bf16.mxu0 %v1418
  %2228 = vmatpush1.bf16.msra.mxu0 %v1417
  %2229 = vmatprep.subr.bf16.mxu0 %v1426
  %2230 = vmatpush1.bf16.msra.mxu0 %v1425
  %2231 = vmatprep.subr.bf16.mxu0 %v1434
  %2232 = vmatpush1.bf16.msra.mxu0 %v1433
  %2233 = vmatprep.subr.bf16.mxu0 %v1442
  %2234 = vmatpush1.bf16.msra.mxu0 %v1441
  %2235 = vmatprep.subr.bf16.mxu0 %v1450
  %2236 = vmatpush1.bf16.msra.mxu0 %v1449
  %2237 = vmatprep.mubr.bf16.mxu0 %v325
  %2238 = vmatmul.mubr.bf16.gmra.mrb[0].mxu0 %v324
  %v2239 = vpop.f32.mrb[0].mxu0
  %v2240 = vadd.f32 %v2197, %v2239
  %v2241 = vpop.f32.mrb[0].mxu0
  %v2242 = vadd.f32 %v2199, %v2241
  %v2243 = vpop.f32.mrb[0].mxu0
  %v2244 = vadd.f32 %v2201, %v2243
  %v2245 = vpop.f32.mrb[0].mxu0
  %v2246 = vadd.f32 %v2203, %v2245
  %2247 = vdwg.mxu0
  %2248 = vmatprep.subr.bf16.mxu0 %v1458
  %2249 = vmatpush1.bf16.msra.mxu0 %v1457
  %2250 = vmatprep.subr.bf16.mxu0 %v1466
  %2251 = vmatpush1.bf16.msra.mxu0 %v1465
  %2252 = vmatprep.subr.bf16.mxu0 %v1474
  %2253 = vmatpush1.bf16.msra.mxu0 %v1473
  %2254 = vmatprep.subr.bf16.mxu0 %v1482
  %2255 = vmatpush1.bf16.msra.mxu0 %v1481
  %2256 = vmatprep.subr.bf16.mxu0 0
  %2257 = vmatpush1.bf16.msra.mxu0 0
  %2258 = vmatprep.subr.bf16.mxu0 0
  %2259 = vmatpush1.bf16.msra.mxu0 0
  %2260 = vmatprep.subr.bf16.mxu0 0
  %2261 = vmatpush1.bf16.msra.mxu0 0
  %2262 = vmatprep.subr.bf16.mxu0 0
  %2263 = vmatpush1.bf16.msra.mxu0 0
  %2264 = vmatprep.subr.bf16.mxu0 0
  %2265 = vmatpush1.bf16.msra.mxu0 0
  %2266 = vmatprep.subr.bf16.mxu0 0
  %2267 = vmatpush1.bf16.msra.mxu0 0
  %2268 = vmatprep.subr.bf16.mxu0 0
  %2269 = vmatpush1.bf16.msra.mxu0 0
  %2270 = vmatprep.subr.bf16.mxu0 0
  %2271 = vmatpush1.bf16.msra.mxu0 0
  %2272 = vmatprep.subr.bf16.mxu0 0
  %2273 = vmatpush1.bf16.msra.mxu0 0
  %2274 = vmatprep.subr.bf16.mxu0 0
  %2275 = vmatpush1.bf16.msra.mxu0 0
  %2276 = vmatprep.subr.bf16.mxu0 0
  %2277 = vmatpush1.bf16.msra.mxu0 0
  %2278 = vmatprep.subr.bf16.mxu0 0
  %2279 = vmatpush1.bf16.msra.mxu0 0
  %2280 = vmatprep.mubr.bf16.mxu0 0
  %2281 = vmatmul.mubr.bf16.gmra.mrb[0].mxu0 %v1773
  %v2282 = vpop.f32.mrb[0].mxu0
  %v2283 = vadd.f32 %v2240, %v2282
  %v2284 = vpop.f32.mrb[0].mxu0
  %v2285 = vadd.f32 %v2242, %v2284
  %v2286 = vpop.f32.mrb[0].mxu0
  %v2287 = vadd.f32 %v2244, %v2286
  %v2288 = vpop.f32.mrb[0].mxu0
  %v2289 = vadd.f32 %v2246, %v2288
  %2290 = vdwg.mxu0
  %2291 = vst [vmem:[%s2] sm:$0xff] %v1896
  %2292 = vst [vmem:[%s2 + $0x8] sm:$0xff] %v1898
  %2293 = vst [vmem:[%s2 + $0x10] sm:$0xff] %v2025
  %2294 = vst [vmem:[%s2 + $0x18] sm:$0xff] %v2027
  %2295 = vst [vmem:[%s2 + $0x20] sm:$0xff] %v2154
  %2296 = vst [vmem:[%s2 + $0x28] sm:$0xff] %v2156
  %2297 = vst [vmem:[%s2 + $0x30] sm:$0xff] %v2283
  %vm2298 = vcmask 31744
  %2299 = vst.msk [vmem:[%s2 + $0x38] sm:$0xff] %vm2298, %v2285
  %2300 = vst [vmem:[%s2 + $0x40] sm:$0xff] %v1900
  %2301 = vst [vmem:[%s2 + $0x48] sm:$0xff] %v1902
  %2302 = vst [vmem:[%s2 + $0x50] sm:$0xff] %v2029
  %2303 = vst [vmem:[%s2 + $0x58] sm:$0xff] %v2031
  %2304 = vst [vmem:[%s2 + $0x60] sm:$0xff] %v2158
  %2305 = vst [vmem:[%s2 + $0x68] sm:$0xff] %v2160
  %2306 = vst [vmem:[%s2 + $0x70] sm:$0xff] %v2287
  %2307 = vst.msk [vmem:[%s2 + $0x78] sm:$0xff] %vm2298, %v2289
  // Predicated region
  $region10: #{_lambda_.18} parent=0 // pred_check
    _
  $region11: #{_lambda_.18} parent=0 // pred_check_branch
    %2309 = sbr.rel (0) target = $region13
  $region12: #{_lambda_.18} parent=0 // pred_region
    _
  $region13: #{_lambda_.18} parent=0 // pred_fallthru
    _
  // Predicated region
  $region14: #{_lambda_.18} parent=0 // pred_check
    _
  $region15: #{_lambda_.18} parent=0 // pred_check_branch
    %2311 = sbr.rel (0) target = $region17
  $region16: #{_lambda_.18} parent=0 // pred_region
    _
  $region17: #{_lambda_.18} parent=0 // pred_fallthru
    _

// kernel: _lambda_.19
$region0: #{_lambda_.19}
  #allocation0 [shape = 'u32[]', space=smem, size = 0x4, offset = 0x4, fixed_abs, tag = 'smem constant byte address 0x4 - core index']
  #allocation1 [shape = 'u32[144,128]{1,0:T(1,128)}', space=vmem, size = 0x12000, scoped, tag = 'internal scratch']
  %s0 = inlined_call_operand.vmem [shape: bf16[8,72], index: 0, kind: input, shape index: {}]
  %s1 = inlined_call_operand.vmem [shape: bf16[72,1568], index: 1, kind: input, shape index: {}]
  %s2 = inlined_call_operand.vmem [shape: f32[8,1], index: 2, kind: input, shape index: {}]
  %s3 = inlined_call_operand.vmem [shape: f32[8,1568], index: 3, kind: output, shape index: {}]
  %s4 = sld [smem:[#allocation0]]
  $region22: #{_lambda_.19} parent=0
    _
  %s6 = ssub.s32 1, %s4
  %s7 = scalar_select 0, %s6, %s4
  // Predicated region
  $region2: #{_lambda_.19} parent=0 // pred_check
    _
  $region3: #{_lambda_.19} parent=0 // pred_check_branch
    %9 = sbr.rel (0) target = $region5
  $region4: #{_lambda_.19} parent=0 // pred_region
    _
  $region5: #{_lambda_.19} parent=0 // pred_fallthru
    _
  // Predicated region
  $region6: #{_lambda_.19} parent=0 // pred_check
    _
  $region7: #{_lambda_.19} parent=0 // pred_check_branch
    %11 = sbr.rel (0) target = $region9
  $region8: #{_lambda_.19} parent=0 // pred_region
    _
  $region9: #{_lambda_.19} parent=0 // pred_fallthru
    _
  // Predicated region
  $region10: #{_lambda_.19} parent=0 // pred_check
    _
  $region11: #{_lambda_.19} parent=0 // pred_check_branch
    %13 = sbr.rel (0) target = $region13
  $region12: #{_lambda_.19} parent=0 // pred_region
    _
  $region13: #{_lambda_.19} parent=0 // pred_fallthru
    _
  %v15 = vld [vmem:[%s0] sm:$0xf]
  %v16 = vld [vmem:[%s1] sm:$0xff]
  %v17 = vld [vmem:[%s1 + $0x8] sm:$0xff]
  %v18 = vld [vmem:[%s1 + $0x10] sm:$0xff]
  %v19 = vld [vmem:[%s1 + $0x18] sm:$0xff]
  %v20 = vld [vmem:[%s1 + $0x20] sm:$0xff]
  %v21 = vld [vmem:[%s1 + $0x28] sm:$0xff]
  %v22 = vld [vmem:[%s1 + $0x30] sm:$0xf]
  %v23 = vld [vmem:[%s1 + $0x34] sm:$0xff]
  %v24 = vld [vmem:[%s1 + $0x3c] sm:$0xff]
  %v25 = vld [vmem:[%s1 + $0x44] sm:$0xff]
  %v26 = vld [vmem:[%s1 + $0x4c] sm:$0xff]
  %v27 = vld [vmem:[%s1 + $0x54] sm:$0xff]
  %v28 = vld [vmem:[%s1 + $0x5c] sm:$0xff]
  %v29 = vld [vmem:[%s1 + $0x64] sm:$0xf]
  %v30 = vld [vmem:[%s1 + $0x68] sm:$0xff]
  %v31 = vld [vmem:[%s1 + $0x70] sm:$0xff]
  %v32 = vld [vmem:[%s1 + $0x78] sm:$0xff]
  %v33 = vld [vmem:[%s1 + $0x80] sm:$0xff]
  %v34 = vld [vmem:[%s1 + $0x88] sm:$0xff]
  %v35 = vld [vmem:[%s1 + $0x90] sm:$0xff]
  %v36 = vld [vmem:[%s1 + $0x98] sm:$0xf]
  %v37 = vld [vmem:[%s1 + $0x9c] sm:$0xff]
  %v38 = vld [vmem:[%s1 + $0xa4] sm:$0xff]
  %v39 = vld [vmem:[%s1 + $0xac] sm:$0xff]
  %v40 = vld [vmem:[%s1 + $0xb4] sm:$0xff]
  %v41 = vld [vmem:[%s1 + $0xbc] sm:$0xff]
  %v42 = vld [vmem:[%s1 + $0xc4] sm:$0xff]
  %v43 = vld [vmem:[%s1 + $0xcc] sm:$0xf]
  %v44 = vld [vmem:[%s1 + $0xd0] sm:$0xff]
  %v45 = vld [vmem:[%s1 + $0xd8] sm:$0xff]
  %v46 = vld [vmem:[%s1 + $0xe0] sm:$0xff]
  %v47 = vld [vmem:[%s1 + $0xe8] sm:$0xff]
  %v48 = vld [vmem:[%s1 + $0xf0] sm:$0xff]
  %v49 = vld [vmem:[%s1 + $0xf8] sm:$0xff]
  %v50 = vld [vmem:[%s1 + $0x100] sm:$0xf]
  %v51 = vld [vmem:[%s1 + $0x104] sm:$0xff]
  %v52 = vld [vmem:[%s1 + $0x10c] sm:$0xff]
  %v53 = vld [vmem:[%s1 + $0x114] sm:$0xff]
  %v54 = vld [vmem:[%s1 + $0x11c] sm:$0xff]
  %v55 = vld [vmem:[%s1 + $0x124] sm:$0xff]
  %v56 = vld [vmem:[%s1 + $0x12c] sm:$0xff]
  %v57 = vld [vmem:[%s1 + $0x134] sm:$0xf]
  %v58 = vld [vmem:[%s1 + $0x138] sm:$0xff]
  %v59 = vld [vmem:[%s1 + $0x140] sm:$0xff]
  %v60 = vld [vmem:[%s1 + $0x148] sm:$0xff]
  %v61 = vld [vmem:[%s1 + $0x150] sm:$0xff]
  %v62 = vld [vmem:[%s1 + $0x158] sm:$0xff]
  %v63 = vld [vmem:[%s1 + $0x160] sm:$0xff]
  %v64 = vld [vmem:[%s1 + $0x168] sm:$0xf]
  %v65 = vld [vmem:[%s1 + $0x16c] sm:$0xff]
  %v66 = vld [vmem:[%s1 + $0x174] sm:$0xff]
  %v67 = vld [vmem:[%s1 + $0x17c] sm:$0xff]
  %v68 = vld [vmem:[%s1 + $0x184] sm:$0xff]
  %v69 = vld [vmem:[%s1 + $0x18c] sm:$0xff]
  %v70 = vld [vmem:[%s1 + $0x194] sm:$0xff]
  %v71 = vld [vmem:[%s1 + $0x19c] sm:$0xf]
  %v72 = vld [vmem:[%s1 + $0x1a0] sm:$0xff]
  %v73 = vld [vmem:[%s1 + $0x1a8] sm:$0xff]
  %v74 = vld [vmem:[%s1 + $0x1b0] sm:$0xff]
  %v75 = vld [vmem:[%s1 + $0x1b8] sm:$0xff]
  %v76 = vld [vmem:[%s1 + $0x1c0] sm:$0xff]
  %v77 = vld [vmem:[%s1 + $0x1c8] sm:$0xff]
  %v78 = vld [vmem:[%s1 + $0x1d0] sm:$0xf]
  %v79 = vld [vmem:[%s2] sm:$0xff]
  %81 = vset.pattern.permute.xlu0 0
  %82 = vperm.xlu0 %81, %v79
  %v83 = vpop.permute.xlu0 %82
  %v148 = vunpack.c.l.b16 %v16
  %v149 = vunpack.c.h.b16 %v16
  %v150 = vunpack.c.l.b16 %v17
  %v151 = vunpack.c.h.b16 %v17
  %v152 = vunpack.c.l.b16 %v18
  %v153 = vunpack.c.h.b16 %v18
  %v154 = vunpack.c.l.b16 %v19
  %v155 = vunpack.c.h.b16 %v19
  %v156 = vunpack.c.l.b16 %v20
  %v157 = vunpack.c.h.b16 %v20
  %v158 = vunpack.c.l.b16 %v21
  %v159 = vunpack.c.h.b16 %v21
  %v160 = vunpack.c.l.b16 %v22
  %v161 = vunpack.c.l.b16 %v23
  %v162 = vunpack.c.h.b16 %v23
  %v163 = vunpack.c.l.b16 %v24
  %v164 = vunpack.c.h.b16 %v24
  %v165 = vunpack.c.l.b16 %v25
  %v166 = vunpack.c.h.b16 %v25
  %v167 = vunpack.c.l.b16 %v26
  %v168 = vunpack.c.h.b16 %v26
  %v169 = vunpack.c.l.b16 %v27
  %v170 = vunpack.c.h.b16 %v27
  %v171 = vunpack.c.l.b16 %v28
  %v172 = vunpack.c.h.b16 %v28
  %v173 = vunpack.c.l.b16 %v29
  %v174 = vunpack.c.l.b16 %v30
  %v175 = vunpack.c.h.b16 %v30
  %v176 = vunpack.c.l.b16 %v31
  %v177 = vunpack.c.h.b16 %v31
  %v178 = vunpack.c.l.b16 %v32
  %v179 = vunpack.c.h.b16 %v32
  %v180 = vunpack.c.l.b16 %v33
  %v181 = vunpack.c.h.b16 %v33
  %v182 = vunpack.c.l.b16 %v34
  %v183 = vunpack.c.h.b16 %v34
  %v184 = vunpack.c.l.b16 %v35
  %v185 = vunpack.c.h.b16 %v35
  %v186 = vunpack.c.l.b16 %v36
  %v187 = vunpack.c.l.b16 %v37
  %v188 = vunpack.c.h.b16 %v37
  %v189 = vunpack.c.l.b16 %v38
  %v190 = vunpack.c.h.b16 %v38
  %v191 = vunpack.c.l.b16 %v39
  %v192 = vunpack.c.h.b16 %v39
  %v193 = vunpack.c.l.b16 %v40
  %v194 = vunpack.c.h.b16 %v40
  %v195 = vunpack.c.l.b16 %v41
  %v196 = vunpack.c.h.b16 %v41
  %v197 = vunpack.c.l.b16 %v42
  %v198 = vunpack.c.h.b16 %v42
  %v199 = vunpack.c.l.b16 %v43
  %v200 = vunpack.c.l.b16 %v44
  %v201 = vunpack.c.h.b16 %v44
  %v202 = vunpack.c.l.b16 %v45
  %v203 = vunpack.c.h.b16 %v45
  %v204 = vunpack.c.l.b16 %v46
  %v205 = vunpack.c.h.b16 %v46
  %v206 = vunpack.c.l.b16 %v47
  %v207 = vunpack.c.h.b16 %v47
  %v208 = vunpack.c.l.b16 %v48
  %v209 = vunpack.c.h.b16 %v48
  %v210 = vunpack.c.l.b16 %v49
  %v211 = vunpack.c.h.b16 %v49
  %v212 = vunpack.c.l.b16 %v50
  %v213 = vunpack.c.l.b16 %v51
  %v214 = vunpack.c.h.b16 %v51
  %v215 = vunpack.c.l.b16 %v52
  %v216 = vunpack.c.h.b16 %v52
  %v217 = vunpack.c.l.b16 %v53
  %v218 = vunpack.c.h.b16 %v53
  %v219 = vunpack.c.l.b16 %v54
  %v220 = vunpack.c.h.b16 %v54
  %v221 = vunpack.c.l.b16 %v55
  %v222 = vunpack.c.h.b16 %v55
  %v223 = vunpack.c.l.b16 %v56
  %v224 = vunpack.c.h.b16 %v56
  %v225 = vunpack.c.l.b16 %v57
  %v226 = vunpack.c.l.b16 %v58
  %v227 = vunpack.c.h.b16 %v58
  %v228 = vunpack.c.l.b16 %v59
  %v229 = vunpack.c.h.b16 %v59
  %v230 = vunpack.c.l.b16 %v60
  %v231 = vunpack.c.h.b16 %v60
  %v232 = vunpack.c.l.b16 %v61
  %v233 = vunpack.c.h.b16 %v61
  %v234 = vunpack.c.l.b16 %v62
  %v235 = vunpack.c.h.b16 %v62
  %v236 = vunpack.c.l.b16 %v63
  %v237 = vunpack.c.h.b16 %v63
  %v238 = vunpack.c.l.b16 %v64
  %v239 = vunpack.c.l.b16 %v65
  %v240 = vunpack.c.h.b16 %v65
  %v241 = vunpack.c.l.b16 %v66
  %v242 = vunpack.c.h.b16 %v66
  %v243 = vunpack.c.l.b16 %v67
  %v244 = vunpack.c.h.b16 %v67
  %v245 = vunpack.c.l.b16 %v68
  %v246 = vunpack.c.h.b16 %v68
  %v247 = vunpack.c.l.b16 %v69
  %v248 = vunpack.c.h.b16 %v69
  %v249 = vunpack.c.l.b16 %v70
  %v250 = vunpack.c.h.b16 %v70
  %v251 = vunpack.c.l.b16 %v71
  %v252 = vunpack.c.l.b16 %v72
  %v253 = vunpack.c.h.b16 %v72
  %v254 = vunpack.c.l.b16 %v73
  %v255 = vunpack.c.h.b16 %v73
  %v256 = vunpack.c.l.b16 %v74
  %v257 = vunpack.c.h.b16 %v74
  %v258 = vunpack.c.l.b16 %v75
  %v259 = vunpack.c.h.b16 %v75
  %v260 = vunpack.c.l.b16 %v76
  %v261 = vunpack.c.h.b16 %v76
  %v262 = vunpack.c.l.b16 %v77
  %v263 = vunpack.c.h.b16 %v77
  %v264 = vunpack.c.l.b16 %v78
  %v265 = vpack.c.b16 %v161, %v148
  %v266 = vpack.c.b16 %v162, %v149
  %v267 = vpack.c.b16 %v163, %v150
  %v268 = vpack.c.b16 %v164, %v151
  %v269 = vpack.c.b16 %v165, %v152
  %v270 = vpack.c.b16 %v166, %v153
  %v271 = vpack.c.b16 %v167, %v154
  %v272 = vpack.c.b16 %v168, %v155
  %v273 = vpack.c.b16 %v169, %v156
  %v274 = vpack.c.b16 %v170, %v157
  %v275 = vpack.c.b16 %v171, %v158
  %v276 = vpack.c.b16 %v172, %v159
  %v277 = vpack.c.b16 %v173, %v160
  %v278 = vpack.c.b16 %v187, %v174
  %v279 = vpack.c.b16 %v188, %v175
  %v280 = vpack.c.b16 %v189, %v176
  %v281 = vpack.c.b16 %v190, %v177
  %v282 = vpack.c.b16 %v191, %v178
  %v283 = vpack.c.b16 %v192, %v179
  %v284 = vpack.c.b16 %v193, %v180
  %v285 = vpack.c.b16 %v194, %v181
  %v286 = vpack.c.b16 %v195, %v182
  %v287 = vpack.c.b16 %v196, %v183
  %v288 = vpack.c.b16 %v197, %v184
  %v289 = vpack.c.b16 %v198, %v185
  %v290 = vpack.c.b16 %v199, %v186
  %v291 = vpack.c.b16 %v213, %v200
  %v292 = vpack.c.b16 %v214, %v201
  %v293 = vpack.c.b16 %v215, %v202
  %v294 = vpack.c.b16 %v216, %v203
  %v295 = vpack.c.b16 %v217, %v204
  %v296 = vpack.c.b16 %v218, %v205
  %v297 = vpack.c.b16 %v219, %v206
  %v298 = vpack.c.b16 %v220, %v207
  %v299 = vpack.c.b16 %v221, %v208
  %v300 = vpack.c.b16 %v222, %v209
  %v301 = vpack.c.b16 %v223, %v210
  %v302 = vpack.c.b16 %v224, %v211
  %v303 = vpack.c.b16 %v225, %v212
  %v304 = vpack.c.b16 %v239, %v226
  %v305 = vpack.c.b16 %v240, %v227
  %v306 = vpack.c.b16 %v241, %v228
  %v307 = vpack.c.b16 %v242, %v229
  %v308 = vpack.c.b16 %v243, %v230
  %v309 = vpack.c.b16 %v244, %v231
  %v310 = vpack.c.b16 %v245, %v232
  %v311 = vpack.c.b16 %v246, %v233
  %v312 = vpack.c.b16 %v247, %v234
  %v313 = vpack.c.b16 %v248, %v235
  %v314 = vpack.c.b16 %v249, %v236
  %v315 = vpack.c.b16 %v250, %v237
  %v316 = vpack.c.b16 %v251, %v238
  %v317 = vpack.c.b16 %v252, %v252
  %v318 = vpack.c.b16 %v253, %v253
  %v319 = vpack.c.b16 %v254, %v254
  %v320 = vpack.c.b16 %v255, %v255
  %v321 = vpack.c.b16 %v256, %v256
  %v322 = vpack.c.b16 %v257, %v257
  %v323 = vpack.c.b16 %v258, %v258
  %v324 = vpack.c.b16 %v259, %v259
  %v325 = vpack.c.b16 %v260, %v260
  %v326 = vpack.c.b16 %v261, %v261
  %v327 = vpack.c.b16 %v262, %v262
  %v328 = vpack.c.b16 %v263, %v263
  %v329 = vpack.c.b16 %v264, %v264
  %vm382 = vcmask 588800
  %v384 = vsel %vm382, %v15, 0
  %vm386 = vcmask 1043456
  %v388 = vsel %vm386, %v317, 0
  %v391 = vsel %vm386, %v318, 0
  %v394 = vsel %vm386, %v319, 0
  %v397 = vsel %vm386, %v320, 0
  %v400 = vsel %vm386, %v321, 0
  %v403 = vsel %vm386, %v322, 0
  %v406 = vsel %vm386, %v323, 0
  %v409 = vsel %vm386, %v324, 0
  %v412 = vsel %vm386, %v325, 0
  %v415 = vsel %vm386, %v326, 0
  %v418 = vsel %vm386, %v327, 0
  %v421 = vsel %vm386, %v328, 0
  %v424 = vsel %vm386, %v329, 0
  %426 = vmatprep.subr.bf16.mxu0 %v266
  %427 = vmatpush1.bf16.msra.mxu0 %v265
  %428 = vmatprep.subr.bf16.mxu0 %v279
  %429 = vmatpush1.bf16.msra.mxu0 %v278
  %430 = vmatprep.subr.bf16.mxu0 %v292
  %431 = vmatpush1.bf16.msra.mxu0 %v291
  %432 = vmatprep.subr.bf16.mxu0 %v305
  %433 = vmatpush1.bf16.msra.mxu0 %v304
  %434 = vmatprep.subr.bf16.mxu0 %v391
  %435 = vmatpush1.bf16.msra.mxu0 %v388
  %436 = vmatprep.subr.bf16.mxu0 0
  %437 = vmatpush1.bf16.msra.mxu0 0
  %438 = vmatprep.subr.bf16.mxu0 0
  %439 = vmatpush1.bf16.msra.mxu0 0
  %440 = vmatprep.subr.bf16.mxu0 0
  %441 = vmatpush1.bf16.msra.mxu0 0
  %442 = vmatprep.subr.bf16.mxu0 0
  %443 = vmatpush1.bf16.msra.mxu0 0
  %444 = vmatprep.subr.bf16.mxu0 0
  %445 = vmatpush1.bf16.msra.mxu0 0
  %446 = vmatprep.subr.bf16.mxu0 0
  %447 = vmatpush1.bf16.msra.mxu0 0
  %448 = vmatprep.subr.bf16.mxu0 0
  %449 = vmatpush1.bf16.msra.mxu0 0
  %450 = vmatprep.subr.bf16.mxu0 0
  %451 = vmatpush1.bf16.msra.mxu0 0
  %452 = vmatprep.subr.bf16.mxu0 0
  %453 = vmatpush1.bf16.msra.mxu0 0
  %454 = vmatprep.subr.bf16.mxu0 0
  %455 = vmatpush1.bf16.msra.mxu0 0
  %456 = vmatprep.subr.bf16.mxu0 0
  %457 = vmatpush1.bf16.msra.mxu0 0
  %458 = vmatprep.mubr.bf16.mxu0 0
  %459 = vmatmul.mubr.bf16.gmra.mrb[0].mxu0 %v384
  %v460 = vpop.f32.mrb[0].mxu0
  %v461 = vadd.f32 %v83, %v460
  %v462 = vpop.f32.mrb[0].mxu0
  %v463 = vadd.f32 %v83, %v462
  %v464 = vpop.f32.mrb[0].mxu0
  %v465 = vpop.f32.mrb[0].mxu0
  %466 = vdwg.mxu0
  %467 = vmatprep.subr.bf16.mxu0 %v268
  %468 = vmatpush1.bf16.msra.mxu0 %v267
  %469 = vmatprep.subr.bf16.mxu0 %v281
  %470 = vmatpush1.bf16.msra.mxu0 %v280
  %471 = vmatprep.subr.bf16.mxu0 %v294
  %472 = vmatpush1.bf16.msra.mxu0 %v293
  %473 = vmatprep.subr.bf16.mxu0 %v307
  %474 = vmatpush1.bf16.msra.mxu0 %v306
  %475 = vmatprep.subr.bf16.mxu0 %v397
  %476 = vmatpush1.bf16.msra.mxu0 %v394
  %477 = vmatprep.subr.bf16.mxu0 0
  %478 = vmatpush1.bf16.msra.mxu0 0
  %479 = vmatprep.subr.bf16.mxu0 0
  %480 = vmatpush1.bf16.msra.mxu0 0
  %481 = vmatprep.subr.bf16.mxu0 0
  %482 = vmatpush1.bf16.msra.mxu0 0
  %483 = vmatprep.subr.bf16.mxu0 0
  %484 = vmatpush1.bf16.msra.mxu0 0
  %485 = vmatprep.subr.bf16.mxu0 0
  %486 = vmatpush1.bf16.msra.mxu0 0
  %487 = vmatprep.subr.bf16.mxu0 0
  %488 = vmatpush1.bf16.msra.mxu0 0
  %489 = vmatprep.subr.bf16.mxu0 0
  %490 = vmatpush1.bf16.msra.mxu0 0
  %491 = vmatprep.subr.bf16.mxu0 0
  %492 = vmatpush1.bf16.msra.mxu0 0
  %493 = vmatprep.subr.bf16.mxu0 0
  %494 = vmatpush1.bf16.msra.mxu0 0
  %495 = vmatprep.subr.bf16.mxu0 0
  %496 = vmatpush1.bf16.msra.mxu0 0
  %497 = vmatprep.subr.bf16.mxu0 0
  %498 = vmatpush1.bf16.msra.mxu0 0
  %499 = vmatprep.mubr.bf16.mxu0 0
  %500 = vmatmul.mubr.bf16.gmra.mrb[0].mxu0 %v384
  %v501 = vpop.f32.mrb[0].mxu0
  %v502 = vadd.f32 %v83, %v501
  %v503 = vpop.f32.mrb[0].mxu0
  %v504 = vadd.f32 %v83, %v503
  %v505 = vpop.f32.mrb[0].mxu0
  %v506 = vpop.f32.mrb[0].mxu0
  %507 = vdwg.mxu0
  %508 = vmatprep.subr.bf16.mxu0 %v270
  %509 = vmatpush1.bf16.msra.mxu0 %v269
  %510 = vmatprep.subr.bf16.mxu0 %v283
  %511 = vmatpush1.bf16.msra.mxu0 %v282
  %512 = vmatprep.subr.bf16.mxu0 %v296
  %513 = vmatpush1.bf16.msra.mxu0 %v295
  %514 = vmatprep.subr.bf16.mxu0 %v309
  %515 = vmatpush1.bf16.msra.mxu0 %v308
  %516 = vmatprep.subr.bf16.mxu0 %v403
  %517 = vmatpush1.bf16.msra.mxu0 %v400
  %518 = vmatprep.subr.bf16.mxu0 0
  %519 = vmatpush1.bf16.msra.mxu0 0
  %520 = vmatprep.subr.bf16.mxu0 0
  %521 = vmatpush1.bf16.msra.mxu0 0
  %522 = vmatprep.subr.bf16.mxu0 0
  %523 = vmatpush1.bf16.msra.mxu0 0
  %524 = vmatprep.subr.bf16.mxu0 0
  %525 = vmatpush1.bf16.msra.mxu0 0
  %526 = vmatprep.subr.bf16.mxu0 0
  %527 = vmatpush1.bf16.msra.mxu0 0
  %528 = vmatprep.subr.bf16.mxu0 0
  %529 = vmatpush1.bf16.msra.mxu0 0
  %530 = vmatprep.subr.bf16.mxu0 0
  %531 = vmatpush1.bf16.msra.mxu0 0
  %532 = vmatprep.subr.bf16.mxu0 0
  %533 = vmatpush1.bf16.msra.mxu0 0
  %534 = vmatprep.subr.bf16.mxu0 0
  %535 = vmatpush1.bf16.msra.mxu0 0
  %536 = vmatprep.subr.bf16.mxu0 0
  %537 = vmatpush1.bf16.msra.mxu0 0
  %538 = vmatprep.subr.bf16.mxu0 0
  %539 = vmatpush1.bf16.msra.mxu0 0
  %540 = vmatprep.mubr.bf16.mxu0 0
  %541 = vmatmul.mubr.bf16.gmra.mrb[0].mxu0 %v384
  %v542 = vpop.f32.mrb[0].mxu0
  %v543 = vadd.f32 %v83, %v542
  %v544 = vpop.f32.mrb[0].mxu0
  %v545 = vadd.f32 %v83, %v544
  %v546 = vpop.f32.mrb[0].mxu0
  %v547 = vpop.f32.mrb[0].mxu0
  %548 = vdwg.mxu0
  %549 = vmatprep.subr.bf16.mxu0 %v272
  %550 = vmatpush1.bf16.msra.mxu0 %v271
  %551 = vmatprep.subr.bf16.mxu0 %v285
  %552 = vmatpush1.bf16.msra.mxu0 %v284
  %553 = vmatprep.subr.bf16.mxu0 %v298
  %554 = vmatpush1.bf16.msra.mxu0 %v297
  %555 = vmatprep.subr.bf16.mxu0 %v311
  %556 = vmatpush1.bf16.msra.mxu0 %v310
  %557 = vmatprep.subr.bf16.mxu0 %v409
  %558 = vmatpush1.bf16.msra.mxu0 %v406
  %559 = vmatprep.subr.bf16.mxu0 0
  %560 = vmatpush1.bf16.msra.mxu0 0
  %561 = vmatprep.subr.bf16.mxu0 0
  %562 = vmatpush1.bf16.msra.mxu0 0
  %563 = vmatprep.subr.bf16.mxu0 0
  %564 = vmatpush1.bf16.msra.mxu0 0
  %565 = vmatprep.subr.bf16.mxu0 0
  %566 = vmatpush1.bf16.msra.mxu0 0
  %567 = vmatprep.subr.bf16.mxu0 0
  %568 = vmatpush1.bf16.msra.mxu0 0
  %569 = vmatprep.subr.bf16.mxu0 0
  %570 = vmatpush1.bf16.msra.mxu0 0
  %571 = vmatprep.subr.bf16.mxu0 0
  %572 = vmatpush1.bf16.msra.mxu0 0
  %573 = vmatprep.subr.bf16.mxu0 0
  %574 = vmatpush1.bf16.msra.mxu0 0
  %575 = vmatprep.subr.bf16.mxu0 0
  %576 = vmatpush1.bf16.msra.mxu0 0
  %577 = vmatprep.subr.bf16.mxu0 0
  %578 = vmatpush1.bf16.msra.mxu0 0
  %579 = vmatprep.subr.bf16.mxu0 0
  %580 = vmatpush1.bf16.msra.mxu0 0
  %581 = vmatprep.mubr.bf16.mxu0 0
  %582 = vmatmul.mubr.bf16.gmra.mrb[0].mxu0 %v384
  %v583 = vpop.f32.mrb[0].mxu0
  %v584 = vadd.f32 %v83, %v583
  %v585 = vpop.f32.mrb[0].mxu0
  %v586 = vadd.f32 %v83, %v585
  %v587 = vpop.f32.mrb[0].mxu0
  %v588 = vpop.f32.mrb[0].mxu0
  %589 = vdwg.mxu0
  %590 = vmatprep.subr.bf16.mxu0 %v274
  %591 = vmatpush1.bf16.msra.mxu0 %v273
  %592 = vmatprep.subr.bf16.mxu0 %v287
  %593 = vmatpush1.bf16.msra.mxu0 %v286
  %594 = vmatprep.subr.bf16.mxu0 %v300
  %595 = vmatpush1.bf16.msra.mxu0 %v299
  %596 = vmatprep.subr.bf16.mxu0 %v313
  %597 = vmatpush1.bf16.msra.mxu0 %v312
  %598 = vmatprep.subr.bf16.mxu0 %v415
  %599 = vmatpush1.bf16.msra.mxu0 %v412
  %600 = vmatprep.subr.bf16.mxu0 0
  %601 = vmatpush1.bf16.msra.mxu0 0
  %602 = vmatprep.subr.bf16.mxu0 0
  %603 = vmatpush1.bf16.msra.mxu0 0
  %604 = vmatprep.subr.bf16.mxu0 0
  %605 = vmatpush1.bf16.msra.mxu0 0
  %606 = vmatprep.subr.bf16.mxu0 0
  %607 = vmatpush1.bf16.msra.mxu0 0
  %608 = vmatprep.subr.bf16.mxu0 0
  %609 = vmatpush1.bf16.msra.mxu0 0
  %610 = vmatprep.subr.bf16.mxu0 0
  %611 = vmatpush1.bf16.msra.mxu0 0
  %612 = vmatprep.subr.bf16.mxu0 0
  %613 = vmatpush1.bf16.msra.mxu0 0
  %614 = vmatprep.subr.bf16.mxu0 0
  %615 = vmatpush1.bf16.msra.mxu0 0
  %616 = vmatprep.subr.bf16.mxu0 0
  %617 = vmatpush1.bf16.msra.mxu0 0
  %618 = vmatprep.subr.bf16.mxu0 0
  %619 = vmatpush1.bf16.msra.mxu0 0
  %620 = vmatprep.subr.bf16.mxu0 0
  %621 = vmatpush1.bf16.msra.mxu0 0
  %622 = vmatprep.mubr.bf16.mxu0 0
  %623 = vmatmul.mubr.bf16.gmra.mrb[0].mxu0 %v384
  %v624 = vpop.f32.mrb[0].mxu0
  %v625 = vadd.f32 %v83, %v624
  %v626 = vpop.f32.mrb[0].mxu0
  %v627 = vadd.f32 %v83, %v626
  %v628 = vpop.f32.mrb[0].mxu0
  %v629 = vpop.f32.mrb[0].mxu0
  %630 = vdwg.mxu0
  %631 = vmatprep.subr.bf16.mxu0 %v276
  %632 = vmatpush1.bf16.msra.mxu0 %v275
  %633 = vmatprep.subr.bf16.mxu0 %v289
  %634 = vmatpush1.bf16.msra.mxu0 %v288
  %635 = vmatprep.subr.bf16.mxu0 %v302
  %636 = vmatpush1.bf16.msra.mxu0 %v301
  %637 = vmatprep.subr.bf16.mxu0 %v315
  %638 = vmatpush1.bf16.msra.mxu0 %v314
  %639 = vmatprep.subr.bf16.mxu0 %v421
  %640 = vmatpush1.bf16.msra.mxu0 %v418
  %641 = vmatprep.subr.bf16.mxu0 0
  %642 = vmatpush1.bf16.msra.mxu0 0
  %643 = vmatprep.subr.bf16.mxu0 0
  %644 = vmatpush1.bf16.msra.mxu0 0
  %645 = vmatprep.subr.bf16.mxu0 0
  %646 = vmatpush1.bf16.msra.mxu0 0
  %647 = vmatprep.subr.bf16.mxu0 0
  %648 = vmatpush1.bf16.msra.mxu0 0
  %649 = vmatprep.subr.bf16.mxu0 0
  %650 = vmatpush1.bf16.msra.mxu0 0
  %651 = vmatprep.subr.bf16.mxu0 0
  %652 = vmatpush1.bf16.msra.mxu0 0
  %653 = vmatprep.subr.bf16.mxu0 0
  %654 = vmatpush1.bf16.msra.mxu0 0
  %655 = vmatprep.subr.bf16.mxu0 0
  %656 = vmatpush1.bf16.msra.mxu0 0
  %657 = vmatprep.subr.bf16.mxu0 0
  %658 = vmatpush1.bf16.msra.mxu0 0
  %659 = vmatprep.subr.bf16.mxu0 0
  %660 = vmatpush1.bf16.msra.mxu0 0
  %661 = vmatprep.subr.bf16.mxu0 0
  %662 = vmatpush1.bf16.msra.mxu0 0
  %663 = vmatprep.mubr.bf16.mxu0 0
  %664 = vmatmul.mubr.bf16.gmra.mrb[0].mxu0 %v384
  %v665 = vpop.f32.mrb[0].mxu0
  %v666 = vadd.f32 %v83, %v665
  %v667 = vpop.f32.mrb[0].mxu0
  %v668 = vadd.f32 %v83, %v667
  %v669 = vpop.f32.mrb[0].mxu0
  %v670 = vpop.f32.mrb[0].mxu0
  %671 = vdwg.mxu0
  %672 = vmatprep.subr.bf16.mxu0 0
  %673 = vmatpush1.bf16.msra.mxu0 %v277
  %674 = vmatprep.subr.bf16.mxu0 0
  %675 = vmatpush1.bf16.msra.mxu0 %v290
  %676 = vmatprep.subr.bf16.mxu0 0
  %677 = vmatpush1.bf16.msra.mxu0 %v303
  %678 = vmatprep.subr.bf16.mxu0 0
  %679 = vmatpush1.bf16.msra.mxu0 %v316
  %680 = vmatprep.subr.bf16.mxu0 0
  %681 = vmatpush1.bf16.msra.mxu0 %v424
  %682 = vmatprep.subr.bf16.mxu0 0
  %683 = vmatpush1.bf16.msra.mxu0 0
  %684 = vmatprep.subr.bf16.mxu0 0
  %685 = vmatpush1.bf16.msra.mxu0 0
  %686 = vmatprep.subr.bf16.mxu0 0
  %687 = vmatpush1.bf16.msra.mxu0 0
  %688 = vmatprep.subr.bf16.mxu0 0
  %689 = vmatpush1.bf16.msra.mxu0 0
  %690 = vmatprep.subr.bf16.mxu0 0
  %691 = vmatpush1.bf16.msra.mxu0 0
  %692 = vmatprep.subr.bf16.mxu0 0
  %693 = vmatpush1.bf16.msra.mxu0 0
  %694 = vmatprep.subr.bf16.mxu0 0
  %695 = vmatpush1.bf16.msra.mxu0 0
  %696 = vmatprep.subr.bf16.mxu0 0
  %697 = vmatpush1.bf16.msra.mxu0 0
  %698 = vmatprep.subr.bf16.mxu0 0
  %699 = vmatpush1.bf16.msra.mxu0 0
  %700 = vmatprep.subr.bf16.mxu0 0
  %701 = vmatpush1.bf16.msra.mxu0 0
  %702 = vmatprep.subr.bf16.mxu0 0
  %703 = vmatpush1.bf16.msra.mxu0 0
  %704 = vmatprep.mubr.bf16.mxu0 0
  %705 = vmatmul.mubr.bf16.gmra.mrb[0].mxu0 %v384
  %v706 = vpop.f32.mrb[0].mxu0
  %v707 = vadd.f32 %v83, %v706
  %v708 = vpop.f32.mrb[0].mxu0
  %v709 = vpop.f32.mrb[0].mxu0
  %v710 = vpop.f32.mrb[0].mxu0
  %711 = vdwg.mxu0
  %v712 = vmax.f32 %v461, 0.0
  %v713 = vmax.f32 %v463, 0.0
  %v714 = vmax.f32 %v502, 0.0
  %v715 = vmax.f32 %v504, 0.0
  %v716 = vmax.f32 %v543, 0.0
  %v717 = vmax.f32 %v545, 0.0
  %v718 = vmax.f32 %v584, 0.0
  %v719 = vmax.f32 %v586, 0.0
  %v720 = vmax.f32 %v625, 0.0
  %v721 = vmax.f32 %v627, 0.0
  %v722 = vmax.f32 %v666, 0.0
  %v723 = vmax.f32 %v668, 0.0
  %v724 = vmax.f32 %v707, 0.0
  %725 = vst [vmem:[%s3] sm:$0xff] %v712
  %726 = vst [vmem:[%s3 + $0x8] sm:$0xff] %v713
  %727 = vst [vmem:[%s3 + $0x10] sm:$0xff] %v714
  %728 = vst [vmem:[%s3 + $0x18] sm:$0xff] %v715
  %729 = vst [vmem:[%s3 + $0x20] sm:$0xff] %v716
  %730 = vst [vmem:[%s3 + $0x28] sm:$0xff] %v717
  %731 = vst [vmem:[%s3 + $0x30] sm:$0xff] %v718
  %732 = vst [vmem:[%s3 + $0x38] sm:$0xff] %v719
  %733 = vst [vmem:[%s3 + $0x40] sm:$0xff] %v720
  %734 = vst [vmem:[%s3 + $0x48] sm:$0xff] %v721
  %735 = vst [vmem:[%s3 + $0x50] sm:$0xff] %v722
  %736 = vst [vmem:[%s3 + $0x58] sm:$0xff] %v723
  %vm737 = vcmask 261120
  %738 = vst.msk [vmem:[%s3 + $0x60] sm:$0xff] %vm737, %v724
  // Predicated region
  $region14: #{_lambda_.19} parent=0 // pred_check
    _
  $region15: #{_lambda_.19} parent=0 // pred_check_branch
    %740 = sbr.rel (0) target = $region17
  $region16: #{_lambda_.19} parent=0 // pred_region
    _
  $region17: #{_lambda_.19} parent=0 // pred_fallthru
    _
  // Predicated region
  $region18: #{_lambda_.19} parent=0 // pred_check
    _
  $region19: #{_lambda_.19} parent=0 // pred_check_branch
    %742 = sbr.rel (0) target = $region21
  $region20: #{_lambda_.19} parent=0 // pred_region
    _
  $region21: #{_lambda_.19} parent=0 // pred_fallthru
    _

</llo_original>
